<compile_context>
chip_gen: v7x
topology: tpu7x:2x2x1
jax: 0.10.0
libtpu: 0.0.40
codegen_flags: <defaults>
</compile_context>

<pallas_src>
import functools

import jax
import jax.numpy as jnp
from jax.experimental import pallas as pl
from jax.experimental.pallas import tpu as pltpu

EPS = 1e-5  # PyTorch BatchNorm default eps


def _round_up(x, m):
    return (x + m - 1) // m * m


def _pick_row_tile(rows, max_tile=1024):
    """Row tile: >=256 rows keeps the MXU M dimension busy; cap at 1024 (tile 512-1024 is ~85%+
    of HBM roofline).  Rows are padded up to a tile multiple instead of demanding a divisor."""
    if rows <= max_tile:
        return _round_up(rows, 8)
    return max_tile


# ----------------------------- Pallas kernels ------------------------------

def _gcn_linear_kernel(x_ref, w_ref, o_ref):
    # Per-joint GCN Linear: (tr, Cp) bf16 @ (Cp, Dp) bf16 -> f32.
    o_ref[...] = jnp.dot(x_ref[...], w_ref[...], preferred_element_type=jnp.float32)


def _tcn_res_kernel(u_ref, x0_ref, wdr_ref, wt_ref, vecs_ref, o_ref, *, dp):
    # vecs rows: 0 = [down_bias | res_bias], 1 = [temporal_bias | 0], 2 = [bn2_scale | 0],
    #            3 = [bn2_shift | 0]   (all f32, lanes padded to Dp)
    # One MXU pass computes both x0-dependent branches: z = x0 @ [Wd | Wr] + [bd | br]
    z = jnp.dot(x0_ref[...], wdr_ref[...], preferred_element_type=jnp.float32) + vecs_ref[0:1, :]
    # Shift_gcn output: relu(BN1(shifted linear) + down)
    g = jnp.maximum(u_ref[...] + z[:, :dp], 0.0)
    # Shift_tcn: temporal 1x1 linear with its leading BN folded into wt / bias, then ReLU.
    h = jnp.dot(g.astype(jnp.bfloat16), wt_ref[...],
                preferred_element_type=jnp.float32) + vecs_ref[1:2, :dp]
    h = jnp.maximum(h, 0.0)
    # bn2 affine + residual tcn branch + final ReLU (all f32, lane-dense store).
    o_ref[...] = jnp.maximum(h * vecs_ref[2:3, :dp] + vecs_ref[3:4, :dp] + z[:, dp:], 0.0)


def _gcn_linear(x, w):
    R, Cp = x.shape
    Dp = w.shape[1]
    tr = _pick_row_tile(R)
    Rp = _round_up(R, tr)
    if Rp != R:
        x = jnp.pad(x, ((0, Rp - R), (0, 0)))
    out = pl.pallas_call(
        _gcn_linear_kernel,
        out_shape=jax.ShapeDtypeStruct((Rp, Dp), jnp.float32),
        grid=(Rp // tr,),
        in_specs=[
            pl.BlockSpec((tr, Cp), lambda i: (i, 0)),
            pl.BlockSpec((Cp, Dp), lambda i: (0, 0)),
        ],
        out_specs=pl.BlockSpec((tr, Dp), lambda i: (i, 0)),
        compiler_params=pltpu.CompilerParams(dimension_semantics=("parallel",)),
        cost_estimate=pl.CostEstimate(
            flops=int(2 * Rp * Cp * Dp), transcendentals=0,
            bytes_accessed=int(2 * Rp * Cp + 2 * Cp * Dp + 4 * Rp * Dp)),
    )(x, w)
    return out[:R] if Rp != R else out


def _tcn_res(u, x0r, wdr, wt, vecs):
    R, Dp = u.shape
    Cp = x0r.shape[1]
    tr = _pick_row_tile(R)
    Rp = _round_up(R, tr)
    if Rp != R:
        u = jnp.pad(u, ((0, Rp - R), (0, 0)))
        x0r = jnp.pad(x0r, ((0, Rp - R), (0, 0)))
    out = pl.pallas_call(
        functools.partial(_tcn_res_kernel, dp=Dp),
        out_shape=jax.ShapeDtypeStruct((Rp, Dp), jnp.float32),
        grid=(Rp // tr,),
        in_specs=[
            pl.BlockSpec((tr, Dp), lambda i: (i, 0)),       # u (BN1-ed, shifted GCN linear), f32
            pl.BlockSpec((tr, Cp), lambda i: (i, 0)),       # original x0 rows, bf16
            pl.BlockSpec((Cp, 2 * Dp), lambda i: (0, 0)),   # [down | res] folded weights, bf16
            pl.BlockSpec((Dp, Dp), lambda i: (0, 0)),       # temporal-linear folded weight, bf16
            pl.BlockSpec((8, 2 * Dp), lambda i: (0, 0)),    # packed biases / bn2 affine, f32
        ],
        out_specs=pl.BlockSpec((tr, Dp), lambda i: (i, 0)),
        compiler_params=pltpu.CompilerParams(dimension_semantics=("parallel",)),
        cost_estimate=pl.CostEstimate(
            flops=int(2 * Rp * (Cp * 2 * Dp + Dp * Dp) + 8 * Rp * Dp),
            transcendentals=0,
            bytes_accessed=int(4 * Rp * Dp + 2 * Rp * Cp + 2 * Cp * 2 * Dp
                               + 2 * Dp * Dp + 64 * Dp + 4 * Rp * Dp)),
    )(u, x0r, wdr, wt, vecs)
    return out[:R] if Rp != R else out


# ----------------------------- parameters ------------------------------

def _bn_params(key, n):
    k1, k2, k3, k4 = jax.random.split(key, 4)
    return {
        "gamma": 1.0 + 0.1 * jax.random.normal(k1, (n,), jnp.float32),
        "beta": 0.1 * jax.random.normal(k2, (n,), jnp.float32),
        "mean": 0.1 * jax.random.normal(k3, (n,), jnp.float32),
        "var": 1.0 + 0.1 * jax.random.uniform(k4, (n,), jnp.float32),
    }


def init_params(key, in_channels, out_channels, V=25):
    C, D = in_channels, out_channels
    ks = jax.random.split(key, 17)

    def nrm(k, shape, scale=0.1):
        return scale * jax.random.normal(k, shape, dtype=jnp.float32)

    p = {}
    # ---- Shift_gcn ----
    p["Linear_weight"] = jax.random.normal(ks[0], (C, D), jnp.float32) * jnp.sqrt(1.0 / D)
    p["Linear_bias"] = nrm(ks[1], (1, 1, D))
    p["Feature_Mask"] = nrm(ks[2], (1, V, C))
    shift_in = [(i * C + j + j * C) % (C * V) for i in range(V) for j in range(C)]
    shift_out = [(i * D + j - j * D) % (D * V) for i in range(V) for j in range(D)]
    p["shift_in"] = jnp.array(shift_in, dtype=jnp.int32)
    p["shift_out"] = jnp.array(shift_out, dtype=jnp.int32)
    # BatchNorm1d(V * D)
    p["bn1_gamma"] = 1.0 + nrm(ks[3], (V * D,))
    p["bn1_beta"] = nrm(ks[4], (V * D,))
    p["bn1_mean"] = nrm(ks[5], (V * D,))
    p["bn1_var"] = 1.0 + 0.1 * jax.random.uniform(ks[6], (V * D,), jnp.float32)
    # down = Conv2d(C, D, 1) + BatchNorm2d(D)   (built because C != D)
    p["down_w"] = nrm(ks[7], (D, C))   # (out, in) of the 1x1 conv
    p["down_b"] = nrm(ks[8], (D,))
    p["down_bn"] = _bn_params(ks[9], D)
    # ---- Shift_tcn ----
    p["tbn"] = _bn_params(ks[10], D)   # self.bn
    p["tbn2"] = _bn_params(ks[11], D)  # self.bn2
    p["tlin_w"] = nrm(ks[12], (D, D))  # temporal_linear 1x1 conv (out, in)
    p["tlin_b"] = nrm(ks[13], (D,))
    # ---- residual tcn: Conv2d(C, D, (1,1)) + BatchNorm2d(D) ----
    p["res_w"] = nrm(ks[14], (D, C))
    p["res_b"] = nrm(ks[15], (D,))
    p["res_bn"] = _bn_params(ks[16], D)
    return p


# ----------------------------- parameter folding (tiny per-joint weights) ------------------------------

def _bn_scale_shift(bn):
    s = bn["gamma"] / jnp.sqrt(bn["var"] + EPS)
    return s, bn["beta"] - bn["mean"] * s


def _fold_params(p, C, D, V):
    """Fold every BatchNorm affine / bias into the small per-joint (C,D)/(D,D) weights.
    No kron / densification: O(C*D) work and memory."""
    # BN1 (BatchNorm1d over V*D features, applied after shift_out), viewed as a (V, D) pattern.
    s1f = p["bn1_gamma"] / jnp.sqrt(p["bn1_var"] + EPS)
    t1f = p["bn1_beta"] - p["bn1_mean"] * s1f
    # The Linear bias is added before shift_out; push it through the shift_out table and fold it
    # into the BN1 shift (fully general w.r.t. whatever index table the checkpoint provides).
    b_shift = jnp.take(jnp.tile(p["Linear_bias"].reshape(-1), V), p["shift_out"])
    s1 = s1f.reshape(V, D)
    t1 = (t1f + s1f * b_shift).reshape(V, D)

    mask = jnp.tanh(p["Feature_Mask"]) + 1.0          # (1, V, C)

    # down branch (1x1 conv + BN) as a single (C, D) matrix + bias
    sd, td = _bn_scale_shift(p["down_bn"])
    Wd = p["down_w"].T * sd[None, :]
    bd = p["down_b"] * sd + td

    # residual tcn branch (1x1 conv + BN)
    sr, tr_ = _bn_scale_shift(p["res_bn"])
    Wr = p["res_w"].T * sr[None, :]
    br = p["res_b"] * sr + tr_

    # temporal_linear with its leading BN (tbn) folded in
    sb, tb = _bn_scale_shift(p["tbn"])
    Wt = sb[:, None] * p["tlin_w"].T
    bt = p["tlin_w"] @ tb + p["tlin_b"]

    # bn2 affine (applied after the ReLU; stays in the epilogue)
    s2, t2 = _bn_scale_shift(p["tbn2"])
    return dict(mask=mask, s1=s1, t1=t1, Wd=Wd, bd=bd, Wr=Wr, br=br, Wt=Wt, bt=bt, s2=s2, t2=t2)


# ----------------------------- forward (Pallas path) ------------------------------

def tcn_gcn_unit_forward(x0, p, channels_last_out=False):
    # x0: (N, C, T, V) float32, NCHW exactly like the PyTorch module input.
    N, C, T, V = x0.shape
    D = p["Linear_weight"].shape[1]            # static (from array shape) -> safe under jit
    Cp = _round_up(C, 128)                     # lane-pad channel widths (zero-padded lanes stay 0)
    Dp = _round_up(D, 128)
    f = _fold_params(p, C, D, V)

    # ---- wrapper pass 1: channels-last layout, shift_in gather, feature mask (fused XLA) ----
    x_cl = jnp.transpose(x0, (0, 2, 3, 1))                       # (N, T, V, C)
    x_nt = x_cl.reshape(N * T, V * C)
    xg = jnp.take(x_nt, p["shift_in"], axis=1).reshape(N * T, V, C)
    xm = (xg * f["mask"]).reshape(N * T * V, C)
    xm = jnp.pad(xm, ((0, 0), (0, Cp - C))).astype(jnp.bfloat16)

    # ---- kernel A: per-joint GCN Linear on the MXU (rows = N*T*V joints) ----
    w_lin = jnp.pad(p["Linear_weight"], ((0, Cp - C), (0, Dp - D))).astype(jnp.bfloat16)
    u = _gcn_linear(xm, w_lin)                                   # (N*T*V, Dp) f32

    # ---- wrapper pass 2: shift_out gather + BN1 affine (Linear bias folded in), fused XLA ----
    u_flat = u[:, :D].reshape(N * T, V * D)
    u_s = jnp.take(u_flat, p["shift_out"], axis=1).reshape(N * T, V, D)
    u_bn = u_s * f["s1"][None] + f["t1"][None]
    u_rows = jnp.pad(u_bn.reshape(N * T * V, D), ((0, 0), (0, Dp - D)))   # f32

    # x0 in the same joints-as-rows layout for the down / residual 1x1 convs (read once by kernel B)
    x0_rows = jnp.pad(x_cl.reshape(N * T * V, C), ((0, 0), (0, Cp - C))).astype(jnp.bfloat16)

    # tiny per-joint weights (block-diagonal structure exploited; bf16 MXU operands)
    pad_cd = lambda w: jnp.pad(w, ((0, Cp - C), (0, Dp - D)))
    wdr = jnp.concatenate([pad_cd(f["Wd"]), pad_cd(f["Wr"])], axis=1).astype(jnp.bfloat16)
    wt = jnp.pad(f["Wt"], ((0, Dp - D), (0, Dp - D))).astype(jnp.bfloat16)
    # pack all per-channel vectors into one (8, 2*Dp) slab -> single constant DMA
    vecs = jnp.zeros((8, 2 * Dp), jnp.float32)
    vecs = vecs.at[0, :D].set(f["bd"]).at[0, Dp:Dp + D].set(f["br"])
    vecs = vecs.at[1, :D].set(f["bt"])
    vecs = vecs.at[2, :D].set(f["s2"])
    vecs = vecs.at[3, :D].set(f["t2"])

    # ---- kernel B: fused down-add + ReLU + temporal linear + ReLU + bn2 + residual + ReLU ----
    out_rows = _tcn_res(u_rows, x0_rows, wdr, wt, vecs)          # (N*T*V, Dp) f32

    out = out_rows[:, :D].reshape(N, T, V, D)
    if channels_last_out:
        return out                     # avoids the NCHW transpose round-trip (perf option)
    return jnp.transpose(out, (0, 3, 1, 2))


# ----------------------------- pure-JAX reference ------------------------------

def reference_forward(x0, p):
    N, C, T, V = x0.shape
    D = p["Linear_weight"].shape[1]

    def bn2d(x, bn):
        s = (bn["gamma"] / jnp.sqrt(bn["var"] + EPS))[None, :, None, None]
        return (x - bn["mean"][None, :, None, None]) * s + bn["beta"][None, :, None, None]

    # Shift_gcn
    x = jnp.transpose(x0, (0, 2, 3, 1)).reshape(N * T, V * C)
    x = x[:, p["shift_in"]]
    x = x.reshape(N * T, V, C)
    x = x * (jnp.tanh(p["Feature_Mask"]) + 1.0)
    x = jnp.einsum("nwc,cd->nwd", x, p["Linear_weight"]) + p["Linear_bias"]
    x = x.reshape(N * T, V * D)
    x = x[:, p["shift_out"]]
    x = (x - p["bn1_mean"]) / jnp.sqrt(p["bn1_var"] + EPS) * p["bn1_gamma"] + p["bn1_beta"]
    x = x.reshape(N, T, V, D).transpose(0, 3, 1, 2)
    down = jnp.einsum("nctv,dc->ndtv", x0, p["down_w"]) + p["down_b"][None, :, None, None]
    x = jax.nn.relu(x + bn2d(down, p["down_bn"]))
    # Shift_tcn (temporal Shift ops are identity)
    h = bn2d(x, p["tbn"])
    h = jnp.einsum("nctv,dc->ndtv", h, p["tlin_w"]) + p["tlin_b"][None, :, None, None]
    h = jax.nn.relu(h)
    h = bn2d(h, p["tbn2"])
    # residual tcn
    r = jnp.einsum("nctv,dc->ndtv", x0, p["res_w"]) + p["res_b"][None, :, None, None]
    r = bn2d(r, p["res_bn"])
    return jax.nn.relu(h + r)


if __name__ == "__main__":
    key = jax.random.PRNGKey(0)
    k_x, k_p = jax.random.split(key)
    N, C, T, V = 2, 4, 16, 25   # V=25 is fixed by the module (skeleton joints)
    D = 8                       # out_channels != in_channels -> down/tcn residual paths active
    x0 = jax.random.normal(k_x, (N, C, T, V), jnp.float32)
    params = init_params(k_p, C, D, V)

    out = jax.jit(tcn_gcn_unit_forward)(x0, params)
    out = jax.block_until_ready(out)

    ref = reference_forward(x0, params)
    assert out.shape == (N, D, T, V), out.shape
    max_err = float(jnp.max(jnp.abs(out - ref)))
    # bf16 MXU operands (f32 accumulation / epilogue): tolerance relaxed per review.
    assert max_err < 5e-2, f"mismatch vs reference: {max_err}"
    print("KERNEL_OK")
</pallas_src>

<mosaic_0001>
module attributes {stable_mosaic.version = 11 : i64} {
  func.func @_gcn_linear_kernel(%arg0: i32, %arg1: memref<800x128xbf16, #tpu.memory_space<vmem>>, %arg2: memref<128x128xbf16, #tpu.memory_space<vmem>>, %arg3: memref<800x128xf32, #tpu.memory_space<vmem>>) attributes {dimension_semantics = [#tpu.dimension_semantics<parallel>], iteration_bounds = array<i64: 1>, scalar_prefetch = 0 : i64, scratch_operands = 0 : i64, tpu.core_type = #tpu.core_type<tc>, window_params = [{transform_indices = @transform_0, window_bounds = array<i64: 800, 128>}, {pipeline_mode = #tpu.pipeline_mode<synchronous>, transform_indices = @transform_1, window_bounds = array<i64: 128, 128>}, {transform_indices = @transform_2, window_bounds = array<i64: 800, 128>}]} {
    %c0 = arith.constant 0 : index
    %c0_0 = arith.constant 0 : index
    %0 = vector.load %arg1[%c0, %c0_0] : memref<800x128xbf16, #tpu.memory_space<vmem>>, vector<800x128xbf16>
    %c0_1 = arith.constant 0 : index
    %c0_2 = arith.constant 0 : index
    %1 = vector.load %arg2[%c0_1, %c0_2] : memref<128x128xbf16, #tpu.memory_space<vmem>>, vector<128x128xbf16>
    %cst = arith.constant dense<0.000000e+00> : vector<800x128xf32>
    %2 = tpu.matmul %0, %1, %cst {dimension_numbers = #tpu.dot_dimension_numbers<[1], [0], [0], [1], [0, 0, 1, 1], [], []>} : vector<800x128xbf16>, vector<128x128xbf16>, vector<800x128xf32> -> vector<800x128xf32>
    %c0_3 = arith.constant 0 : index
    %c0_4 = arith.constant 0 : index
    %3 = vector.load %arg3[%c0_3, %c0_4] : memref<800x128xf32, #tpu.memory_space<vmem>>, vector<800x128xf32>
    tpu.vector_store %arg3[%c0_3, %c0_4], %2 {strides = array<i32>} : memref<800x128xf32, #tpu.memory_space<vmem>>, vector<800x128xf32>,
    return
  }
  func.func @transform_0(%arg0: i32) -> (i32, i32) {
    %c0_i32 = arith.constant 0 : i32
    %c0_i32_0 = arith.constant 0 : i32
    return %arg0, %c0_i32 : i32, i32
  }
  func.func @transform_1(%arg0: i32) -> (i32, i32) {
    %c0_i32 = arith.constant 0 : i32
    %c0_i32_0 = arith.constant 0 : i32
    %c0_i32_1 = arith.constant 0 : i32
    return %c0_i32, %c0_i32_0 : i32, i32
  }
  func.func @transform_2(%arg0: i32) -> (i32, i32) {
    %c0_i32 = arith.constant 0 : i32
    %c0_i32_0 = arith.constant 0 : i32
    return %arg0, %c0_i32 : i32, i32
  }
}

module attributes {stable_mosaic.version = 11 : i64} {
  func.func @_tcn_res_kernel(%arg0: i32, %arg1: memref<800x128xf32, #tpu.memory_space<vmem>>, %arg2: memref<800x128xbf16, #tpu.memory_space<vmem>>, %arg3: memref<128x256xbf16, #tpu.memory_space<vmem>>, %arg4: memref<128x128xbf16, #tpu.memory_space<vmem>>, %arg5: memref<8x256xf32, #tpu.memory_space<vmem>>, %arg6: memref<800x128xf32, #tpu.memory_space<vmem>>) attributes {dimension_semantics = [#tpu.dimension_semantics<parallel>], iteration_bounds = array<i64: 1>, scalar_prefetch = 0 : i64, scratch_operands = 0 : i64, tpu.core_type = #tpu.core_type<tc>, window_params = [{transform_indices = @transform_0, window_bounds = array<i64: 800, 128>}, {transform_indices = @transform_1, window_bounds = array<i64: 800, 128>}, {pipeline_mode = #tpu.pipeline_mode<synchronous>, transform_indices = @transform_2, window_bounds = array<i64: 128, 256>}, {pipeline_mode = #tpu.pipeline_mode<synchronous>, transform_indices = @transform_3, window_bounds = array<i64: 128, 128>}, {pipeline_mode = #tpu.pipeline_mode<synchronous>, transform_indices = @transform_4, window_bounds = array<i64: 8, 256>}, {transform_indices = @transform_5, window_bounds = array<i64: 800, 128>}]} {
    %c0 = arith.constant 0 : index
    %c0_0 = arith.constant 0 : index
    %0 = vector.load %arg2[%c0, %c0_0] : memref<800x128xbf16, #tpu.memory_space<vmem>>, vector<800x128xbf16>
    %c0_1 = arith.constant 0 : index
    %c0_2 = arith.constant 0 : index
    %1 = vector.load %arg3[%c0_1, %c0_2] : memref<128x256xbf16, #tpu.memory_space<vmem>>, vector<128x256xbf16>
    %cst = arith.constant dense<0.000000e+00> : vector<800x256xf32>
    %2 = tpu.matmul %0, %1, %cst {dimension_numbers = #tpu.dot_dimension_numbers<[1], [0], [0], [1], [0, 0, 1, 1], [], []>} : vector<800x128xbf16>, vector<128x256xbf16>, vector<800x256xf32> -> vector<800x256xf32>
    %c0_3 = arith.constant 0 : index
    %c0_4 = arith.constant 0 : index
    %3 = vector.load %arg5[%c0_3, %c0_4] : memref<8x256xf32, #tpu.memory_space<vmem>>, vector<1x256xf32>
    %4 = vector.broadcast %3 : vector<1x256xf32> to vector<800x256xf32>
    %5 = arith.addf %2, %4 : vector<800x256xf32>
    %c0_5 = arith.constant 0 : index
    %c0_6 = arith.constant 0 : index
    %6 = vector.load %arg1[%c0_5, %c0_6] : memref<800x128xf32, #tpu.memory_space<vmem>>, vector<800x128xf32>
    %7 = vector.extract_strided_slice %5 {offsets = [0, 0], sizes = [800, 128], strides = [1, 1]} : vector<800x256xf32> to vector<800x128xf32>
    %8 = arith.addf %6, %7 : vector<800x128xf32>
    %cst_7 = arith.constant 0.000000e+00 : f32
    %9 = vector.broadcast %cst_7 : f32 to vector<800x128xf32>
    %10 = arith.maximumf %8, %9 : vector<800x128xf32>
    %11 = arith.truncf %10 : vector<800x128xf32> to vector<800x128xbf16>
    %c0_8 = arith.constant 0 : index
    %c0_9 = arith.constant 0 : index
    %12 = vector.load %arg4[%c0_8, %c0_9] : memref<128x128xbf16, #tpu.memory_space<vmem>>, vector<128x128xbf16>
    %cst_10 = arith.constant dense<0.000000e+00> : vector<800x128xf32>
    %13 = tpu.matmul %11, %12, %cst_10 {dimension_numbers = #tpu.dot_dimension_numbers<[1], [0], [0], [1], [0, 0, 1, 1], [], []>} : vector<800x128xbf16>, vector<128x128xbf16>, vector<800x128xf32> -> vector<800x128xf32>
    %c1 = arith.constant 1 : index
    %c0_11 = arith.constant 0 : index
    %14 = vector.load %arg5[%c1, %c0_11] : memref<8x256xf32, #tpu.memory_space<vmem>>, vector<1x128xf32>
    %15 = vector.broadcast %14 : vector<1x128xf32> to vector<800x128xf32>
    %16 = arith.addf %13, %15 : vector<800x128xf32>
    %cst_12 = arith.constant 0.000000e+00 : f32
    %17 = vector.broadcast %cst_12 : f32 to vector<800x128xf32>
    %18 = arith.maximumf %16, %17 : vector<800x128xf32>
    %c2 = arith.constant 2 : index
    %c0_13 = arith.constant 0 : index
    %19 = vector.load %arg5[%c2, %c0_13] : memref<8x256xf32, #tpu.memory_space<vmem>>, vector<1x128xf32>
    %20 = vector.broadcast %19 : vector<1x128xf32> to vector<800x128xf32>
    %21 = arith.mulf %18, %20 : vector<800x128xf32>
    %c3 = arith.constant 3 : index
    %c0_14 = arith.constant 0 : index
    %22 = vector.load %arg5[%c3, %c0_14] : memref<8x256xf32, #tpu.memory_space<vmem>>, vector<1x128xf32>
    %23 = vector.broadcast %22 : vector<1x128xf32> to vector<800x128xf32>
    %24 = arith.addf %21, %23 : vector<800x128xf32>
    %25 = vector.extract_strided_slice %5 {offsets = [0, 128], sizes = [800, 128], strides = [1, 1]} : vector<800x256xf32> to vector<800x128xf32>
    %26 = arith.addf %24, %25 : vector<800x128xf32>
    %cst_15 = arith.constant 0.000000e+00 : f32
    %27 = vector.broadcast %cst_15 : f32 to vector<800x128xf32>
    %28 = arith.maximumf %26, %27 : vector<800x128xf32>
    %c0_16 = arith.constant 0 : index
    %c0_17 = arith.constant 0 : index
    %29 = vector.load %arg6[%c0_16, %c0_17] : memref<800x128xf32, #tpu.memory_space<vmem>>, vector<800x128xf32>
    tpu.vector_store %arg6[%c0_16, %c0_17], %28 {strides = array<i32>} : memref<800x128xf32, #tpu.memory_space<vmem>>, vector<800x128xf32>,
    return
  }
  func.func @transform_0(%arg0: i32) -> (i32, i32) {
    %c0_i32 = arith.constant 0 : i32
    %c0_i32_0 = arith.constant 0 : i32
    return %arg0, %c0_i32 : i32, i32
  }
  func.func @transform_1(%arg0: i32) -> (i32, i32) {
    %c0_i32 = arith.constant 0 : i32
    %c0_i32_0 = arith.constant 0 : i32
    return %arg0, %c0_i32 : i32, i32
  }
  func.func @transform_2(%arg0: i32) -> (i32, i32) {
    %c0_i32 = arith.constant 0 : i32
    %c0_i32_0 = arith.constant 0 : i32
    %c0_i32_1 = arith.constant 0 : i32
    return %c0_i32, %c0_i32_0 : i32, i32
  }
  func.func @transform_3(%arg0: i32) -> (i32, i32) {
    %c0_i32 = arith.constant 0 : i32
    %c0_i32_0 = arith.constant 0 : i32
    %c0_i32_1 = arith.constant 0 : i32
    return %c0_i32, %c0_i32_0 : i32, i32
  }
  func.func @transform_4(%arg0: i32) -> (i32, i32) {
    %c0_i32 = arith.constant 0 : i32
    %c0_i32_0 = arith.constant 0 : i32
    %c0_i32_1 = arith.constant 0 : i32
    return %c0_i32, %c0_i32_0 : i32, i32
  }
  func.func @transform_5(%arg0: i32) -> (i32, i32) {
    %c0_i32 = arith.constant 0 : i32
    %c0_i32_0 = arith.constant 0 : i32
    return %arg0, %c0_i32 : i32, i32
  }
}

</mosaic_0001>

<llo_original>
// kernel: tile.6
$region0: #{tile.6}
  #allocation0 [shape = 's32[1]{0}', space=sflag, size = 0x4, scoped, tag = 'scoped memory for tile.6']
  %s0 = inlined_call_operand.vmem [shape: f32[8], index: 0, kind: input, shape index: {}]
  %s1 = inlined_call_operand.vmem [shape: f32[25,8], index: 1, kind: output, shape index: {}]
  // Predicated region
  $region2: #{tile.6} parent=0 // pred_check
    _
  $region3: #{tile.6} parent=0 // pred_check_branch
    %3 = sbr.rel (0) target = $region5
  $region4: #{tile.6} parent=0 // pred_region
    _
  $region5: #{tile.6} parent=0 // pred_fallthru
    _
  %v4 = vld [vmem:[%s0] ss:$0 sm:$0xff]
  %5 = vst [vmem:[%s1] sm:$0xff] %v4
  %s6 = scalar_lea.vmem %s1, 8
  %7 = vst [vmem:[%s6] sm:$0xff] %v4
  %s8 = scalar_lea.vmem %s1, 16
  %9 = vst [vmem:[%s8] sm:$0xff] %v4
  %s10 = scalar_lea.vmem %s1, 24
  %11 = vst [vmem:[%s10] sm:$0xff] %v4

// kernel: tile.7
$region0: #{tile.7}
  %s0 = inlined_call_operand.vmem [shape: f32[25,8], index: 0, kind: input, shape index: {}]
  %s1 = inlined_call_operand.vmem [shape: f32[200], index: 1, kind: output, shape index: {}]
  $region1: #{tile.7} parent=0
    #allocation0 [shape = 'u8[4096]{0}', space=vmem, size = 0x1000, scoped, tag = 'scoped mem for output reshape']
    %s2 = smov 3
    %v3 = vld [vmem:[%s0] ss:$16 sm:%s2]
    %vm4 = vcmask 64512
    %5 = vst.msk [vmem:[#allocation0] sm:$0x3] %vm4, %v3
    %s6 = scalar_lea.vmem %s0, 15
    %v7 = vld [vmem:[%s6] sm:$0x1]
    %8 = vrot.lane.b32.xlu0 %v7, 120
    %v9 = vpop.permute.xlu0 %8
    %vm10 = vcmask 1048512
    %11 = vst.msk [vmem:[#allocation0] sm:$0x1] %vm10, %v9
    %s12 = scalar_lea.vmem %s0, 14
    %v13 = vld [vmem:[%s12] sm:$0x1]
    %14 = vrot.lane.b32.xlu0 %v13, 112
    %v15 = vpop.permute.xlu0 %14
    %vm16 = vcmask 982912
    %17 = vst.msk [vmem:[#allocation0] sm:$0x1] %vm16, %v15
    %s18 = scalar_lea.vmem %s0, 13
    %v19 = vld [vmem:[%s18] sm:$0x1]
    %20 = vrot.lane.b32.xlu0 %v19, 104
    %v21 = vpop.permute.xlu0 %20
    %vm22 = vcmask 917312
    %23 = vst.msk [vmem:[#allocation0] sm:$0x1] %vm22, %v21
    %s24 = scalar_lea.vmem %s0, 12
    %v25 = vld [vmem:[%s24] sm:$0x1]
    %26 = vrot.lane.b32.xlu0 %v25, 96
    %v27 = vpop.permute.xlu0 %26
    %vm28 = vcmask 851712
    %29 = vst.msk [vmem:[#allocation0] sm:$0x1] %vm28, %v27
    %s30 = scalar_lea.vmem %s0, 11
    %v31 = vld [vmem:[%s30] sm:$0x1]
    %32 = vrot.lane.b32.xlu0 %v31, 88
    %v33 = vpop.permute.xlu0 %32
    %vm34 = vcmask 786112
    %35 = vst.msk [vmem:[#allocation0] sm:$0x1] %vm34, %v33
    %s36 = scalar_lea.vmem %s0, 10
    %v37 = vld [vmem:[%s36] sm:$0x1]
    %38 = vrot.lane.b32.xlu0 %v37, 80
    %v39 = vpop.permute.xlu0 %38
    %vm40 = vcmask 720512
    %41 = vst.msk [vmem:[#allocation0] sm:$0x1] %vm40, %v39
    %s42 = scalar_lea.vmem %s0, 9
    %v43 = vld [vmem:[%s42] sm:$0x1]
    %44 = vrot.lane.b32.xlu0 %v43, 72
    %v45 = vpop.permute.xlu0 %44
    %vm46 = vcmask 654912
    %47 = vst.msk [vmem:[#allocation0] sm:$0x1] %vm46, %v45
    %s48 = scalar_lea.vmem %s0, 8
    %s49 = smov 3
    %v50 = vld [vmem:[%s48] ss:$16 sm:%s49]
    %51 = vrot.lane.b32.xlu0 %v50, 64
    %v52 = vpop.permute.xlu0 %51
    %vm53 = vcmask 589312
    %54 = vst.msk [vmem:[#allocation0] sm:$0x3] %vm53, %v52
    %s55 = scalar_lea.vmem %s0, 7
    %s56 = smov 3
    %v57 = vld [vmem:[%s55] ss:$16 sm:%s56]
    %58 = vrot.lane.b32.xlu0 %v57, 56
    %v59 = vpop.permute.xlu0 %58
    %vm60 = vcmask 523712
    %61 = vst.msk [vmem:[#allocation0] sm:$0x3] %vm60, %v59
    %s62 = scalar_lea.vmem %s0, 6
    %s63 = smov 3
    %v64 = vld [vmem:[%s62] ss:$16 sm:%s63]
    %65 = vrot.lane.b32.xlu0 %v64, 48
    %v66 = vpop.permute.xlu0 %65
    %vm67 = vcmask 458112
    %68 = vst.msk [vmem:[#allocation0] sm:$0x3] %vm67, %v66
    %s69 = scalar_lea.vmem %s0, 5
    %s70 = smov 3
    %v71 = vld [vmem:[%s69] ss:$16 sm:%s70]
    %72 = vrot.lane.b32.xlu0 %v71, 40
    %v73 = vpop.permute.xlu0 %72
    %vm74 = vcmask 392512
    %75 = vst.msk [vmem:[#allocation0] sm:$0x3] %vm74, %v73
    %s76 = scalar_lea.vmem %s0, 4
    %s77 = smov 3
    %v78 = vld [vmem:[%s76] ss:$16 sm:%s77]
    %79 = vrot.lane.b32.xlu0 %v78, 32
    %v80 = vpop.permute.xlu0 %79
    %vm81 = vcmask 326912
    %82 = vst.msk [vmem:[#allocation0] sm:$0x3] %vm81, %v80
    %s83 = scalar_lea.vmem %s0, 3
    %s84 = smov 3
    %v85 = vld [vmem:[%s83] ss:$16 sm:%s84]
    %86 = vrot.lane.b32.xlu0 %v85, 24
    %v87 = vpop.permute.xlu0 %86
    %vm88 = vcmask 261312
    %89 = vst.msk [vmem:[#allocation0] sm:$0x3] %vm88, %v87
    %s90 = scalar_lea.vmem %s0, 2
    %s91 = smov 3
    %v92 = vld [vmem:[%s90] ss:$16 sm:%s91]
    %93 = vrot.lane.b32.xlu0 %v92, 16
    %v94 = vpop.permute.xlu0 %93
    %vm95 = vcmask 195712
    %96 = vst.msk [vmem:[#allocation0] sm:$0x3] %vm95, %v94
    %s97 = scalar_lea.vmem %s0, 1
    %s98 = smov 3
    %v99 = vld [vmem:[%s97] ss:$16 sm:%s98]
    %100 = vrot.lane.b32.xlu0 %v99, 8
    %v101 = vpop.permute.xlu0 %100
    %vm102 = vcmask 130112
    %103 = vst.msk [vmem:[#allocation0] sm:$0x3] %vm102, %v101
    %s105 = sshllo.u32 0, 2
    %v107 = vld [vmem:[#allocation0] sm:%s105]
    %s108 = sshllo.u32 0, 2
    %109 = vst [vmem:[%s1] sm:%s108] %v107

// kernel: mul.53
$region0: #{mul.53}
  %s0 = inlined_call_operand.vmem [shape: f32[200], index: 0, kind: input, shape index: {}]
  %s1 = inlined_call_operand.vmem [shape: f32[25,8], index: 1, kind: output, shape index: {}]
  $region1: #{mul.53} parent=0
    #allocation0 [shape = 'u8[4096]{0}', space=vmem, size = 0x1000, scoped, tag = 'scoped mem for input reshape']
    %s3 = sshllo.u32 0, 2
    %v4 = vld [vmem:[%s0] sm:%s3]
    %5 = vst [vmem:[#allocation0] sm:%s3] %v4
    %v6 = vld [vmem:[#allocation0] sm:$0x3]
    %vm7 = vcmask 64512
    %8 = vst.msk [vmem:[%s1] ss:$16 sm:$0x3] %vm7, %v6
    %v9 = vld [vmem:[#allocation0] sm:$0x3]
    %10 = vrot.lane.b32.xlu0 %v9, 120
    %v11 = vpop.permute.xlu0 %10
    %vm12 = vcmask 64512
    %s13 = scalar_lea.vmem %s1, 1
    %14 = vst.msk [vmem:[%s13] ss:$16 sm:$0x3] %vm12, %v11
    %v15 = vld [vmem:[#allocation0] sm:$0x3]
    %16 = vrot.lane.b32.xlu0 %v15, 112
    %v17 = vpop.permute.xlu0 %16
    %vm18 = vcmask 64512
    %s19 = scalar_lea.vmem %s1, 2
    %20 = vst.msk [vmem:[%s19] ss:$16 sm:$0x3] %vm18, %v17
    %v21 = vld [vmem:[#allocation0] sm:$0x3]
    %22 = vrot.lane.b32.xlu0 %v21, 104
    %v23 = vpop.permute.xlu0 %22
    %vm24 = vcmask 64512
    %s25 = scalar_lea.vmem %s1, 3
    %26 = vst.msk [vmem:[%s25] ss:$16 sm:$0x3] %vm24, %v23
    %v27 = vld [vmem:[#allocation0] sm:$0x3]
    %28 = vrot.lane.b32.xlu0 %v27, 96
    %v29 = vpop.permute.xlu0 %28
    %vm30 = vcmask 64512
    %s31 = scalar_lea.vmem %s1, 4
    %32 = vst.msk [vmem:[%s31] ss:$16 sm:$0x3] %vm30, %v29
    %v33 = vld [vmem:[#allocation0] sm:$0x3]
    %34 = vrot.lane.b32.xlu0 %v33, 88
    %v35 = vpop.permute.xlu0 %34
    %vm36 = vcmask 64512
    %s37 = scalar_lea.vmem %s1, 5
    %38 = vst.msk [vmem:[%s37] ss:$16 sm:$0x3] %vm36, %v35
    %v39 = vld [vmem:[#allocation0] sm:$0x3]
    %40 = vrot.lane.b32.xlu0 %v39, 80
    %v41 = vpop.permute.xlu0 %40
    %vm42 = vcmask 64512
    %s43 = scalar_lea.vmem %s1, 6
    %44 = vst.msk [vmem:[%s43] ss:$16 sm:$0x3] %vm42, %v41
    %v45 = vld [vmem:[#allocation0] sm:$0x3]
    %46 = vrot.lane.b32.xlu0 %v45, 72
    %v47 = vpop.permute.xlu0 %46
    %vm48 = vcmask 64512
    %s49 = scalar_lea.vmem %s1, 7
    %50 = vst.msk [vmem:[%s49] ss:$16 sm:$0x3] %vm48, %v47
    %v51 = vld [vmem:[#allocation0] sm:$0x3]
    %52 = vrot.lane.b32.xlu0 %v51, 64
    %v53 = vpop.permute.xlu0 %52
    %vm54 = vcmask 64512
    %s55 = scalar_lea.vmem %s1, 8
    %56 = vst.msk [vmem:[%s55] ss:$16 sm:$0x3] %vm54, %v53
    %v57 = vld [vmem:[#allocation0] sm:$0x1]
    %58 = vrot.lane.b32.xlu0 %v57, 56
    %v59 = vpop.permute.xlu0 %58
    %vm60 = vcmask 64512
    %s61 = scalar_lea.vmem %s1, 9
    %62 = vst.msk [vmem:[%s61] sm:$0x1] %vm60, %v59
    %v63 = vld [vmem:[#allocation0] sm:$0x1]
    %64 = vrot.lane.b32.xlu0 %v63, 48
    %v65 = vpop.permute.xlu0 %64
    %vm66 = vcmask 64512
    %s67 = scalar_lea.vmem %s1, 10
    %68 = vst.msk [vmem:[%s67] sm:$0x1] %vm66, %v65
    %v69 = vld [vmem:[#allocation0] sm:$0x1]
    %70 = vrot.lane.b32.xlu0 %v69, 40
    %v71 = vpop.permute.xlu0 %70
    %vm72 = vcmask 64512
    %s73 = scalar_lea.vmem %s1, 11
    %74 = vst.msk [vmem:[%s73] sm:$0x1] %vm72, %v71
    %v75 = vld [vmem:[#allocation0] sm:$0x1]
    %76 = vrot.lane.b32.xlu0 %v75, 32
    %v77 = vpop.permute.xlu0 %76
    %vm78 = vcmask 64512
    %s79 = scalar_lea.vmem %s1, 12
    %80 = vst.msk [vmem:[%s79] sm:$0x1] %vm78, %v77
    %v81 = vld [vmem:[#allocation0] sm:$0x1]
    %82 = vrot.lane.b32.xlu0 %v81, 24
    %v83 = vpop.permute.xlu0 %82
    %vm84 = vcmask 64512
    %s85 = scalar_lea.vmem %s1, 13
    %86 = vst.msk [vmem:[%s85] sm:$0x1] %vm84, %v83
    %v87 = vld [vmem:[#allocation0] sm:$0x1]
    %88 = vrot.lane.b32.xlu0 %v87, 16
    %v89 = vpop.permute.xlu0 %88
    %vm90 = vcmask 64512
    %s91 = scalar_lea.vmem %s1, 14
    %92 = vst.msk [vmem:[%s91] sm:$0x1] %vm90, %v89
    %v93 = vld [vmem:[#allocation0] sm:$0x1]
    %94 = vrot.lane.b32.xlu0 %v93, 8
    %v95 = vpop.permute.xlu0 %94
    %vm96 = vcmask 64512
    %s97 = scalar_lea.vmem %s1, 15
    %98 = vst.msk [vmem:[%s97] sm:$0x1] %vm96, %v95

// kernel: tcn_gcn_unit_forward.2
$region0: #{tcn_gcn_unit_forward.2}
  #allocation0 [shape = 'u32[]', space=smem, size = 0x4, offset = 0x4, fixed_abs, tag = 'smem constant byte address 0x4 - core index']
  #allocation1 [shape = 'u32[144,128]{1,0:T(1,128)}', space=vmem, size = 0x12000, scoped, tag = 'internal scratch']
  %s0 = inlined_call_operand.vmem [shape: bf16[800,128], index: 0, kind: input, shape index: {}]
  %s1 = inlined_call_operand.vmem [shape: bf16[128,128], index: 1, kind: input, shape index: {}]
  %s2 = inlined_call_operand.vmem [shape: f32[800,128], index: 2, kind: output, shape index: {}]
  %s3 = sld [smem:[#allocation0]]
  $region18: #{tcn_gcn_unit_forward.2} parent=0
    _
  %s5 = ssub.s32 1, %s3
  %s6 = scalar_select 0, %s5, %s3
  // Predicated region
  $region2: #{tcn_gcn_unit_forward.2} parent=0 // pred_check
    _
  $region3: #{tcn_gcn_unit_forward.2} parent=0 // pred_check_branch
    %8 = sbr.rel (0) target = $region5
  $region4: #{tcn_gcn_unit_forward.2} parent=0 // pred_region
    _
  $region5: #{tcn_gcn_unit_forward.2} parent=0 // pred_fallthru
    _
  // Predicated region
  $region6: #{tcn_gcn_unit_forward.2} parent=0 // pred_check
    _
  $region7: #{tcn_gcn_unit_forward.2} parent=0 // pred_check_branch
    %10 = sbr.rel (0) target = $region9
  $region8: #{tcn_gcn_unit_forward.2} parent=0 // pred_region
    _
  $region9: #{tcn_gcn_unit_forward.2} parent=0 // pred_fallthru
    _
  %v12 = vld [vmem:[%s0] sm:$0xf]
  %v13 = vld [vmem:[%s0 + $0x4] sm:$0xf]
  %v14 = vld [vmem:[%s0 + $0x8] sm:$0xf]
  %v15 = vld [vmem:[%s0 + $0xc] sm:$0xf]
  %v16 = vld [vmem:[%s0 + $0x10] sm:$0xf]
  %v17 = vld [vmem:[%s0 + $0x14] sm:$0xf]
  %v18 = vld [vmem:[%s0 + $0x18] sm:$0xf]
  %v19 = vld [vmem:[%s0 + $0x1c] sm:$0xf]
  %v20 = vld [vmem:[%s0 + $0x20] sm:$0xf]
  %v21 = vld [vmem:[%s0 + $0x24] sm:$0xf]
  %v22 = vld [vmem:[%s0 + $0x28] sm:$0xf]
  %v23 = vld [vmem:[%s0 + $0x2c] sm:$0xf]
  %v24 = vld [vmem:[%s0 + $0x30] sm:$0xf]
  %v25 = vld [vmem:[%s0 + $0x34] sm:$0xf]
  %v26 = vld [vmem:[%s0 + $0x38] sm:$0xf]
  %v27 = vld [vmem:[%s0 + $0x3c] sm:$0xf]
  %v28 = vld [vmem:[%s0 + $0x40] sm:$0xf]
  %v29 = vld [vmem:[%s0 + $0x44] sm:$0xf]
  %v30 = vld [vmem:[%s0 + $0x48] sm:$0xf]
  %v31 = vld [vmem:[%s0 + $0x4c] sm:$0xf]
  %v32 = vld [vmem:[%s0 + $0x50] sm:$0xf]
  %v33 = vld [vmem:[%s0 + $0x54] sm:$0xf]
  %v34 = vld [vmem:[%s0 + $0x58] sm:$0xf]
  %v35 = vld [vmem:[%s0 + $0x5c] sm:$0xf]
  %v36 = vld [vmem:[%s0 + $0x60] sm:$0xf]
  %v37 = vld [vmem:[%s0 + $0x64] sm:$0xf]
  %v38 = vld [vmem:[%s0 + $0x68] sm:$0xf]
  %v39 = vld [vmem:[%s0 + $0x6c] sm:$0xf]
  %v40 = vld [vmem:[%s0 + $0x70] sm:$0xf]
  %v41 = vld [vmem:[%s0 + $0x74] sm:$0xf]
  %v42 = vld [vmem:[%s0 + $0x78] sm:$0xf]
  %v43 = vld [vmem:[%s0 + $0x7c] sm:$0xf]
  %v44 = vld [vmem:[%s0 + $0x80] sm:$0xf]
  %v45 = vld [vmem:[%s0 + $0x84] sm:$0xf]
  %v46 = vld [vmem:[%s0 + $0x88] sm:$0xf]
  %v47 = vld [vmem:[%s0 + $0x8c] sm:$0xf]
  %v48 = vld [vmem:[%s0 + $0x90] sm:$0xf]
  %v49 = vld [vmem:[%s0 + $0x94] sm:$0xf]
  %v50 = vld [vmem:[%s0 + $0x98] sm:$0xf]
  %v51 = vld [vmem:[%s0 + $0x9c] sm:$0xf]
  %v52 = vld [vmem:[%s0 + $0xa0] sm:$0xf]
  %v53 = vld [vmem:[%s0 + $0xa4] sm:$0xf]
  %v54 = vld [vmem:[%s0 + $0xa8] sm:$0xf]
  %v55 = vld [vmem:[%s0 + $0xac] sm:$0xf]
  %v56 = vld [vmem:[%s0 + $0xb0] sm:$0xf]
  %v57 = vld [vmem:[%s0 + $0xb4] sm:$0xf]
  %v58 = vld [vmem:[%s0 + $0xb8] sm:$0xf]
  %v59 = vld [vmem:[%s0 + $0xbc] sm:$0xf]
  %v60 = vld [vmem:[%s0 + $0xc0] sm:$0xf]
  %v61 = vld [vmem:[%s0 + $0xc4] sm:$0xf]
  %v62 = vld [vmem:[%s0 + $0xc8] sm:$0xf]
  %v63 = vld [vmem:[%s0 + $0xcc] sm:$0xf]
  %v64 = vld [vmem:[%s0 + $0xd0] sm:$0xf]
  %v65 = vld [vmem:[%s0 + $0xd4] sm:$0xf]
  %v66 = vld [vmem:[%s0 + $0xd8] sm:$0xf]
  %v67 = vld [vmem:[%s0 + $0xdc] sm:$0xf]
  %v68 = vld [vmem:[%s0 + $0xe0] sm:$0xf]
  %v69 = vld [vmem:[%s0 + $0xe4] sm:$0xf]
  %v70 = vld [vmem:[%s0 + $0xe8] sm:$0xf]
  %v71 = vld [vmem:[%s0 + $0xec] sm:$0xf]
  %v72 = vld [vmem:[%s0 + $0xf0] sm:$0xf]
  %v73 = vld [vmem:[%s0 + $0xf4] sm:$0xf]
  %v74 = vld [vmem:[%s0 + $0xf8] sm:$0xf]
  %v75 = vld [vmem:[%s0 + $0xfc] sm:$0xf]
  %v76 = vld [vmem:[%s0 + $0x100] sm:$0xf]
  %v77 = vld [vmem:[%s0 + $0x104] sm:$0xf]
  %v78 = vld [vmem:[%s0 + $0x108] sm:$0xf]
  %v79 = vld [vmem:[%s0 + $0x10c] sm:$0xf]
  %v80 = vld [vmem:[%s0 + $0x110] sm:$0xf]
  %v81 = vld [vmem:[%s0 + $0x114] sm:$0xf]
  %v82 = vld [vmem:[%s0 + $0x118] sm:$0xf]
  %v83 = vld [vmem:[%s0 + $0x11c] sm:$0xf]
  %v84 = vld [vmem:[%s0 + $0x120] sm:$0xf]
  %v85 = vld [vmem:[%s0 + $0x124] sm:$0xf]
  %v86 = vld [vmem:[%s0 + $0x128] sm:$0xf]
  %v87 = vld [vmem:[%s0 + $0x12c] sm:$0xf]
  %v88 = vld [vmem:[%s0 + $0x130] sm:$0xf]
  %v89 = vld [vmem:[%s0 + $0x134] sm:$0xf]
  %v90 = vld [vmem:[%s0 + $0x138] sm:$0xf]
  %v91 = vld [vmem:[%s0 + $0x13c] sm:$0xf]
  %v92 = vld [vmem:[%s0 + $0x140] sm:$0xf]
  %v93 = vld [vmem:[%s0 + $0x144] sm:$0xf]
  %v94 = vld [vmem:[%s0 + $0x148] sm:$0xf]
  %v95 = vld [vmem:[%s0 + $0x14c] sm:$0xf]
  %v96 = vld [vmem:[%s0 + $0x150] sm:$0xf]
  %v97 = vld [vmem:[%s0 + $0x154] sm:$0xf]
  %v98 = vld [vmem:[%s0 + $0x158] sm:$0xf]
  %v99 = vld [vmem:[%s0 + $0x15c] sm:$0xf]
  %v100 = vld [vmem:[%s0 + $0x160] sm:$0xf]
  %v101 = vld [vmem:[%s0 + $0x164] sm:$0xf]
  %v102 = vld [vmem:[%s0 + $0x168] sm:$0xf]
  %v103 = vld [vmem:[%s0 + $0x16c] sm:$0xf]
  %v104 = vld [vmem:[%s0 + $0x170] sm:$0xf]
  %v105 = vld [vmem:[%s0 + $0x174] sm:$0xf]
  %v106 = vld [vmem:[%s0 + $0x178] sm:$0xf]
  %v107 = vld [vmem:[%s0 + $0x17c] sm:$0xf]
  %v108 = vld [vmem:[%s0 + $0x180] sm:$0xf]
  %v109 = vld [vmem:[%s0 + $0x184] sm:$0xf]
  %v110 = vld [vmem:[%s0 + $0x188] sm:$0xf]
  %v111 = vld [vmem:[%s0 + $0x18c] sm:$0xf]
  %v112 = vld [vmem:[%s1] sm:$0xf]
  %v113 = vld [vmem:[%s1 + $0x4] sm:$0xf]
  %v114 = vld [vmem:[%s1 + $0x8] sm:$0xf]
  %v115 = vld [vmem:[%s1 + $0xc] sm:$0xf]
  %v116 = vld [vmem:[%s1 + $0x10] sm:$0xf]
  %v117 = vld [vmem:[%s1 + $0x14] sm:$0xf]
  %v118 = vld [vmem:[%s1 + $0x18] sm:$0xf]
  %v119 = vld [vmem:[%s1 + $0x1c] sm:$0xf]
  %v120 = vld [vmem:[%s1 + $0x20] sm:$0xf]
  %v121 = vld [vmem:[%s1 + $0x24] sm:$0xf]
  %v122 = vld [vmem:[%s1 + $0x28] sm:$0xf]
  %v123 = vld [vmem:[%s1 + $0x2c] sm:$0xf]
  %v124 = vld [vmem:[%s1 + $0x30] sm:$0xf]
  %v125 = vld [vmem:[%s1 + $0x34] sm:$0xf]
  %v126 = vld [vmem:[%s1 + $0x38] sm:$0xf]
  %v127 = vld [vmem:[%s1 + $0x3c] sm:$0xf]
  %v228 = vunpack.c.l.b16 %v12
  %v229 = vunpack.c.l.b16 %v13
  %v230 = vunpack.c.l.b16 %v14
  %v231 = vunpack.c.l.b16 %v15
  %v232 = vunpack.c.l.b16 %v16
  %v233 = vunpack.c.l.b16 %v17
  %v234 = vunpack.c.l.b16 %v18
  %v235 = vunpack.c.l.b16 %v19
  %v236 = vunpack.c.l.b16 %v20
  %v237 = vunpack.c.l.b16 %v21
  %v238 = vunpack.c.l.b16 %v22
  %v239 = vunpack.c.l.b16 %v23
  %v240 = vunpack.c.l.b16 %v24
  %v241 = vunpack.c.l.b16 %v25
  %v242 = vunpack.c.l.b16 %v26
  %v243 = vunpack.c.l.b16 %v27
  %v244 = vunpack.c.l.b16 %v28
  %v245 = vunpack.c.l.b16 %v29
  %v246 = vunpack.c.l.b16 %v30
  %v247 = vunpack.c.l.b16 %v31
  %v248 = vunpack.c.l.b16 %v32
  %v249 = vunpack.c.l.b16 %v33
  %v250 = vunpack.c.l.b16 %v34
  %v251 = vunpack.c.l.b16 %v35
  %v252 = vunpack.c.l.b16 %v36
  %v253 = vunpack.c.l.b16 %v37
  %v254 = vunpack.c.l.b16 %v38
  %v255 = vunpack.c.l.b16 %v39
  %v256 = vunpack.c.l.b16 %v40
  %v257 = vunpack.c.l.b16 %v41
  %v258 = vunpack.c.l.b16 %v42
  %v259 = vunpack.c.l.b16 %v43
  %v260 = vunpack.c.l.b16 %v44
  %v261 = vunpack.c.l.b16 %v45
  %v262 = vunpack.c.l.b16 %v46
  %v263 = vunpack.c.l.b16 %v47
  %v264 = vunpack.c.l.b16 %v48
  %v265 = vunpack.c.l.b16 %v49
  %v266 = vunpack.c.l.b16 %v50
  %v267 = vunpack.c.l.b16 %v51
  %v268 = vunpack.c.l.b16 %v52
  %v269 = vunpack.c.l.b16 %v53
  %v270 = vunpack.c.l.b16 %v54
  %v271 = vunpack.c.l.b16 %v55
  %v272 = vunpack.c.l.b16 %v56
  %v273 = vunpack.c.l.b16 %v57
  %v274 = vunpack.c.l.b16 %v58
  %v275 = vunpack.c.l.b16 %v59
  %v276 = vunpack.c.l.b16 %v60
  %v277 = vunpack.c.l.b16 %v61
  %v278 = vunpack.c.l.b16 %v62
  %v279 = vunpack.c.l.b16 %v63
  %v280 = vunpack.c.l.b16 %v64
  %v281 = vunpack.c.l.b16 %v65
  %v282 = vunpack.c.l.b16 %v66
  %v283 = vunpack.c.l.b16 %v67
  %v284 = vunpack.c.l.b16 %v68
  %v285 = vunpack.c.l.b16 %v69
  %v286 = vunpack.c.l.b16 %v70
  %v287 = vunpack.c.l.b16 %v71
  %v288 = vunpack.c.l.b16 %v72
  %v289 = vunpack.c.l.b16 %v73
  %v290 = vunpack.c.l.b16 %v74
  %v291 = vunpack.c.l.b16 %v75
  %v292 = vunpack.c.l.b16 %v76
  %v293 = vunpack.c.l.b16 %v77
  %v294 = vunpack.c.l.b16 %v78
  %v295 = vunpack.c.l.b16 %v79
  %v296 = vunpack.c.l.b16 %v80
  %v297 = vunpack.c.l.b16 %v81
  %v298 = vunpack.c.l.b16 %v82
  %v299 = vunpack.c.l.b16 %v83
  %v300 = vunpack.c.l.b16 %v84
  %v301 = vunpack.c.l.b16 %v85
  %v302 = vunpack.c.l.b16 %v86
  %v303 = vunpack.c.l.b16 %v87
  %v304 = vunpack.c.l.b16 %v88
  %v305 = vunpack.c.l.b16 %v89
  %v306 = vunpack.c.l.b16 %v90
  %v307 = vunpack.c.l.b16 %v91
  %v308 = vunpack.c.l.b16 %v92
  %v309 = vunpack.c.l.b16 %v93
  %v310 = vunpack.c.l.b16 %v94
  %v311 = vunpack.c.l.b16 %v95
  %v312 = vunpack.c.l.b16 %v96
  %v313 = vunpack.c.l.b16 %v97
  %v314 = vunpack.c.l.b16 %v98
  %v315 = vunpack.c.l.b16 %v99
  %v316 = vunpack.c.l.b16 %v100
  %v317 = vunpack.c.l.b16 %v101
  %v318 = vunpack.c.l.b16 %v102
  %v319 = vunpack.c.l.b16 %v103
  %v320 = vunpack.c.l.b16 %v104
  %v321 = vunpack.c.l.b16 %v105
  %v322 = vunpack.c.l.b16 %v106
  %v323 = vunpack.c.l.b16 %v107
  %v324 = vunpack.c.l.b16 %v108
  %v325 = vunpack.c.l.b16 %v109
  %v326 = vunpack.c.l.b16 %v110
  %v327 = vunpack.c.l.b16 %v111
  %v328 = vpack.c.b16 %v229, %v228
  %v329 = vpack.c.b16 %v231, %v230
  %v330 = vpack.c.b16 %v233, %v232
  %v331 = vpack.c.b16 %v235, %v234
  %v332 = vpack.c.b16 %v237, %v236
  %v333 = vpack.c.b16 %v239, %v238
  %v334 = vpack.c.b16 %v241, %v240
  %v335 = vpack.c.b16 %v243, %v242
  %v336 = vpack.c.b16 %v245, %v244
  %v337 = vpack.c.b16 %v247, %v246
  %v338 = vpack.c.b16 %v249, %v248
  %v339 = vpack.c.b16 %v251, %v250
  %v340 = vpack.c.b16 %v253, %v252
  %v341 = vpack.c.b16 %v255, %v254
  %v342 = vpack.c.b16 %v257, %v256
  %v343 = vpack.c.b16 %v259, %v258
  %v344 = vpack.c.b16 %v261, %v260
  %v345 = vpack.c.b16 %v263, %v262
  %v346 = vpack.c.b16 %v265, %v264
  %v347 = vpack.c.b16 %v267, %v266
  %v348 = vpack.c.b16 %v269, %v268
  %v349 = vpack.c.b16 %v271, %v270
  %v350 = vpack.c.b16 %v273, %v272
  %v351 = vpack.c.b16 %v275, %v274
  %v352 = vpack.c.b16 %v277, %v276
  %v353 = vpack.c.b16 %v279, %v278
  %v354 = vpack.c.b16 %v281, %v280
  %v355 = vpack.c.b16 %v283, %v282
  %v356 = vpack.c.b16 %v285, %v284
  %v357 = vpack.c.b16 %v287, %v286
  %v358 = vpack.c.b16 %v289, %v288
  %v359 = vpack.c.b16 %v291, %v290
  %v360 = vpack.c.b16 %v293, %v292
  %v361 = vpack.c.b16 %v295, %v294
  %v362 = vpack.c.b16 %v297, %v296
  %v363 = vpack.c.b16 %v299, %v298
  %v364 = vpack.c.b16 %v301, %v300
  %v365 = vpack.c.b16 %v303, %v302
  %v366 = vpack.c.b16 %v305, %v304
  %v367 = vpack.c.b16 %v307, %v306
  %v368 = vpack.c.b16 %v309, %v308
  %v369 = vpack.c.b16 %v311, %v310
  %v370 = vpack.c.b16 %v313, %v312
  %v371 = vpack.c.b16 %v315, %v314
  %v372 = vpack.c.b16 %v317, %v316
  %v373 = vpack.c.b16 %v319, %v318
  %v374 = vpack.c.b16 %v321, %v320
  %v375 = vpack.c.b16 %v323, %v322
  %v376 = vpack.c.b16 %v325, %v324
  %v377 = vpack.c.b16 %v327, %v326
  %v444 = vunpack.c.l.b16 %v112
  %v445 = vunpack.c.l.b16 %v113
  %v446 = vunpack.c.l.b16 %v114
  %v447 = vunpack.c.l.b16 %v115
  %v448 = vunpack.c.l.b16 %v116
  %v449 = vunpack.c.l.b16 %v117
  %v450 = vunpack.c.l.b16 %v118
  %v451 = vunpack.c.l.b16 %v119
  %v452 = vunpack.c.l.b16 %v120
  %v453 = vunpack.c.l.b16 %v121
  %v454 = vunpack.c.l.b16 %v122
  %v455 = vunpack.c.l.b16 %v123
  %v456 = vunpack.c.l.b16 %v124
  %v457 = vunpack.c.l.b16 %v125
  %v458 = vunpack.c.l.b16 %v126
  %v459 = vunpack.c.l.b16 %v127
  %v460 = vpack.c.b16 %v445, %v444
  %v461 = vpack.c.b16 %v447, %v446
  %v462 = vpack.c.b16 %v449, %v448
  %v463 = vpack.c.b16 %v451, %v450
  %v464 = vpack.c.b16 %v453, %v452
  %v465 = vpack.c.b16 %v455, %v454
  %v466 = vpack.c.b16 %v457, %v456
  %v467 = vpack.c.b16 %v459, %v458
  %476 = vmatprep.subr.bf16.mxu0 0
  %477 = vmatpush1.bf16.msra.mxu0 %v460
  %478 = vmatprep.subr.bf16.mxu0 0
  %479 = vmatpush1.bf16.msra.mxu0 %v461
  %480 = vmatprep.subr.bf16.mxu0 0
  %481 = vmatpush1.bf16.msra.mxu0 %v462
  %482 = vmatprep.subr.bf16.mxu0 0
  %483 = vmatpush1.bf16.msra.mxu0 %v463
  %484 = vmatprep.subr.bf16.mxu0 0
  %485 = vmatpush1.bf16.msra.mxu0 %v464
  %486 = vmatprep.subr.bf16.mxu0 0
  %487 = vmatpush1.bf16.msra.mxu0 %v465
  %488 = vmatprep.subr.bf16.mxu0 0
  %489 = vmatpush1.bf16.msra.mxu0 %v466
  %490 = vmatprep.subr.bf16.mxu0 0
  %491 = vmatpush1.bf16.msra.mxu0 %v467
  %492 = vmatprep.subr.bf16.mxu0 0
  %493 = vmatpush1.bf16.msra.mxu0 0
  %494 = vmatprep.subr.bf16.mxu0 0
  %495 = vmatpush1.bf16.msra.mxu0 0
  %496 = vmatprep.subr.bf16.mxu0 0
  %497 = vmatpush1.bf16.msra.mxu0 0
  %498 = vmatprep.subr.bf16.mxu0 0
  %499 = vmatpush1.bf16.msra.mxu0 0
  %500 = vmatprep.subr.bf16.mxu0 0
  %501 = vmatpush1.bf16.msra.mxu0 0
  %502 = vmatprep.subr.bf16.mxu0 0
  %503 = vmatpush1.bf16.msra.mxu0 0
  %504 = vmatprep.subr.bf16.mxu0 0
  %505 = vmatpush1.bf16.msra.mxu0 0
  %506 = vmatprep.subr.bf16.mxu0 0
  %507 = vmatpush1.bf16.msra.mxu0 0
  %508 = vmatprep.mubr.bf16.mxu0 0
  %509 = vmatmul.mubr.bf16.gmra.mrb[0].mxu0 %v328
  %v510 = vpop.f32.mrb[0].mxu0
  %v511 = vadd.f32 0.0, %v510
  %v512 = vpop.f32.mrb[0].mxu0
  %v513 = vpop.f32.mrb[0].mxu0
  %v514 = vadd.f32 0.0, %v513
  %v515 = vpop.f32.mrb[0].mxu0
  %516 = vmatprep.mubr.bf16.mxu0 0
  %517 = vmatmul.mubr.bf16.gmra.mrb[0].mxu0 %v329
  %v518 = vpop.f32.mrb[0].mxu0
  %v519 = vadd.f32 0.0, %v518
  %v520 = vpop.f32.mrb[0].mxu0
  %v521 = vpop.f32.mrb[0].mxu0
  %v522 = vadd.f32 0.0, %v521
  %v523 = vpop.f32.mrb[0].mxu0
  %524 = vmatprep.mubr.bf16.mxu0 0
  %525 = vmatmul.mubr.bf16.gmra.mrb[0].mxu0 %v330
  %v526 = vpop.f32.mrb[0].mxu0
  %v527 = vadd.f32 0.0, %v526
  %v528 = vpop.f32.mrb[0].mxu0
  %v529 = vpop.f32.mrb[0].mxu0
  %v530 = vadd.f32 0.0, %v529
  %v531 = vpop.f32.mrb[0].mxu0
  %532 = vmatprep.mubr.bf16.mxu0 0
  %533 = vmatmul.mubr.bf16.gmra.mrb[0].mxu0 %v331
  %v534 = vpop.f32.mrb[0].mxu0
  %v535 = vadd.f32 0.0, %v534
  %v536 = vpop.f32.mrb[0].mxu0
  %v537 = vpop.f32.mrb[0].mxu0
  %v538 = vadd.f32 0.0, %v537
  %v539 = vpop.f32.mrb[0].mxu0
  %540 = vmatprep.mubr.bf16.mxu0 0
  %541 = vmatmul.mubr.bf16.gmra.mrb[0].mxu0 %v332
  %v542 = vpop.f32.mrb[0].mxu0
  %v543 = vadd.f32 0.0, %v542
  %v544 = vpop.f32.mrb[0].mxu0
  %v545 = vpop.f32.mrb[0].mxu0
  %v546 = vadd.f32 0.0, %v545
  %v547 = vpop.f32.mrb[0].mxu0
  %548 = vmatprep.mubr.bf16.mxu0 0
  %549 = vmatmul.mubr.bf16.gmra.mrb[0].mxu0 %v333
  %v550 = vpop.f32.mrb[0].mxu0
  %v551 = vadd.f32 0.0, %v550
  %v552 = vpop.f32.mrb[0].mxu0
  %v553 = vpop.f32.mrb[0].mxu0
  %v554 = vadd.f32 0.0, %v553
  %v555 = vpop.f32.mrb[0].mxu0
  %556 = vmatprep.mubr.bf16.mxu0 0
  %557 = vmatmul.mubr.bf16.gmra.mrb[0].mxu0 %v334
  %v558 = vpop.f32.mrb[0].mxu0
  %v559 = vadd.f32 0.0, %v558
  %v560 = vpop.f32.mrb[0].mxu0
  %v561 = vpop.f32.mrb[0].mxu0
  %v562 = vadd.f32 0.0, %v561
  %v563 = vpop.f32.mrb[0].mxu0
  %564 = vmatprep.mubr.bf16.mxu0 0
  %565 = vmatmul.mubr.bf16.gmra.mrb[0].mxu0 %v335
  %v566 = vpop.f32.mrb[0].mxu0
  %v567 = vadd.f32 0.0, %v566
  %v568 = vpop.f32.mrb[0].mxu0
  %v569 = vpop.f32.mrb[0].mxu0
  %v570 = vadd.f32 0.0, %v569
  %v571 = vpop.f32.mrb[0].mxu0
  %572 = vmatprep.mubr.bf16.mxu0 0
  %573 = vmatmul.mubr.bf16.gmra.mrb[0].mxu0 %v336
  %v574 = vpop.f32.mrb[0].mxu0
  %v575 = vadd.f32 0.0, %v574
  %v576 = vpop.f32.mrb[0].mxu0
  %v577 = vpop.f32.mrb[0].mxu0
  %v578 = vadd.f32 0.0, %v577
  %v579 = vpop.f32.mrb[0].mxu0
  %580 = vmatprep.mubr.bf16.mxu0 0
  %581 = vmatmul.mubr.bf16.gmra.mrb[0].mxu0 %v337
  %v582 = vpop.f32.mrb[0].mxu0
  %v583 = vadd.f32 0.0, %v582
  %v584 = vpop.f32.mrb[0].mxu0
  %v585 = vpop.f32.mrb[0].mxu0
  %v586 = vadd.f32 0.0, %v585
  %v587 = vpop.f32.mrb[0].mxu0
  %588 = vmatprep.mubr.bf16.mxu0 0
  %589 = vmatmul.mubr.bf16.gmra.mrb[0].mxu0 %v338
  %v590 = vpop.f32.mrb[0].mxu0
  %v591 = vadd.f32 0.0, %v590
  %v592 = vpop.f32.mrb[0].mxu0
  %v593 = vpop.f32.mrb[0].mxu0
  %v594 = vadd.f32 0.0, %v593
  %v595 = vpop.f32.mrb[0].mxu0
  %596 = vmatprep.mubr.bf16.mxu0 0
  %597 = vmatmul.mubr.bf16.gmra.mrb[0].mxu0 %v339
  %v598 = vpop.f32.mrb[0].mxu0
  %v599 = vadd.f32 0.0, %v598
  %v600 = vpop.f32.mrb[0].mxu0
  %v601 = vpop.f32.mrb[0].mxu0
  %v602 = vadd.f32 0.0, %v601
  %v603 = vpop.f32.mrb[0].mxu0
  %604 = vmatprep.mubr.bf16.mxu0 0
  %605 = vmatmul.mubr.bf16.gmra.mrb[0].mxu0 %v340
  %v606 = vpop.f32.mrb[0].mxu0
  %v607 = vadd.f32 0.0, %v606
  %v608 = vpop.f32.mrb[0].mxu0
  %v609 = vpop.f32.mrb[0].mxu0
  %v610 = vadd.f32 0.0, %v609
  %v611 = vpop.f32.mrb[0].mxu0
  %612 = vmatprep.mubr.bf16.mxu0 0
  %613 = vmatmul.mubr.bf16.gmra.mrb[0].mxu0 %v341
  %v614 = vpop.f32.mrb[0].mxu0
  %v615 = vadd.f32 0.0, %v614
  %v616 = vpop.f32.mrb[0].mxu0
  %v617 = vpop.f32.mrb[0].mxu0
  %v618 = vadd.f32 0.0, %v617
  %v619 = vpop.f32.mrb[0].mxu0
  %620 = vmatprep.mubr.bf16.mxu0 0
  %621 = vmatmul.mubr.bf16.gmra.mrb[0].mxu0 %v342
  %v622 = vpop.f32.mrb[0].mxu0
  %v623 = vadd.f32 0.0, %v622
  %v624 = vpop.f32.mrb[0].mxu0
  %v625 = vpop.f32.mrb[0].mxu0
  %v626 = vadd.f32 0.0, %v625
  %v627 = vpop.f32.mrb[0].mxu0
  %628 = vmatprep.mubr.bf16.mxu0 0
  %629 = vmatmul.mubr.bf16.gmra.mrb[0].mxu0 %v343
  %v630 = vpop.f32.mrb[0].mxu0
  %v631 = vadd.f32 0.0, %v630
  %v632 = vpop.f32.mrb[0].mxu0
  %v633 = vpop.f32.mrb[0].mxu0
  %v634 = vadd.f32 0.0, %v633
  %v635 = vpop.f32.mrb[0].mxu0
  %636 = vmatprep.mubr.bf16.mxu0 0
  %637 = vmatmul.mubr.bf16.gmra.mrb[0].mxu0 %v344
  %v638 = vpop.f32.mrb[0].mxu0
  %v639 = vadd.f32 0.0, %v638
  %v640 = vpop.f32.mrb[0].mxu0
  %v641 = vpop.f32.mrb[0].mxu0
  %v642 = vadd.f32 0.0, %v641
  %v643 = vpop.f32.mrb[0].mxu0
  %644 = vmatprep.mubr.bf16.mxu0 0
  %645 = vmatmul.mubr.bf16.gmra.mrb[0].mxu0 %v345
  %v646 = vpop.f32.mrb[0].mxu0
  %v647 = vadd.f32 0.0, %v646
  %v648 = vpop.f32.mrb[0].mxu0
  %v649 = vpop.f32.mrb[0].mxu0
  %v650 = vadd.f32 0.0, %v649
  %v651 = vpop.f32.mrb[0].mxu0
  %652 = vmatprep.mubr.bf16.mxu0 0
  %653 = vmatmul.mubr.bf16.gmra.mrb[0].mxu0 %v346
  %v654 = vpop.f32.mrb[0].mxu0
  %v655 = vadd.f32 0.0, %v654
  %v656 = vpop.f32.mrb[0].mxu0
  %v657 = vpop.f32.mrb[0].mxu0
  %v658 = vadd.f32 0.0, %v657
  %v659 = vpop.f32.mrb[0].mxu0
  %660 = vmatprep.mubr.bf16.mxu0 0
  %661 = vmatmul.mubr.bf16.gmra.mrb[0].mxu0 %v347
  %v662 = vpop.f32.mrb[0].mxu0
  %v663 = vadd.f32 0.0, %v662
  %v664 = vpop.f32.mrb[0].mxu0
  %v665 = vpop.f32.mrb[0].mxu0
  %v666 = vadd.f32 0.0, %v665
  %v667 = vpop.f32.mrb[0].mxu0
  %668 = vmatprep.mubr.bf16.mxu0 0
  %669 = vmatmul.mubr.bf16.gmra.mrb[0].mxu0 %v348
  %v670 = vpop.f32.mrb[0].mxu0
  %v671 = vadd.f32 0.0, %v670
  %v672 = vpop.f32.mrb[0].mxu0
  %v673 = vpop.f32.mrb[0].mxu0
  %v674 = vadd.f32 0.0, %v673
  %v675 = vpop.f32.mrb[0].mxu0
  %676 = vmatprep.mubr.bf16.mxu0 0
  %677 = vmatmul.mubr.bf16.gmra.mrb[0].mxu0 %v349
  %v678 = vpop.f32.mrb[0].mxu0
  %v679 = vadd.f32 0.0, %v678
  %v680 = vpop.f32.mrb[0].mxu0
  %v681 = vpop.f32.mrb[0].mxu0
  %v682 = vadd.f32 0.0, %v681
  %v683 = vpop.f32.mrb[0].mxu0
  %684 = vmatprep.mubr.bf16.mxu0 0
  %685 = vmatmul.mubr.bf16.gmra.mrb[0].mxu0 %v350
  %v686 = vpop.f32.mrb[0].mxu0
  %v687 = vadd.f32 0.0, %v686
  %v688 = vpop.f32.mrb[0].mxu0
  %v689 = vpop.f32.mrb[0].mxu0
  %v690 = vadd.f32 0.0, %v689
  %v691 = vpop.f32.mrb[0].mxu0
  %692 = vmatprep.mubr.bf16.mxu0 0
  %693 = vmatmul.mubr.bf16.gmra.mrb[0].mxu0 %v351
  %v694 = vpop.f32.mrb[0].mxu0
  %v695 = vadd.f32 0.0, %v694
  %v696 = vpop.f32.mrb[0].mxu0
  %v697 = vpop.f32.mrb[0].mxu0
  %v698 = vadd.f32 0.0, %v697
  %v699 = vpop.f32.mrb[0].mxu0
  %700 = vmatprep.mubr.bf16.mxu0 0
  %701 = vmatmul.mubr.bf16.gmra.mrb[0].mxu0 %v352
  %v702 = vpop.f32.mrb[0].mxu0
  %v703 = vadd.f32 0.0, %v702
  %v704 = vpop.f32.mrb[0].mxu0
  %v705 = vpop.f32.mrb[0].mxu0
  %v706 = vadd.f32 0.0, %v705
  %v707 = vpop.f32.mrb[0].mxu0
  %708 = vmatprep.mubr.bf16.mxu0 0
  %709 = vmatmul.mubr.bf16.gmra.mrb[0].mxu0 %v353
  %v710 = vpop.f32.mrb[0].mxu0
  %v711 = vadd.f32 0.0, %v710
  %v712 = vpop.f32.mrb[0].mxu0
  %v713 = vpop.f32.mrb[0].mxu0
  %v714 = vadd.f32 0.0, %v713
  %v715 = vpop.f32.mrb[0].mxu0
  %716 = vmatprep.mubr.bf16.mxu0 0
  %717 = vmatmul.mubr.bf16.gmra.mrb[0].mxu0 %v354
  %v718 = vpop.f32.mrb[0].mxu0
  %v719 = vadd.f32 0.0, %v718
  %v720 = vpop.f32.mrb[0].mxu0
  %v721 = vpop.f32.mrb[0].mxu0
  %v722 = vadd.f32 0.0, %v721
  %v723 = vpop.f32.mrb[0].mxu0
  %724 = vmatprep.mubr.bf16.mxu0 0
  %725 = vmatmul.mubr.bf16.gmra.mrb[0].mxu0 %v355
  %v726 = vpop.f32.mrb[0].mxu0
  %v727 = vadd.f32 0.0, %v726
  %v728 = vpop.f32.mrb[0].mxu0
  %v729 = vpop.f32.mrb[0].mxu0
  %v730 = vadd.f32 0.0, %v729
  %v731 = vpop.f32.mrb[0].mxu0
  %732 = vmatprep.mubr.bf16.mxu0 0
  %733 = vmatmul.mubr.bf16.gmra.mrb[0].mxu0 %v356
  %v734 = vpop.f32.mrb[0].mxu0
  %v735 = vadd.f32 0.0, %v734
  %v736 = vpop.f32.mrb[0].mxu0
  %v737 = vpop.f32.mrb[0].mxu0
  %v738 = vadd.f32 0.0, %v737
  %v739 = vpop.f32.mrb[0].mxu0
  %740 = vmatprep.mubr.bf16.mxu0 0
  %741 = vmatmul.mubr.bf16.gmra.mrb[0].mxu0 %v357
  %v742 = vpop.f32.mrb[0].mxu0
  %v743 = vadd.f32 0.0, %v742
  %v744 = vpop.f32.mrb[0].mxu0
  %v745 = vpop.f32.mrb[0].mxu0
  %v746 = vadd.f32 0.0, %v745
  %v747 = vpop.f32.mrb[0].mxu0
  %748 = vmatprep.mubr.bf16.mxu0 0
  %749 = vmatmul.mubr.bf16.gmra.mrb[0].mxu0 %v358
  %v750 = vpop.f32.mrb[0].mxu0
  %v751 = vadd.f32 0.0, %v750
  %v752 = vpop.f32.mrb[0].mxu0
  %v753 = vpop.f32.mrb[0].mxu0
  %v754 = vadd.f32 0.0, %v753
  %v755 = vpop.f32.mrb[0].mxu0
  %756 = vmatprep.mubr.bf16.mxu0 0
  %757 = vmatmul.mubr.bf16.gmra.mrb[0].mxu0 %v359
  %v758 = vpop.f32.mrb[0].mxu0
  %v759 = vadd.f32 0.0, %v758
  %v760 = vpop.f32.mrb[0].mxu0
  %v761 = vpop.f32.mrb[0].mxu0
  %v762 = vadd.f32 0.0, %v761
  %v763 = vpop.f32.mrb[0].mxu0
  %764 = vmatprep.mubr.bf16.mxu0 0
  %765 = vmatmul.mubr.bf16.gmra.mrb[0].mxu0 %v360
  %v766 = vpop.f32.mrb[0].mxu0
  %v767 = vadd.f32 0.0, %v766
  %v768 = vpop.f32.mrb[0].mxu0
  %v769 = vpop.f32.mrb[0].mxu0
  %v770 = vadd.f32 0.0, %v769
  %v771 = vpop.f32.mrb[0].mxu0
  %772 = vmatprep.mubr.bf16.mxu0 0
  %773 = vmatmul.mubr.bf16.gmra.mrb[0].mxu0 %v361
  %v774 = vpop.f32.mrb[0].mxu0
  %v775 = vadd.f32 0.0, %v774
  %v776 = vpop.f32.mrb[0].mxu0
  %v777 = vpop.f32.mrb[0].mxu0
  %v778 = vadd.f32 0.0, %v777
  %v779 = vpop.f32.mrb[0].mxu0
  %780 = vmatprep.mubr.bf16.mxu0 0
  %781 = vmatmul.mubr.bf16.gmra.mrb[0].mxu0 %v362
  %v782 = vpop.f32.mrb[0].mxu0
  %v783 = vadd.f32 0.0, %v782
  %v784 = vpop.f32.mrb[0].mxu0
  %v785 = vpop.f32.mrb[0].mxu0
  %v786 = vadd.f32 0.0, %v785
  %v787 = vpop.f32.mrb[0].mxu0
  %788 = vmatprep.mubr.bf16.mxu0 0
  %789 = vmatmul.mubr.bf16.gmra.mrb[0].mxu0 %v363
  %v790 = vpop.f32.mrb[0].mxu0
  %v791 = vadd.f32 0.0, %v790
  %v792 = vpop.f32.mrb[0].mxu0
  %v793 = vpop.f32.mrb[0].mxu0
  %v794 = vadd.f32 0.0, %v793
  %v795 = vpop.f32.mrb[0].mxu0
  %796 = vmatprep.mubr.bf16.mxu0 0
  %797 = vmatmul.mubr.bf16.gmra.mrb[0].mxu0 %v364
  %v798 = vpop.f32.mrb[0].mxu0
  %v799 = vadd.f32 0.0, %v798
  %v800 = vpop.f32.mrb[0].mxu0
  %v801 = vpop.f32.mrb[0].mxu0
  %v802 = vadd.f32 0.0, %v801
  %v803 = vpop.f32.mrb[0].mxu0
  %804 = vmatprep.mubr.bf16.mxu0 0
  %805 = vmatmul.mubr.bf16.gmra.mrb[0].mxu0 %v365
  %v806 = vpop.f32.mrb[0].mxu0
  %v807 = vadd.f32 0.0, %v806
  %v808 = vpop.f32.mrb[0].mxu0
  %v809 = vpop.f32.mrb[0].mxu0
  %v810 = vadd.f32 0.0, %v809
  %v811 = vpop.f32.mrb[0].mxu0
  %812 = vmatprep.mubr.bf16.mxu0 0
  %813 = vmatmul.mubr.bf16.gmra.mrb[0].mxu0 %v366
  %v814 = vpop.f32.mrb[0].mxu0
  %v815 = vadd.f32 0.0, %v814
  %v816 = vpop.f32.mrb[0].mxu0
  %v817 = vpop.f32.mrb[0].mxu0
  %v818 = vadd.f32 0.0, %v817
  %v819 = vpop.f32.mrb[0].mxu0
  %820 = vmatprep.mubr.bf16.mxu0 0
  %821 = vmatmul.mubr.bf16.gmra.mrb[0].mxu0 %v367
  %v822 = vpop.f32.mrb[0].mxu0
  %v823 = vadd.f32 0.0, %v822
  %v824 = vpop.f32.mrb[0].mxu0
  %v825 = vpop.f32.mrb[0].mxu0
  %v826 = vadd.f32 0.0, %v825
  %v827 = vpop.f32.mrb[0].mxu0
  %828 = vmatprep.mubr.bf16.mxu0 0
  %829 = vmatmul.mubr.bf16.gmra.mrb[0].mxu0 %v368
  %v830 = vpop.f32.mrb[0].mxu0
  %v831 = vadd.f32 0.0, %v830
  %v832 = vpop.f32.mrb[0].mxu0
  %v833 = vpop.f32.mrb[0].mxu0
  %v834 = vadd.f32 0.0, %v833
  %v835 = vpop.f32.mrb[0].mxu0
  %836 = vmatprep.mubr.bf16.mxu0 0
  %837 = vmatmul.mubr.bf16.gmra.mrb[0].mxu0 %v369
  %v838 = vpop.f32.mrb[0].mxu0
  %v839 = vadd.f32 0.0, %v838
  %v840 = vpop.f32.mrb[0].mxu0
  %v841 = vpop.f32.mrb[0].mxu0
  %v842 = vadd.f32 0.0, %v841
  %v843 = vpop.f32.mrb[0].mxu0
  %844 = vmatprep.mubr.bf16.mxu0 0
  %845 = vmatmul.mubr.bf16.gmra.mrb[0].mxu0 %v370
  %v846 = vpop.f32.mrb[0].mxu0
  %v847 = vadd.f32 0.0, %v846
  %v848 = vpop.f32.mrb[0].mxu0
  %v849 = vpop.f32.mrb[0].mxu0
  %v850 = vadd.f32 0.0, %v849
  %v851 = vpop.f32.mrb[0].mxu0
  %852 = vmatprep.mubr.bf16.mxu0 0
  %853 = vmatmul.mubr.bf16.gmra.mrb[0].mxu0 %v371
  %v854 = vpop.f32.mrb[0].mxu0
  %v855 = vadd.f32 0.0, %v854
  %v856 = vpop.f32.mrb[0].mxu0
  %v857 = vpop.f32.mrb[0].mxu0
  %v858 = vadd.f32 0.0, %v857
  %v859 = vpop.f32.mrb[0].mxu0
  %860 = vmatprep.mubr.bf16.mxu0 0
  %861 = vmatmul.mubr.bf16.gmra.mrb[0].mxu0 %v372
  %v862 = vpop.f32.mrb[0].mxu0
  %v863 = vadd.f32 0.0, %v862
  %v864 = vpop.f32.mrb[0].mxu0
  %v865 = vpop.f32.mrb[0].mxu0
  %v866 = vadd.f32 0.0, %v865
  %v867 = vpop.f32.mrb[0].mxu0
  %868 = vmatprep.mubr.bf16.mxu0 0
  %869 = vmatmul.mubr.bf16.gmra.mrb[0].mxu0 %v373
  %v870 = vpop.f32.mrb[0].mxu0
  %v871 = vadd.f32 0.0, %v870
  %v872 = vpop.f32.mrb[0].mxu0
  %v873 = vpop.f32.mrb[0].mxu0
  %v874 = vadd.f32 0.0, %v873
  %v875 = vpop.f32.mrb[0].mxu0
  %876 = vmatprep.mubr.bf16.mxu0 0
  %877 = vmatmul.mubr.bf16.gmra.mrb[0].mxu0 %v374
  %v878 = vpop.f32.mrb[0].mxu0
  %v879 = vadd.f32 0.0, %v878
  %v880 = vpop.f32.mrb[0].mxu0
  %v881 = vpop.f32.mrb[0].mxu0
  %v882 = vadd.f32 0.0, %v881
  %v883 = vpop.f32.mrb[0].mxu0
  %884 = vmatprep.mubr.bf16.mxu0 0
  %885 = vmatmul.mubr.bf16.gmra.mrb[0].mxu0 %v375
  %v886 = vpop.f32.mrb[0].mxu0
  %v887 = vadd.f32 0.0, %v886
  %v888 = vpop.f32.mrb[0].mxu0
  %v889 = vpop.f32.mrb[0].mxu0
  %v890 = vadd.f32 0.0, %v889
  %v891 = vpop.f32.mrb[0].mxu0
  %892 = vmatprep.mubr.bf16.mxu0 0
  %893 = vmatmul.mubr.bf16.gmra.mrb[0].mxu0 %v376
  %v894 = vpop.f32.mrb[0].mxu0
  %v895 = vadd.f32 0.0, %v894
  %v896 = vpop.f32.mrb[0].mxu0
  %v897 = vpop.f32.mrb[0].mxu0
  %v898 = vadd.f32 0.0, %v897
  %v899 = vpop.f32.mrb[0].mxu0
  %900 = vmatprep.mubr.bf16.mxu0 0
  %901 = vmatmul.mubr.bf16.gmra.mrb[0].mxu0 %v377
  %v902 = vpop.f32.mrb[0].mxu0
  %v903 = vadd.f32 0.0, %v902
  %v904 = vpop.f32.mrb[0].mxu0
  %v905 = vpop.f32.mrb[0].mxu0
  %v906 = vadd.f32 0.0, %v905
  %v907 = vpop.f32.mrb[0].mxu0
  %908 = vdwg.mxu0
  %909 = vst [vmem:[%s2] sm:$0xff] %v511
  %910 = vst [vmem:[%s2 + $0x8] sm:$0xff] %v514
  %911 = vst [vmem:[%s2 + $0x10] sm:$0xff] %v519
  %912 = vst [vmem:[%s2 + $0x18] sm:$0xff] %v522
  %913 = vst [vmem:[%s2 + $0x20] sm:$0xff] %v527
  %914 = vst [vmem:[%s2 + $0x28] sm:$0xff] %v530
  %915 = vst [vmem:[%s2 + $0x30] sm:$0xff] %v535
  %916 = vst [vmem:[%s2 + $0x38] sm:$0xff] %v538
  %917 = vst [vmem:[%s2 + $0x40] sm:$0xff] %v543
  %918 = vst [vmem:[%s2 + $0x48] sm:$0xff] %v546
  %919 = vst [vmem:[%s2 + $0x50] sm:$0xff] %v551
  %920 = vst [vmem:[%s2 + $0x58] sm:$0xff] %v554
  %921 = vst [vmem:[%s2 + $0x60] sm:$0xff] %v559
  %922 = vst [vmem:[%s2 + $0x68] sm:$0xff] %v562
  %923 = vst [vmem:[%s2 + $0x70] sm:$0xff] %v567
  %924 = vst [vmem:[%s2 + $0x78] sm:$0xff] %v570
  %925 = vst [vmem:[%s2 + $0x80] sm:$0xff] %v575
  %926 = vst [vmem:[%s2 + $0x88] sm:$0xff] %v578
  %927 = vst [vmem:[%s2 + $0x90] sm:$0xff] %v583
  %928 = vst [vmem:[%s2 + $0x98] sm:$0xff] %v586
  %929 = vst [vmem:[%s2 + $0xa0] sm:$0xff] %v591
  %930 = vst [vmem:[%s2 + $0xa8] sm:$0xff] %v594
  %931 = vst [vmem:[%s2 + $0xb0] sm:$0xff] %v599
  %932 = vst [vmem:[%s2 + $0xb8] sm:$0xff] %v602
  %933 = vst [vmem:[%s2 + $0xc0] sm:$0xff] %v607
  %934 = vst [vmem:[%s2 + $0xc8] sm:$0xff] %v610
  %935 = vst [vmem:[%s2 + $0xd0] sm:$0xff] %v615
  %936 = vst [vmem:[%s2 + $0xd8] sm:$0xff] %v618
  %937 = vst [vmem:[%s2 + $0xe0] sm:$0xff] %v623
  %938 = vst [vmem:[%s2 + $0xe8] sm:$0xff] %v626
  %939 = vst [vmem:[%s2 + $0xf0] sm:$0xff] %v631
  %940 = vst [vmem:[%s2 + $0xf8] sm:$0xff] %v634
  %941 = vst [vmem:[%s2 + $0x100] sm:$0xff] %v639
  %942 = vst [vmem:[%s2 + $0x108] sm:$0xff] %v642
  %943 = vst [vmem:[%s2 + $0x110] sm:$0xff] %v647
  %944 = vst [vmem:[%s2 + $0x118] sm:$0xff] %v650
  %945 = vst [vmem:[%s2 + $0x120] sm:$0xff] %v655
  %946 = vst [vmem:[%s2 + $0x128] sm:$0xff] %v658
  %947 = vst [vmem:[%s2 + $0x130] sm:$0xff] %v663
  %948 = vst [vmem:[%s2 + $0x138] sm:$0xff] %v666
  %949 = vst [vmem:[%s2 + $0x140] sm:$0xff] %v671
  %950 = vst [vmem:[%s2 + $0x148] sm:$0xff] %v674
  %951 = vst [vmem:[%s2 + $0x150] sm:$0xff] %v679
  %952 = vst [vmem:[%s2 + $0x158] sm:$0xff] %v682
  %953 = vst [vmem:[%s2 + $0x160] sm:$0xff] %v687
  %954 = vst [vmem:[%s2 + $0x168] sm:$0xff] %v690
  %955 = vst [vmem:[%s2 + $0x170] sm:$0xff] %v695
  %956 = vst [vmem:[%s2 + $0x178] sm:$0xff] %v698
  %957 = vst [vmem:[%s2 + $0x180] sm:$0xff] %v703
  %958 = vst [vmem:[%s2 + $0x188] sm:$0xff] %v706
  %959 = vst [vmem:[%s2 + $0x190] sm:$0xff] %v711
  %960 = vst [vmem:[%s2 + $0x198] sm:$0xff] %v714
  %961 = vst [vmem:[%s2 + $0x1a0] sm:$0xff] %v719
  %962 = vst [vmem:[%s2 + $0x1a8] sm:$0xff] %v722
  %963 = vst [vmem:[%s2 + $0x1b0] sm:$0xff] %v727
  %964 = vst [vmem:[%s2 + $0x1b8] sm:$0xff] %v730
  %965 = vst [vmem:[%s2 + $0x1c0] sm:$0xff] %v735
  %966 = vst [vmem:[%s2 + $0x1c8] sm:$0xff] %v738
  %967 = vst [vmem:[%s2 + $0x1d0] sm:$0xff] %v743
  %968 = vst [vmem:[%s2 + $0x1d8] sm:$0xff] %v746
  %969 = vst [vmem:[%s2 + $0x1e0] sm:$0xff] %v751
  %970 = vst [vmem:[%s2 + $0x1e8] sm:$0xff] %v754
  %971 = vst [vmem:[%s2 + $0x1f0] sm:$0xff] %v759
  %972 = vst [vmem:[%s2 + $0x1f8] sm:$0xff] %v762
  %973 = vst [vmem:[%s2 + $0x200] sm:$0xff] %v767
  %974 = vst [vmem:[%s2 + $0x208] sm:$0xff] %v770
  %975 = vst [vmem:[%s2 + $0x210] sm:$0xff] %v775
  %976 = vst [vmem:[%s2 + $0x218] sm:$0xff] %v778
  %977 = vst [vmem:[%s2 + $0x220] sm:$0xff] %v783
  %978 = vst [vmem:[%s2 + $0x228] sm:$0xff] %v786
  %979 = vst [vmem:[%s2 + $0x230] sm:$0xff] %v791
  %980 = vst [vmem:[%s2 + $0x238] sm:$0xff] %v794
  %981 = vst [vmem:[%s2 + $0x240] sm:$0xff] %v799
  %982 = vst [vmem:[%s2 + $0x248] sm:$0xff] %v802
  %983 = vst [vmem:[%s2 + $0x250] sm:$0xff] %v807
  %984 = vst [vmem:[%s2 + $0x258] sm:$0xff] %v810
  %985 = vst [vmem:[%s2 + $0x260] sm:$0xff] %v815
  %986 = vst [vmem:[%s2 + $0x268] sm:$0xff] %v818
  %987 = vst [vmem:[%s2 + $0x270] sm:$0xff] %v823
  %988 = vst [vmem:[%s2 + $0x278] sm:$0xff] %v826
  %989 = vst [vmem:[%s2 + $0x280] sm:$0xff] %v831
  %990 = vst [vmem:[%s2 + $0x288] sm:$0xff] %v834
  %991 = vst [vmem:[%s2 + $0x290] sm:$0xff] %v839
  %992 = vst [vmem:[%s2 + $0x298] sm:$0xff] %v842
  %993 = vst [vmem:[%s2 + $0x2a0] sm:$0xff] %v847
  %994 = vst [vmem:[%s2 + $0x2a8] sm:$0xff] %v850
  %995 = vst [vmem:[%s2 + $0x2b0] sm:$0xff] %v855
  %996 = vst [vmem:[%s2 + $0x2b8] sm:$0xff] %v858
  %997 = vst [vmem:[%s2 + $0x2c0] sm:$0xff] %v863
  %998 = vst [vmem:[%s2 + $0x2c8] sm:$0xff] %v866
  %999 = vst [vmem:[%s2 + $0x2d0] sm:$0xff] %v871
  %1000 = vst [vmem:[%s2 + $0x2d8] sm:$0xff] %v874
  %1001 = vst [vmem:[%s2 + $0x2e0] sm:$0xff] %v879
  %1002 = vst [vmem:[%s2 + $0x2e8] sm:$0xff] %v882
  %1003 = vst [vmem:[%s2 + $0x2f0] sm:$0xff] %v887
  %1004 = vst [vmem:[%s2 + $0x2f8] sm:$0xff] %v890
  %1005 = vst [vmem:[%s2 + $0x300] sm:$0xff] %v895
  %1006 = vst [vmem:[%s2 + $0x308] sm:$0xff] %v898
  %1007 = vst [vmem:[%s2 + $0x310] sm:$0xff] %v903
  %1008 = vst [vmem:[%s2 + $0x318] sm:$0xff] %v906
  // Predicated region
  $region10: #{tcn_gcn_unit_forward.2} parent=0 // pred_check
    _
  $region11: #{tcn_gcn_unit_forward.2} parent=0 // pred_check_branch
    %1010 = sbr.rel (0) target = $region13
  $region12: #{tcn_gcn_unit_forward.2} parent=0 // pred_region
    _
  $region13: #{tcn_gcn_unit_forward.2} parent=0 // pred_fallthru
    _
  // Predicated region
  $region14: #{tcn_gcn_unit_forward.2} parent=0 // pred_check
    _
  $region15: #{tcn_gcn_unit_forward.2} parent=0 // pred_check_branch
    %1012 = sbr.rel (0) target = $region17
  $region16: #{tcn_gcn_unit_forward.2} parent=0 // pred_region
    _
  $region17: #{tcn_gcn_unit_forward.2} parent=0 // pred_fallthru
    _

// kernel: tcn_gcn_unit_forward.3
$region0: #{tcn_gcn_unit_forward.3}
  #allocation0 [shape = 'u32[]', space=smem, size = 0x4, offset = 0x4, fixed_abs, tag = 'smem constant byte address 0x4 - core index']
  #allocation1 [shape = 'u32[144,128]{1,0:T(1,128)}', space=vmem, size = 0x12000, scoped, tag = 'internal scratch']
  %s0 = inlined_call_operand.vmem [shape: f32[800,128], index: 0, kind: input, shape index: {}]
  %s1 = inlined_call_operand.vmem [shape: bf16[800,128], index: 1, kind: input, shape index: {}]
  %s2 = inlined_call_operand.vmem [shape: bf16[128,256], index: 2, kind: input, shape index: {}]
  %s3 = inlined_call_operand.vmem [shape: bf16[128,128], index: 3, kind: input, shape index: {}]
  %s4 = inlined_call_operand.vmem [shape: f32[8,256], index: 4, kind: input, shape index: {}]
  %s5 = inlined_call_operand.vmem [shape: f32[800,128], index: 5, kind: output, shape index: {}]
  %s6 = sld [smem:[#allocation0]]
  $region30: #{tcn_gcn_unit_forward.3} parent=0
    _
  %s8 = ssub.s32 1, %s6
  %s9 = scalar_select 0, %s8, %s6
  // Predicated region
  $region2: #{tcn_gcn_unit_forward.3} parent=0 // pred_check
    _
  $region3: #{tcn_gcn_unit_forward.3} parent=0 // pred_check_branch
    %11 = sbr.rel (0) target = $region5
  $region4: #{tcn_gcn_unit_forward.3} parent=0 // pred_region
    _
  $region5: #{tcn_gcn_unit_forward.3} parent=0 // pred_fallthru
    _
  // Predicated region
  $region6: #{tcn_gcn_unit_forward.3} parent=0 // pred_check
    _
  $region7: #{tcn_gcn_unit_forward.3} parent=0 // pred_check_branch
    %13 = sbr.rel (0) target = $region9
  $region8: #{tcn_gcn_unit_forward.3} parent=0 // pred_region
    _
  $region9: #{tcn_gcn_unit_forward.3} parent=0 // pred_fallthru
    _
  // Predicated region
  $region10: #{tcn_gcn_unit_forward.3} parent=0 // pred_check
    _
  $region11: #{tcn_gcn_unit_forward.3} parent=0 // pred_check_branch
    %15 = sbr.rel (0) target = $region13
  $region12: #{tcn_gcn_unit_forward.3} parent=0 // pred_region
    _
  $region13: #{tcn_gcn_unit_forward.3} parent=0 // pred_fallthru
    _
  // Predicated region
  $region14: #{tcn_gcn_unit_forward.3} parent=0 // pred_check
    _
  $region15: #{tcn_gcn_unit_forward.3} parent=0 // pred_check_branch
    %17 = sbr.rel (0) target = $region17
  $region16: #{tcn_gcn_unit_forward.3} parent=0 // pred_region
    _
  $region17: #{tcn_gcn_unit_forward.3} parent=0 // pred_fallthru
    _
  // Predicated region
  $region18: #{tcn_gcn_unit_forward.3} parent=0 // pred_check
    _
  $region19: #{tcn_gcn_unit_forward.3} parent=0 // pred_check_branch
    %19 = sbr.rel (0) target = $region21
  $region20: #{tcn_gcn_unit_forward.3} parent=0 // pred_region
    _
  $region21: #{tcn_gcn_unit_forward.3} parent=0 // pred_fallthru
    _
  %v21 = vld [vmem:[%s1] sm:$0xf]
  %v22 = vld [vmem:[%s1 + $0x4] sm:$0xf]
  %v23 = vld [vmem:[%s1 + $0x8] sm:$0xf]
  %v24 = vld [vmem:[%s1 + $0xc] sm:$0xf]
  %v25 = vld [vmem:[%s1 + $0x10] sm:$0xf]
  %v26 = vld [vmem:[%s1 + $0x14] sm:$0xf]
  %v27 = vld [vmem:[%s1 + $0x18] sm:$0xf]
  %v28 = vld [vmem:[%s1 + $0x1c] sm:$0xf]
  %v29 = vld [vmem:[%s1 + $0x20] sm:$0xf]
  %v30 = vld [vmem:[%s1 + $0x24] sm:$0xf]
  %v31 = vld [vmem:[%s1 + $0x28] sm:$0xf]
  %v32 = vld [vmem:[%s1 + $0x2c] sm:$0xf]
  %v33 = vld [vmem:[%s1 + $0x30] sm:$0xf]
  %v34 = vld [vmem:[%s1 + $0x34] sm:$0xf]
  %v35 = vld [vmem:[%s1 + $0x38] sm:$0xf]
  %v36 = vld [vmem:[%s1 + $0x3c] sm:$0xf]
  %v37 = vld [vmem:[%s1 + $0x40] sm:$0xf]
  %v38 = vld [vmem:[%s1 + $0x44] sm:$0xf]
  %v39 = vld [vmem:[%s1 + $0x48] sm:$0xf]
  %v40 = vld [vmem:[%s1 + $0x4c] sm:$0xf]
  %v41 = vld [vmem:[%s1 + $0x50] sm:$0xf]
  %v42 = vld [vmem:[%s1 + $0x54] sm:$0xf]
  %v43 = vld [vmem:[%s1 + $0x58] sm:$0xf]
  %v44 = vld [vmem:[%s1 + $0x5c] sm:$0xf]
  %v45 = vld [vmem:[%s1 + $0x60] sm:$0xf]
  %v46 = vld [vmem:[%s1 + $0x64] sm:$0xf]
  %v47 = vld [vmem:[%s1 + $0x68] sm:$0xf]
  %v48 = vld [vmem:[%s1 + $0x6c] sm:$0xf]
  %v49 = vld [vmem:[%s1 + $0x70] sm:$0xf]
  %v50 = vld [vmem:[%s1 + $0x74] sm:$0xf]
  %v51 = vld [vmem:[%s1 + $0x78] sm:$0xf]
  %v52 = vld [vmem:[%s1 + $0x7c] sm:$0xf]
  %v53 = vld [vmem:[%s1 + $0x80] sm:$0xf]
  %v54 = vld [vmem:[%s1 + $0x84] sm:$0xf]
  %v55 = vld [vmem:[%s1 + $0x88] sm:$0xf]
  %v56 = vld [vmem:[%s1 + $0x8c] sm:$0xf]
  %v57 = vld [vmem:[%s1 + $0x90] sm:$0xf]
  %v58 = vld [vmem:[%s1 + $0x94] sm:$0xf]
  %v59 = vld [vmem:[%s1 + $0x98] sm:$0xf]
  %v60 = vld [vmem:[%s1 + $0x9c] sm:$0xf]
  %v61 = vld [vmem:[%s1 + $0xa0] sm:$0xf]
  %v62 = vld [vmem:[%s1 + $0xa4] sm:$0xf]
  %v63 = vld [vmem:[%s1 + $0xa8] sm:$0xf]
  %v64 = vld [vmem:[%s1 + $0xac] sm:$0xf]
  %v65 = vld [vmem:[%s1 + $0xb0] sm:$0xf]
  %v66 = vld [vmem:[%s1 + $0xb4] sm:$0xf]
  %v67 = vld [vmem:[%s1 + $0xb8] sm:$0xf]
  %v68 = vld [vmem:[%s1 + $0xbc] sm:$0xf]
  %v69 = vld [vmem:[%s1 + $0xc0] sm:$0xf]
  %v70 = vld [vmem:[%s1 + $0xc4] sm:$0xf]
  %v71 = vld [vmem:[%s1 + $0xc8] sm:$0xf]
  %v72 = vld [vmem:[%s1 + $0xcc] sm:$0xf]
  %v73 = vld [vmem:[%s1 + $0xd0] sm:$0xf]
  %v74 = vld [vmem:[%s1 + $0xd4] sm:$0xf]
  %v75 = vld [vmem:[%s1 + $0xd8] sm:$0xf]
  %v76 = vld [vmem:[%s1 + $0xdc] sm:$0xf]
  %v77 = vld [vmem:[%s1 + $0xe0] sm:$0xf]
  %v78 = vld [vmem:[%s1 + $0xe4] sm:$0xf]
  %v79 = vld [vmem:[%s1 + $0xe8] sm:$0xf]
  %v80 = vld [vmem:[%s1 + $0xec] sm:$0xf]
  %v81 = vld [vmem:[%s1 + $0xf0] sm:$0xf]
  %v82 = vld [vmem:[%s1 + $0xf4] sm:$0xf]
  %v83 = vld [vmem:[%s1 + $0xf8] sm:$0xf]
  %v84 = vld [vmem:[%s1 + $0xfc] sm:$0xf]
  %v85 = vld [vmem:[%s1 + $0x100] sm:$0xf]
  %v86 = vld [vmem:[%s1 + $0x104] sm:$0xf]
  %v87 = vld [vmem:[%s1 + $0x108] sm:$0xf]
  %v88 = vld [vmem:[%s1 + $0x10c] sm:$0xf]
  %v89 = vld [vmem:[%s1 + $0x110] sm:$0xf]
  %v90 = vld [vmem:[%s1 + $0x114] sm:$0xf]
  %v91 = vld [vmem:[%s1 + $0x118] sm:$0xf]
  %v92 = vld [vmem:[%s1 + $0x11c] sm:$0xf]
  %v93 = vld [vmem:[%s1 + $0x120] sm:$0xf]
  %v94 = vld [vmem:[%s1 + $0x124] sm:$0xf]
  %v95 = vld [vmem:[%s1 + $0x128] sm:$0xf]
  %v96 = vld [vmem:[%s1 + $0x12c] sm:$0xf]
  %v97 = vld [vmem:[%s1 + $0x130] sm:$0xf]
  %v98 = vld [vmem:[%s1 + $0x134] sm:$0xf]
  %v99 = vld [vmem:[%s1 + $0x138] sm:$0xf]
  %v100 = vld [vmem:[%s1 + $0x13c] sm:$0xf]
  %v101 = vld [vmem:[%s1 + $0x140] sm:$0xf]
  %v102 = vld [vmem:[%s1 + $0x144] sm:$0xf]
  %v103 = vld [vmem:[%s1 + $0x148] sm:$0xf]
  %v104 = vld [vmem:[%s1 + $0x14c] sm:$0xf]
  %v105 = vld [vmem:[%s1 + $0x150] sm:$0xf]
  %v106 = vld [vmem:[%s1 + $0x154] sm:$0xf]
  %v107 = vld [vmem:[%s1 + $0x158] sm:$0xf]
  %v108 = vld [vmem:[%s1 + $0x15c] sm:$0xf]
  %v109 = vld [vmem:[%s1 + $0x160] sm:$0xf]
  %v110 = vld [vmem:[%s1 + $0x164] sm:$0xf]
  %v111 = vld [vmem:[%s1 + $0x168] sm:$0xf]
  %v112 = vld [vmem:[%s1 + $0x16c] sm:$0xf]
  %v113 = vld [vmem:[%s1 + $0x170] sm:$0xf]
  %v114 = vld [vmem:[%s1 + $0x174] sm:$0xf]
  %v115 = vld [vmem:[%s1 + $0x178] sm:$0xf]
  %v116 = vld [vmem:[%s1 + $0x17c] sm:$0xf]
  %v117 = vld [vmem:[%s1 + $0x180] sm:$0xf]
  %v118 = vld [vmem:[%s1 + $0x184] sm:$0xf]
  %v119 = vld [vmem:[%s1 + $0x188] sm:$0xf]
  %v120 = vld [vmem:[%s1 + $0x18c] sm:$0xf]
  %v121 = vld [vmem:[%s2] sm:$0xff]
  %v122 = vld [vmem:[%s2 + $0x8] sm:$0xff]
  %v123 = vld [vmem:[%s2 + $0x10] sm:$0xff]
  %v124 = vld [vmem:[%s2 + $0x18] sm:$0xff]
  %v125 = vld [vmem:[%s2 + $0x20] sm:$0xff]
  %v126 = vld [vmem:[%s2 + $0x28] sm:$0xff]
  %v127 = vld [vmem:[%s2 + $0x30] sm:$0xff]
  %v128 = vld [vmem:[%s2 + $0x38] sm:$0xff]
  %v129 = vld [vmem:[%s2 + $0x40] sm:$0xff]
  %v130 = vld [vmem:[%s2 + $0x48] sm:$0xff]
  %v131 = vld [vmem:[%s2 + $0x50] sm:$0xff]
  %v132 = vld [vmem:[%s2 + $0x58] sm:$0xff]
  %v133 = vld [vmem:[%s2 + $0x60] sm:$0xff]
  %v134 = vld [vmem:[%s2 + $0x68] sm:$0xff]
  %v135 = vld [vmem:[%s2 + $0x70] sm:$0xff]
  %v136 = vld [vmem:[%s2 + $0x78] sm:$0xff]
  %v137 = vld [vmem:[%s4] ss:$8 sm:$0x3]
  %v139 = vlaneseq
  %v140 = vshrl.u32 %v139, 7
  %v141 = vsub.s32 0, %v140
  %v142 = vrot.slane %v137, %v141
  %v143 = vlaneseq
  %v144 = vshrl.u32 %v143, 7
  %v145 = vsub.s32 1, %v144
  %v146 = vrot.slane %v137, %v145
  %v249 = vunpack.c.l.b16 %v21
  %v250 = vunpack.c.l.b16 %v22
  %v251 = vunpack.c.l.b16 %v23
  %v252 = vunpack.c.l.b16 %v24
  %v253 = vunpack.c.l.b16 %v25
  %v254 = vunpack.c.l.b16 %v26
  %v255 = vunpack.c.l.b16 %v27
  %v256 = vunpack.c.l.b16 %v28
  %v257 = vunpack.c.l.b16 %v29
  %v258 = vunpack.c.l.b16 %v30
  %v259 = vunpack.c.l.b16 %v31
  %v260 = vunpack.c.l.b16 %v32
  %v261 = vunpack.c.l.b16 %v33
  %v262 = vunpack.c.l.b16 %v34
  %v263 = vunpack.c.l.b16 %v35
  %v264 = vunpack.c.l.b16 %v36
  %v265 = vunpack.c.l.b16 %v37
  %v266 = vunpack.c.l.b16 %v38
  %v267 = vunpack.c.l.b16 %v39
  %v268 = vunpack.c.l.b16 %v40
  %v269 = vunpack.c.l.b16 %v41
  %v270 = vunpack.c.l.b16 %v42
  %v271 = vunpack.c.l.b16 %v43
  %v272 = vunpack.c.l.b16 %v44
  %v273 = vunpack.c.l.b16 %v45
  %v274 = vunpack.c.l.b16 %v46
  %v275 = vunpack.c.l.b16 %v47
  %v276 = vunpack.c.l.b16 %v48
  %v277 = vunpack.c.l.b16 %v49
  %v278 = vunpack.c.l.b16 %v50
  %v279 = vunpack.c.l.b16 %v51
  %v280 = vunpack.c.l.b16 %v52
  %v281 = vunpack.c.l.b16 %v53
  %v282 = vunpack.c.l.b16 %v54
  %v283 = vunpack.c.l.b16 %v55
  %v284 = vunpack.c.l.b16 %v56
  %v285 = vunpack.c.l.b16 %v57
  %v286 = vunpack.c.l.b16 %v58
  %v287 = vunpack.c.l.b16 %v59
  %v288 = vunpack.c.l.b16 %v60
  %v289 = vunpack.c.l.b16 %v61
  %v290 = vunpack.c.l.b16 %v62
  %v291 = vunpack.c.l.b16 %v63
  %v292 = vunpack.c.l.b16 %v64
  %v293 = vunpack.c.l.b16 %v65
  %v294 = vunpack.c.l.b16 %v66
  %v295 = vunpack.c.l.b16 %v67
  %v296 = vunpack.c.l.b16 %v68
  %v297 = vunpack.c.l.b16 %v69
  %v298 = vunpack.c.l.b16 %v70
  %v299 = vunpack.c.l.b16 %v71
  %v300 = vunpack.c.l.b16 %v72
  %v301 = vunpack.c.l.b16 %v73
  %v302 = vunpack.c.l.b16 %v74
  %v303 = vunpack.c.l.b16 %v75
  %v304 = vunpack.c.l.b16 %v76
  %v305 = vunpack.c.l.b16 %v77
  %v306 = vunpack.c.l.b16 %v78
  %v307 = vunpack.c.l.b16 %v79
  %v308 = vunpack.c.l.b16 %v80
  %v309 = vunpack.c.l.b16 %v81
  %v310 = vunpack.c.l.b16 %v82
  %v311 = vunpack.c.l.b16 %v83
  %v312 = vunpack.c.l.b16 %v84
  %v313 = vunpack.c.l.b16 %v85
  %v314 = vunpack.c.l.b16 %v86
  %v315 = vunpack.c.l.b16 %v87
  %v316 = vunpack.c.l.b16 %v88
  %v317 = vunpack.c.l.b16 %v89
  %v318 = vunpack.c.l.b16 %v90
  %v319 = vunpack.c.l.b16 %v91
  %v320 = vunpack.c.l.b16 %v92
  %v321 = vunpack.c.l.b16 %v93
  %v322 = vunpack.c.l.b16 %v94
  %v323 = vunpack.c.l.b16 %v95
  %v324 = vunpack.c.l.b16 %v96
  %v325 = vunpack.c.l.b16 %v97
  %v326 = vunpack.c.l.b16 %v98
  %v327 = vunpack.c.l.b16 %v99
  %v328 = vunpack.c.l.b16 %v100
  %v329 = vunpack.c.l.b16 %v101
  %v330 = vunpack.c.l.b16 %v102
  %v331 = vunpack.c.l.b16 %v103
  %v332 = vunpack.c.l.b16 %v104
  %v333 = vunpack.c.l.b16 %v105
  %v334 = vunpack.c.l.b16 %v106
  %v335 = vunpack.c.l.b16 %v107
  %v336 = vunpack.c.l.b16 %v108
  %v337 = vunpack.c.l.b16 %v109
  %v338 = vunpack.c.l.b16 %v110
  %v339 = vunpack.c.l.b16 %v111
  %v340 = vunpack.c.l.b16 %v112
  %v341 = vunpack.c.l.b16 %v113
  %v342 = vunpack.c.l.b16 %v114
  %v343 = vunpack.c.l.b16 %v115
  %v344 = vunpack.c.l.b16 %v116
  %v345 = vunpack.c.l.b16 %v117
  %v346 = vunpack.c.l.b16 %v118
  %v347 = vunpack.c.l.b16 %v119
  %v348 = vunpack.c.l.b16 %v120
  %v349 = vpack.c.b16 %v250, %v249
  %v350 = vpack.c.b16 %v252, %v251
  %v351 = vpack.c.b16 %v254, %v253
  %v352 = vpack.c.b16 %v256, %v255
  %v353 = vpack.c.b16 %v258, %v257
  %v354 = vpack.c.b16 %v260, %v259
  %v355 = vpack.c.b16 %v262, %v261
  %v356 = vpack.c.b16 %v264, %v263
  %v357 = vpack.c.b16 %v266, %v265
  %v358 = vpack.c.b16 %v268, %v267
  %v359 = vpack.c.b16 %v270, %v269
  %v360 = vpack.c.b16 %v272, %v271
  %v361 = vpack.c.b16 %v274, %v273
  %v362 = vpack.c.b16 %v276, %v275
  %v363 = vpack.c.b16 %v278, %v277
  %v364 = vpack.c.b16 %v280, %v279
  %v365 = vpack.c.b16 %v282, %v281
  %v366 = vpack.c.b16 %v284, %v283
  %v367 = vpack.c.b16 %v286, %v285
  %v368 = vpack.c.b16 %v288, %v287
  %v369 = vpack.c.b16 %v290, %v289
  %v370 = vpack.c.b16 %v292, %v291
  %v371 = vpack.c.b16 %v294, %v293
  %v372 = vpack.c.b16 %v296, %v295
  %v373 = vpack.c.b16 %v298, %v297
  %v374 = vpack.c.b16 %v300, %v299
  %v375 = vpack.c.b16 %v302, %v301
  %v376 = vpack.c.b16 %v304, %v303
  %v377 = vpack.c.b16 %v306, %v305
  %v378 = vpack.c.b16 %v308, %v307
  %v379 = vpack.c.b16 %v310, %v309
  %v380 = vpack.c.b16 %v312, %v311
  %v381 = vpack.c.b16 %v314, %v313
  %v382 = vpack.c.b16 %v316, %v315
  %v383 = vpack.c.b16 %v318, %v317
  %v384 = vpack.c.b16 %v320, %v319
  %v385 = vpack.c.b16 %v322, %v321
  %v386 = vpack.c.b16 %v324, %v323
  %v387 = vpack.c.b16 %v326, %v325
  %v388 = vpack.c.b16 %v328, %v327
  %v389 = vpack.c.b16 %v330, %v329
  %v390 = vpack.c.b16 %v332, %v331
  %v391 = vpack.c.b16 %v334, %v333
  %v392 = vpack.c.b16 %v336, %v335
  %v393 = vpack.c.b16 %v338, %v337
  %v394 = vpack.c.b16 %v340, %v339
  %v395 = vpack.c.b16 %v342, %v341
  %v396 = vpack.c.b16 %v344, %v343
  %v397 = vpack.c.b16 %v346, %v345
  %v398 = vpack.c.b16 %v348, %v347
  %v465 = vunpack.c.l.b16 %v121
  %v466 = vunpack.c.h.b16 %v121
  %v467 = vunpack.c.l.b16 %v122
  %v468 = vunpack.c.h.b16 %v122
  %v469 = vunpack.c.l.b16 %v123
  %v470 = vunpack.c.h.b16 %v123
  %v471 = vunpack.c.l.b16 %v124
  %v472 = vunpack.c.h.b16 %v124
  %v473 = vunpack.c.l.b16 %v125
  %v474 = vunpack.c.h.b16 %v125
  %v475 = vunpack.c.l.b16 %v126
  %v476 = vunpack.c.h.b16 %v126
  %v477 = vunpack.c.l.b16 %v127
  %v478 = vunpack.c.h.b16 %v127
  %v479 = vunpack.c.l.b16 %v128
  %v480 = vunpack.c.h.b16 %v128
  %v481 = vunpack.c.l.b16 %v129
  %v482 = vunpack.c.h.b16 %v129
  %v483 = vunpack.c.l.b16 %v130
  %v484 = vunpack.c.h.b16 %v130
  %v485 = vunpack.c.l.b16 %v131
  %v486 = vunpack.c.h.b16 %v131
  %v487 = vunpack.c.l.b16 %v132
  %v488 = vunpack.c.h.b16 %v132
  %v489 = vunpack.c.l.b16 %v133
  %v490 = vunpack.c.h.b16 %v133
  %v491 = vunpack.c.l.b16 %v134
  %v492 = vunpack.c.h.b16 %v134
  %v493 = vunpack.c.l.b16 %v135
  %v494 = vunpack.c.h.b16 %v135
  %v495 = vunpack.c.l.b16 %v136
  %v496 = vunpack.c.h.b16 %v136
  %v497 = vpack.c.b16 %v467, %v465
  %v498 = vpack.c.b16 %v468, %v466
  %v499 = vpack.c.b16 %v471, %v469
  %v500 = vpack.c.b16 %v472, %v470
  %v501 = vpack.c.b16 %v475, %v473
  %v502 = vpack.c.b16 %v476, %v474
  %v503 = vpack.c.b16 %v479, %v477
  %v504 = vpack.c.b16 %v480, %v478
  %v505 = vpack.c.b16 %v483, %v481
  %v506 = vpack.c.b16 %v484, %v482
  %v507 = vpack.c.b16 %v487, %v485
  %v508 = vpack.c.b16 %v488, %v486
  %v509 = vpack.c.b16 %v491, %v489
  %v510 = vpack.c.b16 %v492, %v490
  %v511 = vpack.c.b16 %v495, %v493
  %v512 = vpack.c.b16 %v496, %v494
  %529 = vmatprep.subr.bf16.mxu0 %v498
  %530 = vmatpush1.bf16.msra.mxu0 %v497
  %531 = vmatprep.subr.bf16.mxu0 %v500
  %532 = vmatpush1.bf16.msra.mxu0 %v499
  %533 = vmatprep.subr.bf16.mxu0 %v502
  %534 = vmatpush1.bf16.msra.mxu0 %v501
  %535 = vmatprep.subr.bf16.mxu0 %v504
  %536 = vmatpush1.bf16.msra.mxu0 %v503
  %537 = vmatprep.subr.bf16.mxu0 %v506
  %538 = vmatpush1.bf16.msra.mxu0 %v505
  %539 = vmatprep.subr.bf16.mxu0 %v508
  %540 = vmatpush1.bf16.msra.mxu0 %v507
  %541 = vmatprep.subr.bf16.mxu0 %v510
  %542 = vmatpush1.bf16.msra.mxu0 %v509
  %543 = vmatprep.subr.bf16.mxu0 %v512
  %544 = vmatpush1.bf16.msra.mxu0 %v511
  %545 = vmatprep.subr.bf16.mxu0 0
  %546 = vmatpush1.bf16.msra.mxu0 0
  %547 = vmatprep.subr.bf16.mxu0 0
  %548 = vmatpush1.bf16.msra.mxu0 0
  %549 = vmatprep.subr.bf16.mxu0 0
  %550 = vmatpush1.bf16.msra.mxu0 0
  %551 = vmatprep.subr.bf16.mxu0 0
  %552 = vmatpush1.bf16.msra.mxu0 0
  %553 = vmatprep.subr.bf16.mxu0 0
  %554 = vmatpush1.bf16.msra.mxu0 0
  %555 = vmatprep.subr.bf16.mxu0 0
  %556 = vmatpush1.bf16.msra.mxu0 0
  %557 = vmatprep.subr.bf16.mxu0 0
  %558 = vmatpush1.bf16.msra.mxu0 0
  %559 = vmatprep.subr.bf16.mxu0 0
  %560 = vmatpush1.bf16.msra.mxu0 0
  %561 = vmatprep.mubr.bf16.mxu0 0
  %562 = vmatmul.mubr.bf16.gmra.mrb[0].mxu0 %v349
  %v563 = vpop.f32.mrb[0].mxu0
  %v564 = vadd.f32 %v142, %v563
  %v565 = vpop.f32.mrb[0].mxu0
  %v566 = vadd.f32 %v146, %v565
  %v567 = vpop.f32.mrb[0].mxu0
  %v568 = vadd.f32 %v142, %v567
  %v569 = vpop.f32.mrb[0].mxu0
  %v570 = vadd.f32 %v146, %v569
  %571 = vmatprep.mubr.bf16.mxu0 0
  %572 = vmatmul.mubr.bf16.gmra.mrb[0].mxu0 %v350
  %v573 = vpop.f32.mrb[0].mxu0
  %v574 = vadd.f32 %v142, %v573
  %v575 = vpop.f32.mrb[0].mxu0
  %v576 = vadd.f32 %v146, %v575
  %v577 = vpop.f32.mrb[0].mxu0
  %v578 = vadd.f32 %v142, %v577
  %v579 = vpop.f32.mrb[0].mxu0
  %v580 = vadd.f32 %v146, %v579
  %581 = vmatprep.mubr.bf16.mxu0 0
  %582 = vmatmul.mubr.bf16.gmra.mrb[0].mxu0 %v351
  %v583 = vpop.f32.mrb[0].mxu0
  %v584 = vadd.f32 %v142, %v583
  %v585 = vpop.f32.mrb[0].mxu0
  %v586 = vadd.f32 %v146, %v585
  %v587 = vpop.f32.mrb[0].mxu0
  %v588 = vadd.f32 %v142, %v587
  %v589 = vpop.f32.mrb[0].mxu0
  %v590 = vadd.f32 %v146, %v589
  %591 = vmatprep.mubr.bf16.mxu0 0
  %592 = vmatmul.mubr.bf16.gmra.mrb[0].mxu0 %v352
  %v593 = vpop.f32.mrb[0].mxu0
  %v594 = vadd.f32 %v142, %v593
  %v595 = vpop.f32.mrb[0].mxu0
  %v596 = vadd.f32 %v146, %v595
  %v597 = vpop.f32.mrb[0].mxu0
  %v598 = vadd.f32 %v142, %v597
  %v599 = vpop.f32.mrb[0].mxu0
  %v600 = vadd.f32 %v146, %v599
  %601 = vmatprep.mubr.bf16.mxu0 0
  %602 = vmatmul.mubr.bf16.gmra.mrb[0].mxu0 %v353
  %v603 = vpop.f32.mrb[0].mxu0
  %v604 = vadd.f32 %v142, %v603
  %v605 = vpop.f32.mrb[0].mxu0
  %v606 = vadd.f32 %v146, %v605
  %v607 = vpop.f32.mrb[0].mxu0
  %v608 = vadd.f32 %v142, %v607
  %v609 = vpop.f32.mrb[0].mxu0
  %v610 = vadd.f32 %v146, %v609
  %611 = vmatprep.mubr.bf16.mxu0 0
  %612 = vmatmul.mubr.bf16.gmra.mrb[0].mxu0 %v354
  %v613 = vpop.f32.mrb[0].mxu0
  %v614 = vadd.f32 %v142, %v613
  %v615 = vpop.f32.mrb[0].mxu0
  %v616 = vadd.f32 %v146, %v615
  %v617 = vpop.f32.mrb[0].mxu0
  %v618 = vadd.f32 %v142, %v617
  %v619 = vpop.f32.mrb[0].mxu0
  %v620 = vadd.f32 %v146, %v619
  %621 = vmatprep.mubr.bf16.mxu0 0
  %622 = vmatmul.mubr.bf16.gmra.mrb[0].mxu0 %v355
  %v623 = vpop.f32.mrb[0].mxu0
  %v624 = vadd.f32 %v142, %v623
  %v625 = vpop.f32.mrb[0].mxu0
  %v626 = vadd.f32 %v146, %v625
  %v627 = vpop.f32.mrb[0].mxu0
  %v628 = vadd.f32 %v142, %v627
  %v629 = vpop.f32.mrb[0].mxu0
  %v630 = vadd.f32 %v146, %v629
  %631 = vmatprep.mubr.bf16.mxu0 0
  %632 = vmatmul.mubr.bf16.gmra.mrb[0].mxu0 %v356
  %v633 = vpop.f32.mrb[0].mxu0
  %v634 = vadd.f32 %v142, %v633
  %v635 = vpop.f32.mrb[0].mxu0
  %v636 = vadd.f32 %v146, %v635
  %v637 = vpop.f32.mrb[0].mxu0
  %v638 = vadd.f32 %v142, %v637
  %v639 = vpop.f32.mrb[0].mxu0
  %v640 = vadd.f32 %v146, %v639
  %641 = vmatprep.mubr.bf16.mxu0 0
  %642 = vmatmul.mubr.bf16.gmra.mrb[0].mxu0 %v357
  %v643 = vpop.f32.mrb[0].mxu0
  %v644 = vadd.f32 %v142, %v643
  %v645 = vpop.f32.mrb[0].mxu0
  %v646 = vadd.f32 %v146, %v645
  %v647 = vpop.f32.mrb[0].mxu0
  %v648 = vadd.f32 %v142, %v647
  %v649 = vpop.f32.mrb[0].mxu0
  %v650 = vadd.f32 %v146, %v649
  %651 = vmatprep.mubr.bf16.mxu0 0
  %652 = vmatmul.mubr.bf16.gmra.mrb[0].mxu0 %v358
  %v653 = vpop.f32.mrb[0].mxu0
  %v654 = vadd.f32 %v142, %v653
  %v655 = vpop.f32.mrb[0].mxu0
  %v656 = vadd.f32 %v146, %v655
  %v657 = vpop.f32.mrb[0].mxu0
  %v658 = vadd.f32 %v142, %v657
  %v659 = vpop.f32.mrb[0].mxu0
  %v660 = vadd.f32 %v146, %v659
  %661 = vmatprep.mubr.bf16.mxu0 0
  %662 = vmatmul.mubr.bf16.gmra.mrb[0].mxu0 %v359
  %v663 = vpop.f32.mrb[0].mxu0
  %v664 = vadd.f32 %v142, %v663
  %v665 = vpop.f32.mrb[0].mxu0
  %v666 = vadd.f32 %v146, %v665
  %v667 = vpop.f32.mrb[0].mxu0
  %v668 = vadd.f32 %v142, %v667
  %v669 = vpop.f32.mrb[0].mxu0
  %v670 = vadd.f32 %v146, %v669
  %671 = vmatprep.mubr.bf16.mxu0 0
  %672 = vmatmul.mubr.bf16.gmra.mrb[0].mxu0 %v360
  %v673 = vpop.f32.mrb[0].mxu0
  %v674 = vadd.f32 %v142, %v673
  %v675 = vpop.f32.mrb[0].mxu0
  %v676 = vadd.f32 %v146, %v675
  %v677 = vpop.f32.mrb[0].mxu0
  %v678 = vadd.f32 %v142, %v677
  %v679 = vpop.f32.mrb[0].mxu0
  %v680 = vadd.f32 %v146, %v679
  %681 = vmatprep.mubr.bf16.mxu0 0
  %682 = vmatmul.mubr.bf16.gmra.mrb[0].mxu0 %v361
  %v683 = vpop.f32.mrb[0].mxu0
  %v684 = vadd.f32 %v142, %v683
  %v685 = vpop.f32.mrb[0].mxu0
  %v686 = vadd.f32 %v146, %v685
  %v687 = vpop.f32.mrb[0].mxu0
  %v688 = vadd.f32 %v142, %v687
  %v689 = vpop.f32.mrb[0].mxu0
  %v690 = vadd.f32 %v146, %v689
  %691 = vmatprep.mubr.bf16.mxu0 0
  %692 = vmatmul.mubr.bf16.gmra.mrb[0].mxu0 %v362
  %v693 = vpop.f32.mrb[0].mxu0
  %v694 = vadd.f32 %v142, %v693
  %v695 = vpop.f32.mrb[0].mxu0
  %v696 = vadd.f32 %v146, %v695
  %v697 = vpop.f32.mrb[0].mxu0
  %v698 = vadd.f32 %v142, %v697
  %v699 = vpop.f32.mrb[0].mxu0
  %v700 = vadd.f32 %v146, %v699
  %701 = vmatprep.mubr.bf16.mxu0 0
  %702 = vmatmul.mubr.bf16.gmra.mrb[0].mxu0 %v363
  %v703 = vpop.f32.mrb[0].mxu0
  %v704 = vadd.f32 %v142, %v703
  %v705 = vpop.f32.mrb[0].mxu0
  %v706 = vadd.f32 %v146, %v705
  %v707 = vpop.f32.mrb[0].mxu0
  %v708 = vadd.f32 %v142, %v707
  %v709 = vpop.f32.mrb[0].mxu0
  %v710 = vadd.f32 %v146, %v709
  %711 = vmatprep.mubr.bf16.mxu0 0
  %712 = vmatmul.mubr.bf16.gmra.mrb[0].mxu0 %v364
  %v713 = vpop.f32.mrb[0].mxu0
  %v714 = vadd.f32 %v142, %v713
  %v715 = vpop.f32.mrb[0].mxu0
  %v716 = vadd.f32 %v146, %v715
  %v717 = vpop.f32.mrb[0].mxu0
  %v718 = vadd.f32 %v142, %v717
  %v719 = vpop.f32.mrb[0].mxu0
  %v720 = vadd.f32 %v146, %v719
  %721 = vmatprep.mubr.bf16.mxu0 0
  %722 = vmatmul.mubr.bf16.gmra.mrb[0].mxu0 %v365
  %v723 = vpop.f32.mrb[0].mxu0
  %v724 = vadd.f32 %v142, %v723
  %v725 = vpop.f32.mrb[0].mxu0
  %v726 = vadd.f32 %v146, %v725
  %v727 = vpop.f32.mrb[0].mxu0
  %v728 = vadd.f32 %v142, %v727
  %v729 = vpop.f32.mrb[0].mxu0
  %v730 = vadd.f32 %v146, %v729
  %731 = vmatprep.mubr.bf16.mxu0 0
  %732 = vmatmul.mubr.bf16.gmra.mrb[0].mxu0 %v366
  %v733 = vpop.f32.mrb[0].mxu0
  %v734 = vadd.f32 %v142, %v733
  %v735 = vpop.f32.mrb[0].mxu0
  %v736 = vadd.f32 %v146, %v735
  %v737 = vpop.f32.mrb[0].mxu0
  %v738 = vadd.f32 %v142, %v737
  %v739 = vpop.f32.mrb[0].mxu0
  %v740 = vadd.f32 %v146, %v739
  %741 = vmatprep.mubr.bf16.mxu0 0
  %742 = vmatmul.mubr.bf16.gmra.mrb[0].mxu0 %v367
  %v743 = vpop.f32.mrb[0].mxu0
  %v744 = vadd.f32 %v142, %v743
  %v745 = vpop.f32.mrb[0].mxu0
  %v746 = vadd.f32 %v146, %v745
  %v747 = vpop.f32.mrb[0].mxu0
  %v748 = vadd.f32 %v142, %v747
  %v749 = vpop.f32.mrb[0].mxu0
  %v750 = vadd.f32 %v146, %v749
  %751 = vmatprep.mubr.bf16.mxu0 0
  %752 = vmatmul.mubr.bf16.gmra.mrb[0].mxu0 %v368
  %v753 = vpop.f32.mrb[0].mxu0
  %v754 = vadd.f32 %v142, %v753
  %v755 = vpop.f32.mrb[0].mxu0
  %v756 = vadd.f32 %v146, %v755
  %v757 = vpop.f32.mrb[0].mxu0
  %v758 = vadd.f32 %v142, %v757
  %v759 = vpop.f32.mrb[0].mxu0
  %v760 = vadd.f32 %v146, %v759
  %761 = vmatprep.mubr.bf16.mxu0 0
  %762 = vmatmul.mubr.bf16.gmra.mrb[0].mxu0 %v369
  %v763 = vpop.f32.mrb[0].mxu0
  %v764 = vadd.f32 %v142, %v763
  %v765 = vpop.f32.mrb[0].mxu0
  %v766 = vadd.f32 %v146, %v765
  %v767 = vpop.f32.mrb[0].mxu0
  %v768 = vadd.f32 %v142, %v767
  %v769 = vpop.f32.mrb[0].mxu0
  %v770 = vadd.f32 %v146, %v769
  %771 = vmatprep.mubr.bf16.mxu0 0
  %772 = vmatmul.mubr.bf16.gmra.mrb[0].mxu0 %v370
  %v773 = vpop.f32.mrb[0].mxu0
  %v774 = vadd.f32 %v142, %v773
  %v775 = vpop.f32.mrb[0].mxu0
  %v776 = vadd.f32 %v146, %v775
  %v777 = vpop.f32.mrb[0].mxu0
  %v778 = vadd.f32 %v142, %v777
  %v779 = vpop.f32.mrb[0].mxu0
  %v780 = vadd.f32 %v146, %v779
  %781 = vmatprep.mubr.bf16.mxu0 0
  %782 = vmatmul.mubr.bf16.gmra.mrb[0].mxu0 %v371
  %v783 = vpop.f32.mrb[0].mxu0
  %v784 = vadd.f32 %v142, %v783
  %v785 = vpop.f32.mrb[0].mxu0
  %v786 = vadd.f32 %v146, %v785
  %v787 = vpop.f32.mrb[0].mxu0
  %v788 = vadd.f32 %v142, %v787
  %v789 = vpop.f32.mrb[0].mxu0
  %v790 = vadd.f32 %v146, %v789
  %791 = vmatprep.mubr.bf16.mxu0 0
  %792 = vmatmul.mubr.bf16.gmra.mrb[0].mxu0 %v372
  %v793 = vpop.f32.mrb[0].mxu0
  %v794 = vadd.f32 %v142, %v793
  %v795 = vpop.f32.mrb[0].mxu0
  %v796 = vadd.f32 %v146, %v795
  %v797 = vpop.f32.mrb[0].mxu0
  %v798 = vadd.f32 %v142, %v797
  %v799 = vpop.f32.mrb[0].mxu0
  %v800 = vadd.f32 %v146, %v799
  %801 = vmatprep.mubr.bf16.mxu0 0
  %802 = vmatmul.mubr.bf16.gmra.mrb[0].mxu0 %v373
  %v803 = vpop.f32.mrb[0].mxu0
  %v804 = vadd.f32 %v142, %v803
  %v805 = vpop.f32.mrb[0].mxu0
  %v806 = vadd.f32 %v146, %v805
  %v807 = vpop.f32.mrb[0].mxu0
  %v808 = vadd.f32 %v142, %v807
  %v809 = vpop.f32.mrb[0].mxu0
  %v810 = vadd.f32 %v146, %v809
  %811 = vmatprep.mubr.bf16.mxu0 0
  %812 = vmatmul.mubr.bf16.gmra.mrb[0].mxu0 %v374
  %v813 = vpop.f32.mrb[0].mxu0
  %v814 = vadd.f32 %v142, %v813
  %v815 = vpop.f32.mrb[0].mxu0
  %v816 = vadd.f32 %v146, %v815
  %v817 = vpop.f32.mrb[0].mxu0
  %v818 = vadd.f32 %v142, %v817
  %v819 = vpop.f32.mrb[0].mxu0
  %v820 = vadd.f32 %v146, %v819
  %821 = vmatprep.mubr.bf16.mxu0 0
  %822 = vmatmul.mubr.bf16.gmra.mrb[0].mxu0 %v375
  %v823 = vpop.f32.mrb[0].mxu0
  %v824 = vadd.f32 %v142, %v823
  %v825 = vpop.f32.mrb[0].mxu0
  %v826 = vadd.f32 %v146, %v825
  %v827 = vpop.f32.mrb[0].mxu0
  %v828 = vadd.f32 %v142, %v827
  %v829 = vpop.f32.mrb[0].mxu0
  %v830 = vadd.f32 %v146, %v829
  %831 = vmatprep.mubr.bf16.mxu0 0
  %832 = vmatmul.mubr.bf16.gmra.mrb[0].mxu0 %v376
  %v833 = vpop.f32.mrb[0].mxu0
  %v834 = vadd.f32 %v142, %v833
  %v835 = vpop.f32.mrb[0].mxu0
  %v836 = vadd.f32 %v146, %v835
  %v837 = vpop.f32.mrb[0].mxu0
  %v838 = vadd.f32 %v142, %v837
  %v839 = vpop.f32.mrb[0].mxu0
  %v840 = vadd.f32 %v146, %v839
  %841 = vmatprep.mubr.bf16.mxu0 0
  %842 = vmatmul.mubr.bf16.gmra.mrb[0].mxu0 %v377
  %v843 = vpop.f32.mrb[0].mxu0
  %v844 = vadd.f32 %v142, %v843
  %v845 = vpop.f32.mrb[0].mxu0
  %v846 = vadd.f32 %v146, %v845
  %v847 = vpop.f32.mrb[0].mxu0
  %v848 = vadd.f32 %v142, %v847
  %v849 = vpop.f32.mrb[0].mxu0
  %v850 = vadd.f32 %v146, %v849
  %851 = vmatprep.mubr.bf16.mxu0 0
  %852 = vmatmul.mubr.bf16.gmra.mrb[0].mxu0 %v378
  %v853 = vpop.f32.mrb[0].mxu0
  %v854 = vadd.f32 %v142, %v853
  %v855 = vpop.f32.mrb[0].mxu0
  %v856 = vadd.f32 %v146, %v855
  %v857 = vpop.f32.mrb[0].mxu0
  %v858 = vadd.f32 %v142, %v857
  %v859 = vpop.f32.mrb[0].mxu0
  %v860 = vadd.f32 %v146, %v859
  %861 = vmatprep.mubr.bf16.mxu0 0
  %862 = vmatmul.mubr.bf16.gmra.mrb[0].mxu0 %v379
  %v863 = vpop.f32.mrb[0].mxu0
  %v864 = vadd.f32 %v142, %v863
  %v865 = vpop.f32.mrb[0].mxu0
  %v866 = vadd.f32 %v146, %v865
  %v867 = vpop.f32.mrb[0].mxu0
  %v868 = vadd.f32 %v142, %v867
  %v869 = vpop.f32.mrb[0].mxu0
  %v870 = vadd.f32 %v146, %v869
  %871 = vmatprep.mubr.bf16.mxu0 0
  %872 = vmatmul.mubr.bf16.gmra.mrb[0].mxu0 %v380
  %v873 = vpop.f32.mrb[0].mxu0
  %v874 = vadd.f32 %v142, %v873
  %v875 = vpop.f32.mrb[0].mxu0
  %v876 = vadd.f32 %v146, %v875
  %v877 = vpop.f32.mrb[0].mxu0
  %v878 = vadd.f32 %v142, %v877
  %v879 = vpop.f32.mrb[0].mxu0
  %v880 = vadd.f32 %v146, %v879
  %881 = vmatprep.mubr.bf16.mxu0 0
  %882 = vmatmul.mubr.bf16.gmra.mrb[0].mxu0 %v381
  %v883 = vpop.f32.mrb[0].mxu0
  %v884 = vadd.f32 %v142, %v883
  %v885 = vpop.f32.mrb[0].mxu0
  %v886 = vadd.f32 %v146, %v885
  %v887 = vpop.f32.mrb[0].mxu0
  %v888 = vadd.f32 %v142, %v887
  %v889 = vpop.f32.mrb[0].mxu0
  %v890 = vadd.f32 %v146, %v889
  %891 = vmatprep.mubr.bf16.mxu0 0
  %892 = vmatmul.mubr.bf16.gmra.mrb[0].mxu0 %v382
  %v893 = vpop.f32.mrb[0].mxu0
  %v894 = vadd.f32 %v142, %v893
  %v895 = vpop.f32.mrb[0].mxu0
  %v896 = vadd.f32 %v146, %v895
  %v897 = vpop.f32.mrb[0].mxu0
  %v898 = vadd.f32 %v142, %v897
  %v899 = vpop.f32.mrb[0].mxu0
  %v900 = vadd.f32 %v146, %v899
  %901 = vmatprep.mubr.bf16.mxu0 0
  %902 = vmatmul.mubr.bf16.gmra.mrb[0].mxu0 %v383
  %v903 = vpop.f32.mrb[0].mxu0
  %v904 = vadd.f32 %v142, %v903
  %v905 = vpop.f32.mrb[0].mxu0
  %v906 = vadd.f32 %v146, %v905
  %v907 = vpop.f32.mrb[0].mxu0
  %v908 = vadd.f32 %v142, %v907
  %v909 = vpop.f32.mrb[0].mxu0
  %v910 = vadd.f32 %v146, %v909
  %911 = vmatprep.mubr.bf16.mxu0 0
  %912 = vmatmul.mubr.bf16.gmra.mrb[0].mxu0 %v384
  %v913 = vpop.f32.mrb[0].mxu0
  %v914 = vadd.f32 %v142, %v913
  %v915 = vpop.f32.mrb[0].mxu0
  %v916 = vadd.f32 %v146, %v915
  %v917 = vpop.f32.mrb[0].mxu0
  %v918 = vadd.f32 %v142, %v917
  %v919 = vpop.f32.mrb[0].mxu0
  %v920 = vadd.f32 %v146, %v919
  %921 = vmatprep.mubr.bf16.mxu0 0
  %922 = vmatmul.mubr.bf16.gmra.mrb[0].mxu0 %v385
  %v923 = vpop.f32.mrb[0].mxu0
  %v924 = vadd.f32 %v142, %v923
  %v925 = vpop.f32.mrb[0].mxu0
  %v926 = vadd.f32 %v146, %v925
  %v927 = vpop.f32.mrb[0].mxu0
  %v928 = vadd.f32 %v142, %v927
  %v929 = vpop.f32.mrb[0].mxu0
  %v930 = vadd.f32 %v146, %v929
  %931 = vmatprep.mubr.bf16.mxu0 0
  %932 = vmatmul.mubr.bf16.gmra.mrb[0].mxu0 %v386
  %v933 = vpop.f32.mrb[0].mxu0
  %v934 = vadd.f32 %v142, %v933
  %v935 = vpop.f32.mrb[0].mxu0
  %v936 = vadd.f32 %v146, %v935
  %v937 = vpop.f32.mrb[0].mxu0
  %v938 = vadd.f32 %v142, %v937
  %v939 = vpop.f32.mrb[0].mxu0
  %v940 = vadd.f32 %v146, %v939
  %941 = vmatprep.mubr.bf16.mxu0 0
  %942 = vmatmul.mubr.bf16.gmra.mrb[0].mxu0 %v387
  %v943 = vpop.f32.mrb[0].mxu0
  %v944 = vadd.f32 %v142, %v943
  %v945 = vpop.f32.mrb[0].mxu0
  %v946 = vadd.f32 %v146, %v945
  %v947 = vpop.f32.mrb[0].mxu0
  %v948 = vadd.f32 %v142, %v947
  %v949 = vpop.f32.mrb[0].mxu0
  %v950 = vadd.f32 %v146, %v949
  %951 = vmatprep.mubr.bf16.mxu0 0
  %952 = vmatmul.mubr.bf16.gmra.mrb[0].mxu0 %v388
  %v953 = vpop.f32.mrb[0].mxu0
  %v954 = vadd.f32 %v142, %v953
  %v955 = vpop.f32.mrb[0].mxu0
  %v956 = vadd.f32 %v146, %v955
  %v957 = vpop.f32.mrb[0].mxu0
  %v958 = vadd.f32 %v142, %v957
  %v959 = vpop.f32.mrb[0].mxu0
  %v960 = vadd.f32 %v146, %v959
  %961 = vmatprep.mubr.bf16.mxu0 0
  %962 = vmatmul.mubr.bf16.gmra.mrb[0].mxu0 %v389
  %v963 = vpop.f32.mrb[0].mxu0
  %v964 = vadd.f32 %v142, %v963
  %v965 = vpop.f32.mrb[0].mxu0
  %v966 = vadd.f32 %v146, %v965
  %v967 = vpop.f32.mrb[0].mxu0
  %v968 = vadd.f32 %v142, %v967
  %v969 = vpop.f32.mrb[0].mxu0
  %v970 = vadd.f32 %v146, %v969
  %971 = vmatprep.mubr.bf16.mxu0 0
  %972 = vmatmul.mubr.bf16.gmra.mrb[0].mxu0 %v390
  %v973 = vpop.f32.mrb[0].mxu0
  %v974 = vadd.f32 %v142, %v973
  %v975 = vpop.f32.mrb[0].mxu0
  %v976 = vadd.f32 %v146, %v975
  %v977 = vpop.f32.mrb[0].mxu0
  %v978 = vadd.f32 %v142, %v977
  %v979 = vpop.f32.mrb[0].mxu0
  %v980 = vadd.f32 %v146, %v979
  %981 = vmatprep.mubr.bf16.mxu0 0
  %982 = vmatmul.mubr.bf16.gmra.mrb[0].mxu0 %v391
  %v983 = vpop.f32.mrb[0].mxu0
  %v984 = vadd.f32 %v142, %v983
  %v985 = vpop.f32.mrb[0].mxu0
  %v986 = vadd.f32 %v146, %v985
  %v987 = vpop.f32.mrb[0].mxu0
  %v988 = vadd.f32 %v142, %v987
  %v989 = vpop.f32.mrb[0].mxu0
  %v990 = vadd.f32 %v146, %v989
  %991 = vmatprep.mubr.bf16.mxu0 0
  %992 = vmatmul.mubr.bf16.gmra.mrb[0].mxu0 %v392
  %v993 = vpop.f32.mrb[0].mxu0
  %v994 = vadd.f32 %v142, %v993
  %v995 = vpop.f32.mrb[0].mxu0
  %v996 = vadd.f32 %v146, %v995
  %v997 = vpop.f32.mrb[0].mxu0
  %v998 = vadd.f32 %v142, %v997
  %v999 = vpop.f32.mrb[0].mxu0
  %v1000 = vadd.f32 %v146, %v999
  %1001 = vmatprep.mubr.bf16.mxu0 0
  %1002 = vmatmul.mubr.bf16.gmra.mrb[0].mxu0 %v393
  %v1003 = vpop.f32.mrb[0].mxu0
  %v1004 = vadd.f32 %v142, %v1003
  %v1005 = vpop.f32.mrb[0].mxu0
  %v1006 = vadd.f32 %v146, %v1005
  %v1007 = vpop.f32.mrb[0].mxu0
  %v1008 = vadd.f32 %v142, %v1007
  %v1009 = vpop.f32.mrb[0].mxu0
  %v1010 = vadd.f32 %v146, %v1009
  %1011 = vmatprep.mubr.bf16.mxu0 0
  %1012 = vmatmul.mubr.bf16.gmra.mrb[0].mxu0 %v394
  %v1013 = vpop.f32.mrb[0].mxu0
  %v1014 = vadd.f32 %v142, %v1013
  %v1015 = vpop.f32.mrb[0].mxu0
  %v1016 = vadd.f32 %v146, %v1015
  %v1017 = vpop.f32.mrb[0].mxu0
  %v1018 = vadd.f32 %v142, %v1017
  %v1019 = vpop.f32.mrb[0].mxu0
  %v1020 = vadd.f32 %v146, %v1019
  %1021 = vmatprep.mubr.bf16.mxu0 0
  %1022 = vmatmul.mubr.bf16.gmra.mrb[0].mxu0 %v395
  %v1023 = vpop.f32.mrb[0].mxu0
  %v1024 = vadd.f32 %v142, %v1023
  %v1025 = vpop.f32.mrb[0].mxu0
  %v1026 = vadd.f32 %v146, %v1025
  %v1027 = vpop.f32.mrb[0].mxu0
  %v1028 = vadd.f32 %v142, %v1027
  %v1029 = vpop.f32.mrb[0].mxu0
  %v1030 = vadd.f32 %v146, %v1029
  %1031 = vmatprep.mubr.bf16.mxu0 0
  %1032 = vmatmul.mubr.bf16.gmra.mrb[0].mxu0 %v396
  %v1033 = vpop.f32.mrb[0].mxu0
  %v1034 = vadd.f32 %v142, %v1033
  %v1035 = vpop.f32.mrb[0].mxu0
  %v1036 = vadd.f32 %v146, %v1035
  %v1037 = vpop.f32.mrb[0].mxu0
  %v1038 = vadd.f32 %v142, %v1037
  %v1039 = vpop.f32.mrb[0].mxu0
  %v1040 = vadd.f32 %v146, %v1039
  %1041 = vmatprep.mubr.bf16.mxu0 0
  %1042 = vmatmul.mubr.bf16.gmra.mrb[0].mxu0 %v397
  %v1043 = vpop.f32.mrb[0].mxu0
  %v1044 = vadd.f32 %v142, %v1043
  %v1045 = vpop.f32.mrb[0].mxu0
  %v1046 = vadd.f32 %v146, %v1045
  %v1047 = vpop.f32.mrb[0].mxu0
  %v1048 = vadd.f32 %v142, %v1047
  %v1049 = vpop.f32.mrb[0].mxu0
  %v1050 = vadd.f32 %v146, %v1049
  %1051 = vmatprep.mubr.bf16.mxu0 0
  %1052 = vmatmul.mubr.bf16.gmra.mrb[0].mxu0 %v398
  %v1053 = vpop.f32.mrb[0].mxu0
  %v1054 = vadd.f32 %v142, %v1053
  %v1055 = vpop.f32.mrb[0].mxu0
  %v1056 = vadd.f32 %v146, %v1055
  %v1057 = vpop.f32.mrb[0].mxu0
  %v1058 = vadd.f32 %v142, %v1057
  %v1059 = vpop.f32.mrb[0].mxu0
  %v1060 = vadd.f32 %v146, %v1059
  %1061 = vdwg.mxu0
  %v1062 = vld [vmem:[%s0] sm:$0xff]
  %v1063 = vld [vmem:[%s0 + $0x8] sm:$0xff]
  %v1064 = vld [vmem:[%s0 + $0x10] sm:$0xff]
  %v1065 = vld [vmem:[%s0 + $0x18] sm:$0xff]
  %v1066 = vld [vmem:[%s0 + $0x20] sm:$0xff]
  %v1067 = vld [vmem:[%s0 + $0x28] sm:$0xff]
  %v1068 = vld [vmem:[%s0 + $0x30] sm:$0xff]
  %v1069 = vld [vmem:[%s0 + $0x38] sm:$0xff]
  %v1070 = vld [vmem:[%s0 + $0x40] sm:$0xff]
  %v1071 = vld [vmem:[%s0 + $0x48] sm:$0xff]
  %v1072 = vld [vmem:[%s0 + $0x50] sm:$0xff]
  %v1073 = vld [vmem:[%s0 + $0x58] sm:$0xff]
  %v1074 = vld [vmem:[%s0 + $0x60] sm:$0xff]
  %v1075 = vld [vmem:[%s0 + $0x68] sm:$0xff]
  %v1076 = vld [vmem:[%s0 + $0x70] sm:$0xff]
  %v1077 = vld [vmem:[%s0 + $0x78] sm:$0xff]
  %v1078 = vld [vmem:[%s0 + $0x80] sm:$0xff]
  %v1079 = vld [vmem:[%s0 + $0x88] sm:$0xff]
  %v1080 = vld [vmem:[%s0 + $0x90] sm:$0xff]
  %v1081 = vld [vmem:[%s0 + $0x98] sm:$0xff]
  %v1082 = vld [vmem:[%s0 + $0xa0] sm:$0xff]
  %v1083 = vld [vmem:[%s0 + $0xa8] sm:$0xff]
  %v1084 = vld [vmem:[%s0 + $0xb0] sm:$0xff]
  %v1085 = vld [vmem:[%s0 + $0xb8] sm:$0xff]
  %v1086 = vld [vmem:[%s0 + $0xc0] sm:$0xff]
  %v1087 = vld [vmem:[%s0 + $0xc8] sm:$0xff]
  %v1088 = vld [vmem:[%s0 + $0xd0] sm:$0xff]
  %v1089 = vld [vmem:[%s0 + $0xd8] sm:$0xff]
  %v1090 = vld [vmem:[%s0 + $0xe0] sm:$0xff]
  %v1091 = vld [vmem:[%s0 + $0xe8] sm:$0xff]
  %v1092 = vld [vmem:[%s0 + $0xf0] sm:$0xff]
  %v1093 = vld [vmem:[%s0 + $0xf8] sm:$0xff]
  %v1094 = vld [vmem:[%s0 + $0x100] sm:$0xff]
  %v1095 = vld [vmem:[%s0 + $0x108] sm:$0xff]
  %v1096 = vld [vmem:[%s0 + $0x110] sm:$0xff]
  %v1097 = vld [vmem:[%s0 + $0x118] sm:$0xff]
  %v1098 = vld [vmem:[%s0 + $0x120] sm:$0xff]
  %v1099 = vld [vmem:[%s0 + $0x128] sm:$0xff]
  %v1100 = vld [vmem:[%s0 + $0x130] sm:$0xff]
  %v1101 = vld [vmem:[%s0 + $0x138] sm:$0xff]
  %v1102 = vld [vmem:[%s0 + $0x140] sm:$0xff]
  %v1103 = vld [vmem:[%s0 + $0x148] sm:$0xff]
  %v1104 = vld [vmem:[%s0 + $0x150] sm:$0xff]
  %v1105 = vld [vmem:[%s0 + $0x158] sm:$0xff]
  %v1106 = vld [vmem:[%s0 + $0x160] sm:$0xff]
  %v1107 = vld [vmem:[%s0 + $0x168] sm:$0xff]
  %v1108 = vld [vmem:[%s0 + $0x170] sm:$0xff]
  %v1109 = vld [vmem:[%s0 + $0x178] sm:$0xff]
  %v1110 = vld [vmem:[%s0 + $0x180] sm:$0xff]
  %v1111 = vld [vmem:[%s0 + $0x188] sm:$0xff]
  %v1112 = vld [vmem:[%s0 + $0x190] sm:$0xff]
  %v1113 = vld [vmem:[%s0 + $0x198] sm:$0xff]
  %v1114 = vld [vmem:[%s0 + $0x1a0] sm:$0xff]
  %v1115 = vld [vmem:[%s0 + $0x1a8] sm:$0xff]
  %v1116 = vld [vmem:[%s0 + $0x1b0] sm:$0xff]
  %v1117 = vld [vmem:[%s0 + $0x1b8] sm:$0xff]
  %v1118 = vld [vmem:[%s0 + $0x1c0] sm:$0xff]
  %v1119 = vld [vmem:[%s0 + $0x1c8] sm:$0xff]
  %v1120 = vld [vmem:[%s0 + $0x1d0] sm:$0xff]
  %v1121 = vld [vmem:[%s0 + $0x1d8] sm:$0xff]
  %v1122 = vld [vmem:[%s0 + $0x1e0] sm:$0xff]
  %v1123 = vld [vmem:[%s0 + $0x1e8] sm:$0xff]
  %v1124 = vld [vmem:[%s0 + $0x1f0] sm:$0xff]
  %v1125 = vld [vmem:[%s0 + $0x1f8] sm:$0xff]
  %v1126 = vld [vmem:[%s0 + $0x200] sm:$0xff]
  %v1127 = vld [vmem:[%s0 + $0x208] sm:$0xff]
  %v1128 = vld [vmem:[%s0 + $0x210] sm:$0xff]
  %v1129 = vld [vmem:[%s0 + $0x218] sm:$0xff]
  %v1130 = vld [vmem:[%s0 + $0x220] sm:$0xff]
  %v1131 = vld [vmem:[%s0 + $0x228] sm:$0xff]
  %v1132 = vld [vmem:[%s0 + $0x230] sm:$0xff]
  %v1133 = vld [vmem:[%s0 + $0x238] sm:$0xff]
  %v1134 = vld [vmem:[%s0 + $0x240] sm:$0xff]
  %v1135 = vld [vmem:[%s0 + $0x248] sm:$0xff]
  %v1136 = vld [vmem:[%s0 + $0x250] sm:$0xff]
  %v1137 = vld [vmem:[%s0 + $0x258] sm:$0xff]
  %v1138 = vld [vmem:[%s0 + $0x260] sm:$0xff]
  %v1139 = vld [vmem:[%s0 + $0x268] sm:$0xff]
  %v1140 = vld [vmem:[%s0 + $0x270] sm:$0xff]
  %v1141 = vld [vmem:[%s0 + $0x278] sm:$0xff]
  %v1142 = vld [vmem:[%s0 + $0x280] sm:$0xff]
  %v1143 = vld [vmem:[%s0 + $0x288] sm:$0xff]
  %v1144 = vld [vmem:[%s0 + $0x290] sm:$0xff]
  %v1145 = vld [vmem:[%s0 + $0x298] sm:$0xff]
  %v1146 = vld [vmem:[%s0 + $0x2a0] sm:$0xff]
  %v1147 = vld [vmem:[%s0 + $0x2a8] sm:$0xff]
  %v1148 = vld [vmem:[%s0 + $0x2b0] sm:$0xff]
  %v1149 = vld [vmem:[%s0 + $0x2b8] sm:$0xff]
  %v1150 = vld [vmem:[%s0 + $0x2c0] sm:$0xff]
  %v1151 = vld [vmem:[%s0 + $0x2c8] sm:$0xff]
  %v1152 = vld [vmem:[%s0 + $0x2d0] sm:$0xff]
  %v1153 = vld [vmem:[%s0 + $0x2d8] sm:$0xff]
  %v1154 = vld [vmem:[%s0 + $0x2e0] sm:$0xff]
  %v1155 = vld [vmem:[%s0 + $0x2e8] sm:$0xff]
  %v1156 = vld [vmem:[%s0 + $0x2f0] sm:$0xff]
  %v1157 = vld [vmem:[%s0 + $0x2f8] sm:$0xff]
  %v1158 = vld [vmem:[%s0 + $0x300] sm:$0xff]
  %v1159 = vld [vmem:[%s0 + $0x308] sm:$0xff]
  %v1160 = vld [vmem:[%s0 + $0x310] sm:$0xff]
  %v1161 = vld [vmem:[%s0 + $0x318] sm:$0xff]
  %v1162 = vadd.f32 %v1062, %v564
  %v1163 = vadd.f32 %v1063, %v568
  %v1164 = vadd.f32 %v1064, %v574
  %v1165 = vadd.f32 %v1065, %v578
  %v1166 = vadd.f32 %v1066, %v584
  %v1167 = vadd.f32 %v1067, %v588
  %v1168 = vadd.f32 %v1068, %v594
  %v1169 = vadd.f32 %v1069, %v598
  %v1170 = vadd.f32 %v1070, %v604
  %v1171 = vadd.f32 %v1071, %v608
  %v1172 = vadd.f32 %v1072, %v614
  %v1173 = vadd.f32 %v1073, %v618
  %v1174 = vadd.f32 %v1074, %v624
  %v1175 = vadd.f32 %v1075, %v628
  %v1176 = vadd.f32 %v1076, %v634
  %v1177 = vadd.f32 %v1077, %v638
  %v1178 = vadd.f32 %v1078, %v644
  %v1179 = vadd.f32 %v1079, %v648
  %v1180 = vadd.f32 %v1080, %v654
  %v1181 = vadd.f32 %v1081, %v658
  %v1182 = vadd.f32 %v1082, %v664
  %v1183 = vadd.f32 %v1083, %v668
  %v1184 = vadd.f32 %v1084, %v674
  %v1185 = vadd.f32 %v1085, %v678
  %v1186 = vadd.f32 %v1086, %v684
  %v1187 = vadd.f32 %v1087, %v688
  %v1188 = vadd.f32 %v1088, %v694
  %v1189 = vadd.f32 %v1089, %v698
  %v1190 = vadd.f32 %v1090, %v704
  %v1191 = vadd.f32 %v1091, %v708
  %v1192 = vadd.f32 %v1092, %v714
  %v1193 = vadd.f32 %v1093, %v718
  %v1194 = vadd.f32 %v1094, %v724
  %v1195 = vadd.f32 %v1095, %v728
  %v1196 = vadd.f32 %v1096, %v734
  %v1197 = vadd.f32 %v1097, %v738
  %v1198 = vadd.f32 %v1098, %v744
  %v1199 = vadd.f32 %v1099, %v748
  %v1200 = vadd.f32 %v1100, %v754
  %v1201 = vadd.f32 %v1101, %v758
  %v1202 = vadd.f32 %v1102, %v764
  %v1203 = vadd.f32 %v1103, %v768
  %v1204 = vadd.f32 %v1104, %v774
  %v1205 = vadd.f32 %v1105, %v778
  %v1206 = vadd.f32 %v1106, %v784
  %v1207 = vadd.f32 %v1107, %v788
  %v1208 = vadd.f32 %v1108, %v794
  %v1209 = vadd.f32 %v1109, %v798
  %v1210 = vadd.f32 %v1110, %v804
  %v1211 = vadd.f32 %v1111, %v808
  %v1212 = vadd.f32 %v1112, %v814
  %v1213 = vadd.f32 %v1113, %v818
  %v1214 = vadd.f32 %v1114, %v824
  %v1215 = vadd.f32 %v1115, %v828
  %v1216 = vadd.f32 %v1116, %v834
  %v1217 = vadd.f32 %v1117, %v838
  %v1218 = vadd.f32 %v1118, %v844
  %v1219 = vadd.f32 %v1119, %v848
  %v1220 = vadd.f32 %v1120, %v854
  %v1221 = vadd.f32 %v1121, %v858
  %v1222 = vadd.f32 %v1122, %v864
  %v1223 = vadd.f32 %v1123, %v868
  %v1224 = vadd.f32 %v1124, %v874
  %v1225 = vadd.f32 %v1125, %v878
  %v1226 = vadd.f32 %v1126, %v884
  %v1227 = vadd.f32 %v1127, %v888
  %v1228 = vadd.f32 %v1128, %v894
  %v1229 = vadd.f32 %v1129, %v898
  %v1230 = vadd.f32 %v1130, %v904
  %v1231 = vadd.f32 %v1131, %v908
  %v1232 = vadd.f32 %v1132, %v914
  %v1233 = vadd.f32 %v1133, %v918
  %v1234 = vadd.f32 %v1134, %v924
  %v1235 = vadd.f32 %v1135, %v928
  %v1236 = vadd.f32 %v1136, %v934
  %v1237 = vadd.f32 %v1137, %v938
  %v1238 = vadd.f32 %v1138, %v944
  %v1239 = vadd.f32 %v1139, %v948
  %v1240 = vadd.f32 %v1140, %v954
  %v1241 = vadd.f32 %v1141, %v958
  %v1242 = vadd.f32 %v1142, %v964
  %v1243 = vadd.f32 %v1143, %v968
  %v1244 = vadd.f32 %v1144, %v974
  %v1245 = vadd.f32 %v1145, %v978
  %v1246 = vadd.f32 %v1146, %v984
  %v1247 = vadd.f32 %v1147, %v988
  %v1248 = vadd.f32 %v1148, %v994
  %v1249 = vadd.f32 %v1149, %v998
  %v1250 = vadd.f32 %v1150, %v1004
  %v1251 = vadd.f32 %v1151, %v1008
  %v1252 = vadd.f32 %v1152, %v1014
  %v1253 = vadd.f32 %v1153, %v1018
  %v1254 = vadd.f32 %v1154, %v1024
  %v1255 = vadd.f32 %v1155, %v1028
  %v1256 = vadd.f32 %v1156, %v1034
  %v1257 = vadd.f32 %v1157, %v1038
  %v1258 = vadd.f32 %v1158, %v1044
  %v1259 = vadd.f32 %v1159, %v1048
  %v1260 = vadd.f32 %v1160, %v1054
  %v1261 = vadd.f32 %v1161, %v1058
  %v1262 = vmax.f32 %v1162, 0.0
  %v1263 = vmax.f32 %v1163, 0.0
  %v1264 = vmax.f32 %v1164, 0.0
  %v1265 = vmax.f32 %v1165, 0.0
  %v1266 = vmax.f32 %v1166, 0.0
  %v1267 = vmax.f32 %v1167, 0.0
  %v1268 = vmax.f32 %v1168, 0.0
  %v1269 = vmax.f32 %v1169, 0.0
  %v1270 = vmax.f32 %v1170, 0.0
  %v1271 = vmax.f32 %v1171, 0.0
  %v1272 = vmax.f32 %v1172, 0.0
  %v1273 = vmax.f32 %v1173, 0.0
  %v1274 = vmax.f32 %v1174, 0.0
  %v1275 = vmax.f32 %v1175, 0.0
  %v1276 = vmax.f32 %v1176, 0.0
  %v1277 = vmax.f32 %v1177, 0.0
  %v1278 = vmax.f32 %v1178, 0.0
  %v1279 = vmax.f32 %v1179, 0.0
  %v1280 = vmax.f32 %v1180, 0.0
  %v1281 = vmax.f32 %v1181, 0.0
  %v1282 = vmax.f32 %v1182, 0.0
  %v1283 = vmax.f32 %v1183, 0.0
  %v1284 = vmax.f32 %v1184, 0.0
  %v1285 = vmax.f32 %v1185, 0.0
  %v1286 = vmax.f32 %v1186, 0.0
  %v1287 = vmax.f32 %v1187, 0.0
  %v1288 = vmax.f32 %v1188, 0.0
  %v1289 = vmax.f32 %v1189, 0.0
  %v1290 = vmax.f32 %v1190, 0.0
  %v1291 = vmax.f32 %v1191, 0.0
  %v1292 = vmax.f32 %v1192, 0.0
  %v1293 = vmax.f32 %v1193, 0.0
  %v1294 = vmax.f32 %v1194, 0.0
  %v1295 = vmax.f32 %v1195, 0.0
  %v1296 = vmax.f32 %v1196, 0.0
  %v1297 = vmax.f32 %v1197, 0.0
  %v1298 = vmax.f32 %v1198, 0.0
  %v1299 = vmax.f32 %v1199, 0.0
  %v1300 = vmax.f32 %v1200, 0.0
  %v1301 = vmax.f32 %v1201, 0.0
  %v1302 = vmax.f32 %v1202, 0.0
  %v1303 = vmax.f32 %v1203, 0.0
  %v1304 = vmax.f32 %v1204, 0.0
  %v1305 = vmax.f32 %v1205, 0.0
  %v1306 = vmax.f32 %v1206, 0.0
  %v1307 = vmax.f32 %v1207, 0.0
  %v1308 = vmax.f32 %v1208, 0.0
  %v1309 = vmax.f32 %v1209, 0.0
  %v1310 = vmax.f32 %v1210, 0.0
  %v1311 = vmax.f32 %v1211, 0.0
  %v1312 = vmax.f32 %v1212, 0.0
  %v1313 = vmax.f32 %v1213, 0.0
  %v1314 = vmax.f32 %v1214, 0.0
  %v1315 = vmax.f32 %v1215, 0.0
  %v1316 = vmax.f32 %v1216, 0.0
  %v1317 = vmax.f32 %v1217, 0.0
  %v1318 = vmax.f32 %v1218, 0.0
  %v1319 = vmax.f32 %v1219, 0.0
  %v1320 = vmax.f32 %v1220, 0.0
  %v1321 = vmax.f32 %v1221, 0.0
  %v1322 = vmax.f32 %v1222, 0.0
  %v1323 = vmax.f32 %v1223, 0.0
  %v1324 = vmax.f32 %v1224, 0.0
  %v1325 = vmax.f32 %v1225, 0.0
  %v1326 = vmax.f32 %v1226, 0.0
  %v1327 = vmax.f32 %v1227, 0.0
  %v1328 = vmax.f32 %v1228, 0.0
  %v1329 = vmax.f32 %v1229, 0.0
  %v1330 = vmax.f32 %v1230, 0.0
  %v1331 = vmax.f32 %v1231, 0.0
  %v1332 = vmax.f32 %v1232, 0.0
  %v1333 = vmax.f32 %v1233, 0.0
  %v1334 = vmax.f32 %v1234, 0.0
  %v1335 = vmax.f32 %v1235, 0.0
  %v1336 = vmax.f32 %v1236, 0.0
  %v1337 = vmax.f32 %v1237, 0.0
  %v1338 = vmax.f32 %v1238, 0.0
  %v1339 = vmax.f32 %v1239, 0.0
  %v1340 = vmax.f32 %v1240, 0.0
  %v1341 = vmax.f32 %v1241, 0.0
  %v1342 = vmax.f32 %v1242, 0.0
  %v1343 = vmax.f32 %v1243, 0.0
  %v1344 = vmax.f32 %v1244, 0.0
  %v1345 = vmax.f32 %v1245, 0.0
  %v1346 = vmax.f32 %v1246, 0.0
  %v1347 = vmax.f32 %v1247, 0.0
  %v1348 = vmax.f32 %v1248, 0.0
  %v1349 = vmax.f32 %v1249, 0.0
  %v1350 = vmax.f32 %v1250, 0.0
  %v1351 = vmax.f32 %v1251, 0.0
  %v1352 = vmax.f32 %v1252, 0.0
  %v1353 = vmax.f32 %v1253, 0.0
  %v1354 = vmax.f32 %v1254, 0.0
  %v1355 = vmax.f32 %v1255, 0.0
  %v1356 = vmax.f32 %v1256, 0.0
  %v1357 = vmax.f32 %v1257, 0.0
  %v1358 = vmax.f32 %v1258, 0.0
  %v1359 = vmax.f32 %v1259, 0.0
  %v1360 = vmax.f32 %v1260, 0.0
  %v1361 = vmax.f32 %v1261, 0.0
  %v1362 = vpack.c.bf16 %v1263, %v1262
  %v1363 = vpack.c.bf16 %v1265, %v1264
  %v1364 = vpack.c.bf16 %v1267, %v1266
  %v1365 = vpack.c.bf16 %v1269, %v1268
  %v1366 = vpack.c.bf16 %v1271, %v1270
  %v1367 = vpack.c.bf16 %v1273, %v1272
  %v1368 = vpack.c.bf16 %v1275, %v1274
  %v1369 = vpack.c.bf16 %v1277, %v1276
  %v1370 = vpack.c.bf16 %v1279, %v1278
  %v1371 = vpack.c.bf16 %v1281, %v1280
  %v1372 = vpack.c.bf16 %v1283, %v1282
  %v1373 = vpack.c.bf16 %v1285, %v1284
  %v1374 = vpack.c.bf16 %v1287, %v1286
  %v1375 = vpack.c.bf16 %v1289, %v1288
  %v1376 = vpack.c.bf16 %v1291, %v1290
  %v1377 = vpack.c.bf16 %v1293, %v1292
  %v1378 = vpack.c.bf16 %v1295, %v1294
  %v1379 = vpack.c.bf16 %v1297, %v1296
  %v1380 = vpack.c.bf16 %v1299, %v1298
  %v1381 = vpack.c.bf16 %v1301, %v1300
  %v1382 = vpack.c.bf16 %v1303, %v1302
  %v1383 = vpack.c.bf16 %v1305, %v1304
  %v1384 = vpack.c.bf16 %v1307, %v1306
  %v1385 = vpack.c.bf16 %v1309, %v1308
  %v1386 = vpack.c.bf16 %v1311, %v1310
  %v1387 = vpack.c.bf16 %v1313, %v1312
  %v1388 = vpack.c.bf16 %v1315, %v1314
  %v1389 = vpack.c.bf16 %v1317, %v1316
  %v1390 = vpack.c.bf16 %v1319, %v1318
  %v1391 = vpack.c.bf16 %v1321, %v1320
  %v1392 = vpack.c.bf16 %v1323, %v1322
  %v1393 = vpack.c.bf16 %v1325, %v1324
  %v1394 = vpack.c.bf16 %v1327, %v1326
  %v1395 = vpack.c.bf16 %v1329, %v1328
  %v1396 = vpack.c.bf16 %v1331, %v1330
  %v1397 = vpack.c.bf16 %v1333, %v1332
  %v1398 = vpack.c.bf16 %v1335, %v1334
  %v1399 = vpack.c.bf16 %v1337, %v1336
  %v1400 = vpack.c.bf16 %v1339, %v1338
  %v1401 = vpack.c.bf16 %v1341, %v1340
  %v1402 = vpack.c.bf16 %v1343, %v1342
  %v1403 = vpack.c.bf16 %v1345, %v1344
  %v1404 = vpack.c.bf16 %v1347, %v1346
  %v1405 = vpack.c.bf16 %v1349, %v1348
  %v1406 = vpack.c.bf16 %v1351, %v1350
  %v1407 = vpack.c.bf16 %v1353, %v1352
  %v1408 = vpack.c.bf16 %v1355, %v1354
  %v1409 = vpack.c.bf16 %v1357, %v1356
  %v1410 = vpack.c.bf16 %v1359, %v1358
  %v1411 = vpack.c.bf16 %v1361, %v1360
  %v1412 = vld [vmem:[%s3] sm:$0xf]
  %v1413 = vld [vmem:[%s3 + $0x4] sm:$0xf]
  %v1414 = vld [vmem:[%s3 + $0x8] sm:$0xf]
  %v1415 = vld [vmem:[%s3 + $0xc] sm:$0xf]
  %v1416 = vld [vmem:[%s3 + $0x10] sm:$0xf]
  %v1417 = vld [vmem:[%s3 + $0x14] sm:$0xf]
  %v1418 = vld [vmem:[%s3 + $0x18] sm:$0xf]
  %v1419 = vld [vmem:[%s3 + $0x1c] sm:$0xf]
  %v1420 = vld [vmem:[%s3 + $0x20] sm:$0xf]
  %v1421 = vld [vmem:[%s3 + $0x24] sm:$0xf]
  %v1422 = vld [vmem:[%s3 + $0x28] sm:$0xf]
  %v1423 = vld [vmem:[%s3 + $0x2c] sm:$0xf]
  %v1424 = vld [vmem:[%s3 + $0x30] sm:$0xf]
  %v1425 = vld [vmem:[%s3 + $0x34] sm:$0xf]
  %v1426 = vld [vmem:[%s3 + $0x38] sm:$0xf]
  %v1427 = vld [vmem:[%s3 + $0x3c] sm:$0xf]
  %v1428 = vld [vmem:[%s4 + $0x1] ss:$0 sm:$0xff]
  %v1445 = vunpack.c.l.b16 %v1412
  %v1446 = vunpack.c.l.b16 %v1413
  %v1447 = vunpack.c.l.b16 %v1414
  %v1448 = vunpack.c.l.b16 %v1415
  %v1449 = vunpack.c.l.b16 %v1416
  %v1450 = vunpack.c.l.b16 %v1417
  %v1451 = vunpack.c.l.b16 %v1418
  %v1452 = vunpack.c.l.b16 %v1419
  %v1453 = vunpack.c.l.b16 %v1420
  %v1454 = vunpack.c.l.b16 %v1421
  %v1455 = vunpack.c.l.b16 %v1422
  %v1456 = vunpack.c.l.b16 %v1423
  %v1457 = vunpack.c.l.b16 %v1424
  %v1458 = vunpack.c.l.b16 %v1425
  %v1459 = vunpack.c.l.b16 %v1426
  %v1460 = vunpack.c.l.b16 %v1427
  %v1461 = vpack.c.b16 %v1446, %v1445
  %v1462 = vpack.c.b16 %v1448, %v1447
  %v1463 = vpack.c.b16 %v1450, %v1449
  %v1464 = vpack.c.b16 %v1452, %v1451
  %v1465 = vpack.c.b16 %v1454, %v1453
  %v1466 = vpack.c.b16 %v1456, %v1455
  %v1467 = vpack.c.b16 %v1458, %v1457
  %v1468 = vpack.c.b16 %v1460, %v1459
  %1477 = vmatprep.subr.bf16.mxu0 0
  %1478 = vmatpush1.bf16.msra.mxu0 %v1461
  %1479 = vmatprep.subr.bf16.mxu0 0
  %1480 = vmatpush1.bf16.msra.mxu0 %v1462
  %1481 = vmatprep.subr.bf16.mxu0 0
  %1482 = vmatpush1.bf16.msra.mxu0 %v1463
  %1483 = vmatprep.subr.bf16.mxu0 0
  %1484 = vmatpush1.bf16.msra.mxu0 %v1464
  %1485 = vmatprep.subr.bf16.mxu0 0
  %1486 = vmatpush1.bf16.msra.mxu0 %v1465
  %1487 = vmatprep.subr.bf16.mxu0 0
  %1488 = vmatpush1.bf16.msra.mxu0 %v1466
  %1489 = vmatprep.subr.bf16.mxu0 0
  %1490 = vmatpush1.bf16.msra.mxu0 %v1467
  %1491 = vmatprep.subr.bf16.mxu0 0
  %1492 = vmatpush1.bf16.msra.mxu0 %v1468
  %1493 = vmatprep.subr.bf16.mxu0 0
  %1494 = vmatpush1.bf16.msra.mxu0 0
  %1495 = vmatprep.subr.bf16.mxu0 0
  %1496 = vmatpush1.bf16.msra.mxu0 0
  %1497 = vmatprep.subr.bf16.mxu0 0
  %1498 = vmatpush1.bf16.msra.mxu0 0
  %1499 = vmatprep.subr.bf16.mxu0 0
  %1500 = vmatpush1.bf16.msra.mxu0 0
  %1501 = vmatprep.subr.bf16.mxu0 0
  %1502 = vmatpush1.bf16.msra.mxu0 0
  %1503 = vmatprep.subr.bf16.mxu0 0
  %1504 = vmatpush1.bf16.msra.mxu0 0
  %1505 = vmatprep.subr.bf16.mxu0 0
  %1506 = vmatpush1.bf16.msra.mxu0 0
  %1507 = vmatprep.subr.bf16.mxu0 0
  %1508 = vmatpush1.bf16.msra.mxu0 0
  %1509 = vmatprep.mubr.bf16.mxu0 0
  %1510 = vmatmul.mubr.bf16.gmra.mrb[0].mxu0 %v1362
  %v1511 = vpop.f32.mrb[0].mxu0
  %v1512 = vadd.f32 %v1428, %v1511
  %v1513 = vpop.f32.mrb[0].mxu0
  %v1514 = vpop.f32.mrb[0].mxu0
  %v1515 = vadd.f32 %v1428, %v1514
  %v1516 = vpop.f32.mrb[0].mxu0
  %1517 = vmatprep.mubr.bf16.mxu0 0
  %1518 = vmatmul.mubr.bf16.gmra.mrb[0].mxu0 %v1363
  %v1519 = vpop.f32.mrb[0].mxu0
  %v1520 = vadd.f32 %v1428, %v1519
  %v1521 = vpop.f32.mrb[0].mxu0
  %v1522 = vpop.f32.mrb[0].mxu0
  %v1523 = vadd.f32 %v1428, %v1522
  %v1524 = vpop.f32.mrb[0].mxu0
  %1525 = vmatprep.mubr.bf16.mxu0 0
  %1526 = vmatmul.mubr.bf16.gmra.mrb[0].mxu0 %v1364
  %v1527 = vpop.f32.mrb[0].mxu0
  %v1528 = vadd.f32 %v1428, %v1527
  %v1529 = vpop.f32.mrb[0].mxu0
  %v1530 = vpop.f32.mrb[0].mxu0
  %v1531 = vadd.f32 %v1428, %v1530
  %v1532 = vpop.f32.mrb[0].mxu0
  %1533 = vmatprep.mubr.bf16.mxu0 0
  %1534 = vmatmul.mubr.bf16.gmra.mrb[0].mxu0 %v1365
  %v1535 = vpop.f32.mrb[0].mxu0
  %v1536 = vadd.f32 %v1428, %v1535
  %v1537 = vpop.f32.mrb[0].mxu0
  %v1538 = vpop.f32.mrb[0].mxu0
  %v1539 = vadd.f32 %v1428, %v1538
  %v1540 = vpop.f32.mrb[0].mxu0
  %1541 = vmatprep.mubr.bf16.mxu0 0
  %1542 = vmatmul.mubr.bf16.gmra.mrb[0].mxu0 %v1366
  %v1543 = vpop.f32.mrb[0].mxu0
  %v1544 = vadd.f32 %v1428, %v1543
  %v1545 = vpop.f32.mrb[0].mxu0
  %v1546 = vpop.f32.mrb[0].mxu0
  %v1547 = vadd.f32 %v1428, %v1546
  %v1548 = vpop.f32.mrb[0].mxu0
  %1549 = vmatprep.mubr.bf16.mxu0 0
  %1550 = vmatmul.mubr.bf16.gmra.mrb[0].mxu0 %v1367
  %v1551 = vpop.f32.mrb[0].mxu0
  %v1552 = vadd.f32 %v1428, %v1551
  %v1553 = vpop.f32.mrb[0].mxu0
  %v1554 = vpop.f32.mrb[0].mxu0
  %v1555 = vadd.f32 %v1428, %v1554
  %v1556 = vpop.f32.mrb[0].mxu0
  %1557 = vmatprep.mubr.bf16.mxu0 0
  %1558 = vmatmul.mubr.bf16.gmra.mrb[0].mxu0 %v1368
  %v1559 = vpop.f32.mrb[0].mxu0
  %v1560 = vadd.f32 %v1428, %v1559
  %v1561 = vpop.f32.mrb[0].mxu0
  %v1562 = vpop.f32.mrb[0].mxu0
  %v1563 = vadd.f32 %v1428, %v1562
  %v1564 = vpop.f32.mrb[0].mxu0
  %1565 = vmatprep.mubr.bf16.mxu0 0
  %1566 = vmatmul.mubr.bf16.gmra.mrb[0].mxu0 %v1369
  %v1567 = vpop.f32.mrb[0].mxu0
  %v1568 = vadd.f32 %v1428, %v1567
  %v1569 = vpop.f32.mrb[0].mxu0
  %v1570 = vpop.f32.mrb[0].mxu0
  %v1571 = vadd.f32 %v1428, %v1570
  %v1572 = vpop.f32.mrb[0].mxu0
  %1573 = vmatprep.mubr.bf16.mxu0 0
  %1574 = vmatmul.mubr.bf16.gmra.mrb[0].mxu0 %v1370
  %v1575 = vpop.f32.mrb[0].mxu0
  %v1576 = vadd.f32 %v1428, %v1575
  %v1577 = vpop.f32.mrb[0].mxu0
  %v1578 = vpop.f32.mrb[0].mxu0
  %v1579 = vadd.f32 %v1428, %v1578
  %v1580 = vpop.f32.mrb[0].mxu0
  %1581 = vmatprep.mubr.bf16.mxu0 0
  %1582 = vmatmul.mubr.bf16.gmra.mrb[0].mxu0 %v1371
  %v1583 = vpop.f32.mrb[0].mxu0
  %v1584 = vadd.f32 %v1428, %v1583
  %v1585 = vpop.f32.mrb[0].mxu0
  %v1586 = vpop.f32.mrb[0].mxu0
  %v1587 = vadd.f32 %v1428, %v1586
  %v1588 = vpop.f32.mrb[0].mxu0
  %1589 = vmatprep.mubr.bf16.mxu0 0
  %1590 = vmatmul.mubr.bf16.gmra.mrb[0].mxu0 %v1372
  %v1591 = vpop.f32.mrb[0].mxu0
  %v1592 = vadd.f32 %v1428, %v1591
  %v1593 = vpop.f32.mrb[0].mxu0
  %v1594 = vpop.f32.mrb[0].mxu0
  %v1595 = vadd.f32 %v1428, %v1594
  %v1596 = vpop.f32.mrb[0].mxu0
  %1597 = vmatprep.mubr.bf16.mxu0 0
  %1598 = vmatmul.mubr.bf16.gmra.mrb[0].mxu0 %v1373
  %v1599 = vpop.f32.mrb[0].mxu0
  %v1600 = vadd.f32 %v1428, %v1599
  %v1601 = vpop.f32.mrb[0].mxu0
  %v1602 = vpop.f32.mrb[0].mxu0
  %v1603 = vadd.f32 %v1428, %v1602
  %v1604 = vpop.f32.mrb[0].mxu0
  %1605 = vmatprep.mubr.bf16.mxu0 0
  %1606 = vmatmul.mubr.bf16.gmra.mrb[0].mxu0 %v1374
  %v1607 = vpop.f32.mrb[0].mxu0
  %v1608 = vadd.f32 %v1428, %v1607
  %v1609 = vpop.f32.mrb[0].mxu0
  %v1610 = vpop.f32.mrb[0].mxu0
  %v1611 = vadd.f32 %v1428, %v1610
  %v1612 = vpop.f32.mrb[0].mxu0
  %1613 = vmatprep.mubr.bf16.mxu0 0
  %1614 = vmatmul.mubr.bf16.gmra.mrb[0].mxu0 %v1375
  %v1615 = vpop.f32.mrb[0].mxu0
  %v1616 = vadd.f32 %v1428, %v1615
  %v1617 = vpop.f32.mrb[0].mxu0
  %v1618 = vpop.f32.mrb[0].mxu0
  %v1619 = vadd.f32 %v1428, %v1618
  %v1620 = vpop.f32.mrb[0].mxu0
  %1621 = vmatprep.mubr.bf16.mxu0 0
  %1622 = vmatmul.mubr.bf16.gmra.mrb[0].mxu0 %v1376
  %v1623 = vpop.f32.mrb[0].mxu0
  %v1624 = vadd.f32 %v1428, %v1623
  %v1625 = vpop.f32.mrb[0].mxu0
  %v1626 = vpop.f32.mrb[0].mxu0
  %v1627 = vadd.f32 %v1428, %v1626
  %v1628 = vpop.f32.mrb[0].mxu0
  %1629 = vmatprep.mubr.bf16.mxu0 0
  %1630 = vmatmul.mubr.bf16.gmra.mrb[0].mxu0 %v1377
  %v1631 = vpop.f32.mrb[0].mxu0
  %v1632 = vadd.f32 %v1428, %v1631
  %v1633 = vpop.f32.mrb[0].mxu0
  %v1634 = vpop.f32.mrb[0].mxu0
  %v1635 = vadd.f32 %v1428, %v1634
  %v1636 = vpop.f32.mrb[0].mxu0
  %1637 = vmatprep.mubr.bf16.mxu0 0
  %1638 = vmatmul.mubr.bf16.gmra.mrb[0].mxu0 %v1378
  %v1639 = vpop.f32.mrb[0].mxu0
  %v1640 = vadd.f32 %v1428, %v1639
  %v1641 = vpop.f32.mrb[0].mxu0
  %v1642 = vpop.f32.mrb[0].mxu0
  %v1643 = vadd.f32 %v1428, %v1642
  %v1644 = vpop.f32.mrb[0].mxu0
  %1645 = vmatprep.mubr.bf16.mxu0 0
  %1646 = vmatmul.mubr.bf16.gmra.mrb[0].mxu0 %v1379
  %v1647 = vpop.f32.mrb[0].mxu0
  %v1648 = vadd.f32 %v1428, %v1647
  %v1649 = vpop.f32.mrb[0].mxu0
  %v1650 = vpop.f32.mrb[0].mxu0
  %v1651 = vadd.f32 %v1428, %v1650
  %v1652 = vpop.f32.mrb[0].mxu0
  %1653 = vmatprep.mubr.bf16.mxu0 0
  %1654 = vmatmul.mubr.bf16.gmra.mrb[0].mxu0 %v1380
  %v1655 = vpop.f32.mrb[0].mxu0
  %v1656 = vadd.f32 %v1428, %v1655
  %v1657 = vpop.f32.mrb[0].mxu0
  %v1658 = vpop.f32.mrb[0].mxu0
  %v1659 = vadd.f32 %v1428, %v1658
  %v1660 = vpop.f32.mrb[0].mxu0
  %1661 = vmatprep.mubr.bf16.mxu0 0
  %1662 = vmatmul.mubr.bf16.gmra.mrb[0].mxu0 %v1381
  %v1663 = vpop.f32.mrb[0].mxu0
  %v1664 = vadd.f32 %v1428, %v1663
  %v1665 = vpop.f32.mrb[0].mxu0
  %v1666 = vpop.f32.mrb[0].mxu0
  %v1667 = vadd.f32 %v1428, %v1666
  %v1668 = vpop.f32.mrb[0].mxu0
  %1669 = vmatprep.mubr.bf16.mxu0 0
  %1670 = vmatmul.mubr.bf16.gmra.mrb[0].mxu0 %v1382
  %v1671 = vpop.f32.mrb[0].mxu0
  %v1672 = vadd.f32 %v1428, %v1671
  %v1673 = vpop.f32.mrb[0].mxu0
  %v1674 = vpop.f32.mrb[0].mxu0
  %v1675 = vadd.f32 %v1428, %v1674
  %v1676 = vpop.f32.mrb[0].mxu0
  %1677 = vmatprep.mubr.bf16.mxu0 0
  %1678 = vmatmul.mubr.bf16.gmra.mrb[0].mxu0 %v1383
  %v1679 = vpop.f32.mrb[0].mxu0
  %v1680 = vadd.f32 %v1428, %v1679
  %v1681 = vpop.f32.mrb[0].mxu0
  %v1682 = vpop.f32.mrb[0].mxu0
  %v1683 = vadd.f32 %v1428, %v1682
  %v1684 = vpop.f32.mrb[0].mxu0
  %1685 = vmatprep.mubr.bf16.mxu0 0
  %1686 = vmatmul.mubr.bf16.gmra.mrb[0].mxu0 %v1384
  %v1687 = vpop.f32.mrb[0].mxu0
  %v1688 = vadd.f32 %v1428, %v1687
  %v1689 = vpop.f32.mrb[0].mxu0
  %v1690 = vpop.f32.mrb[0].mxu0
  %v1691 = vadd.f32 %v1428, %v1690
  %v1692 = vpop.f32.mrb[0].mxu0
  %1693 = vmatprep.mubr.bf16.mxu0 0
  %1694 = vmatmul.mubr.bf16.gmra.mrb[0].mxu0 %v1385
  %v1695 = vpop.f32.mrb[0].mxu0
  %v1696 = vadd.f32 %v1428, %v1695
  %v1697 = vpop.f32.mrb[0].mxu0
  %v1698 = vpop.f32.mrb[0].mxu0
  %v1699 = vadd.f32 %v1428, %v1698
  %v1700 = vpop.f32.mrb[0].mxu0
  %1701 = vmatprep.mubr.bf16.mxu0 0
  %1702 = vmatmul.mubr.bf16.gmra.mrb[0].mxu0 %v1386
  %v1703 = vpop.f32.mrb[0].mxu0
  %v1704 = vadd.f32 %v1428, %v1703
  %v1705 = vpop.f32.mrb[0].mxu0
  %v1706 = vpop.f32.mrb[0].mxu0
  %v1707 = vadd.f32 %v1428, %v1706
  %v1708 = vpop.f32.mrb[0].mxu0
  %1709 = vmatprep.mubr.bf16.mxu0 0
  %1710 = vmatmul.mubr.bf16.gmra.mrb[0].mxu0 %v1387
  %v1711 = vpop.f32.mrb[0].mxu0
  %v1712 = vadd.f32 %v1428, %v1711
  %v1713 = vpop.f32.mrb[0].mxu0
  %v1714 = vpop.f32.mrb[0].mxu0
  %v1715 = vadd.f32 %v1428, %v1714
  %v1716 = vpop.f32.mrb[0].mxu0
  %1717 = vmatprep.mubr.bf16.mxu0 0
  %1718 = vmatmul.mubr.bf16.gmra.mrb[0].mxu0 %v1388
  %v1719 = vpop.f32.mrb[0].mxu0
  %v1720 = vadd.f32 %v1428, %v1719
  %v1721 = vpop.f32.mrb[0].mxu0
  %v1722 = vpop.f32.mrb[0].mxu0
  %v1723 = vadd.f32 %v1428, %v1722
  %v1724 = vpop.f32.mrb[0].mxu0
  %1725 = vmatprep.mubr.bf16.mxu0 0
  %1726 = vmatmul.mubr.bf16.gmra.mrb[0].mxu0 %v1389
  %v1727 = vpop.f32.mrb[0].mxu0
  %v1728 = vadd.f32 %v1428, %v1727
  %v1729 = vpop.f32.mrb[0].mxu0
  %v1730 = vpop.f32.mrb[0].mxu0
  %v1731 = vadd.f32 %v1428, %v1730
  %v1732 = vpop.f32.mrb[0].mxu0
  %1733 = vmatprep.mubr.bf16.mxu0 0
  %1734 = vmatmul.mubr.bf16.gmra.mrb[0].mxu0 %v1390
  %v1735 = vpop.f32.mrb[0].mxu0
  %v1736 = vadd.f32 %v1428, %v1735
  %v1737 = vpop.f32.mrb[0].mxu0
  %v1738 = vpop.f32.mrb[0].mxu0
  %v1739 = vadd.f32 %v1428, %v1738
  %v1740 = vpop.f32.mrb[0].mxu0
  %1741 = vmatprep.mubr.bf16.mxu0 0
  %1742 = vmatmul.mubr.bf16.gmra.mrb[0].mxu0 %v1391
  %v1743 = vpop.f32.mrb[0].mxu0
  %v1744 = vadd.f32 %v1428, %v1743
  %v1745 = vpop.f32.mrb[0].mxu0
  %v1746 = vpop.f32.mrb[0].mxu0
  %v1747 = vadd.f32 %v1428, %v1746
  %v1748 = vpop.f32.mrb[0].mxu0
  %1749 = vmatprep.mubr.bf16.mxu0 0
  %1750 = vmatmul.mubr.bf16.gmra.mrb[0].mxu0 %v1392
  %v1751 = vpop.f32.mrb[0].mxu0
  %v1752 = vadd.f32 %v1428, %v1751
  %v1753 = vpop.f32.mrb[0].mxu0
  %v1754 = vpop.f32.mrb[0].mxu0
  %v1755 = vadd.f32 %v1428, %v1754
  %v1756 = vpop.f32.mrb[0].mxu0
  %1757 = vmatprep.mubr.bf16.mxu0 0
  %1758 = vmatmul.mubr.bf16.gmra.mrb[0].mxu0 %v1393
  %v1759 = vpop.f32.mrb[0].mxu0
  %v1760 = vadd.f32 %v1428, %v1759
  %v1761 = vpop.f32.mrb[0].mxu0
  %v1762 = vpop.f32.mrb[0].mxu0
  %v1763 = vadd.f32 %v1428, %v1762
  %v1764 = vpop.f32.mrb[0].mxu0
  %1765 = vmatprep.mubr.bf16.mxu0 0
  %1766 = vmatmul.mubr.bf16.gmra.mrb[0].mxu0 %v1394
  %v1767 = vpop.f32.mrb[0].mxu0
  %v1768 = vadd.f32 %v1428, %v1767
  %v1769 = vpop.f32.mrb[0].mxu0
  %v1770 = vpop.f32.mrb[0].mxu0
  %v1771 = vadd.f32 %v1428, %v1770
  %v1772 = vpop.f32.mrb[0].mxu0
  %1773 = vmatprep.mubr.bf16.mxu0 0
  %1774 = vmatmul.mubr.bf16.gmra.mrb[0].mxu0 %v1395
  %v1775 = vpop.f32.mrb[0].mxu0
  %v1776 = vadd.f32 %v1428, %v1775
  %v1777 = vpop.f32.mrb[0].mxu0
  %v1778 = vpop.f32.mrb[0].mxu0
  %v1779 = vadd.f32 %v1428, %v1778
  %v1780 = vpop.f32.mrb[0].mxu0
  %1781 = vmatprep.mubr.bf16.mxu0 0
  %1782 = vmatmul.mubr.bf16.gmra.mrb[0].mxu0 %v1396
  %v1783 = vpop.f32.mrb[0].mxu0
  %v1784 = vadd.f32 %v1428, %v1783
  %v1785 = vpop.f32.mrb[0].mxu0
  %v1786 = vpop.f32.mrb[0].mxu0
  %v1787 = vadd.f32 %v1428, %v1786
  %v1788 = vpop.f32.mrb[0].mxu0
  %1789 = vmatprep.mubr.bf16.mxu0 0
  %1790 = vmatmul.mubr.bf16.gmra.mrb[0].mxu0 %v1397
  %v1791 = vpop.f32.mrb[0].mxu0
  %v1792 = vadd.f32 %v1428, %v1791
  %v1793 = vpop.f32.mrb[0].mxu0
  %v1794 = vpop.f32.mrb[0].mxu0
  %v1795 = vadd.f32 %v1428, %v1794
  %v1796 = vpop.f32.mrb[0].mxu0
  %1797 = vmatprep.mubr.bf16.mxu0 0
  %1798 = vmatmul.mubr.bf16.gmra.mrb[0].mxu0 %v1398
  %v1799 = vpop.f32.mrb[0].mxu0
  %v1800 = vadd.f32 %v1428, %v1799
  %v1801 = vpop.f32.mrb[0].mxu0
  %v1802 = vpop.f32.mrb[0].mxu0
  %v1803 = vadd.f32 %v1428, %v1802
  %v1804 = vpop.f32.mrb[0].mxu0
  %1805 = vmatprep.mubr.bf16.mxu0 0
  %1806 = vmatmul.mubr.bf16.gmra.mrb[0].mxu0 %v1399
  %v1807 = vpop.f32.mrb[0].mxu0
  %v1808 = vadd.f32 %v1428, %v1807
  %v1809 = vpop.f32.mrb[0].mxu0
  %v1810 = vpop.f32.mrb[0].mxu0
  %v1811 = vadd.f32 %v1428, %v1810
  %v1812 = vpop.f32.mrb[0].mxu0
  %1813 = vmatprep.mubr.bf16.mxu0 0
  %1814 = vmatmul.mubr.bf16.gmra.mrb[0].mxu0 %v1400
  %v1815 = vpop.f32.mrb[0].mxu0
  %v1816 = vadd.f32 %v1428, %v1815
  %v1817 = vpop.f32.mrb[0].mxu0
  %v1818 = vpop.f32.mrb[0].mxu0
  %v1819 = vadd.f32 %v1428, %v1818
  %v1820 = vpop.f32.mrb[0].mxu0
  %1821 = vmatprep.mubr.bf16.mxu0 0
  %1822 = vmatmul.mubr.bf16.gmra.mrb[0].mxu0 %v1401
  %v1823 = vpop.f32.mrb[0].mxu0
  %v1824 = vadd.f32 %v1428, %v1823
  %v1825 = vpop.f32.mrb[0].mxu0
  %v1826 = vpop.f32.mrb[0].mxu0
  %v1827 = vadd.f32 %v1428, %v1826
  %v1828 = vpop.f32.mrb[0].mxu0
  %1829 = vmatprep.mubr.bf16.mxu0 0
  %1830 = vmatmul.mubr.bf16.gmra.mrb[0].mxu0 %v1402
  %v1831 = vpop.f32.mrb[0].mxu0
  %v1832 = vadd.f32 %v1428, %v1831
  %v1833 = vpop.f32.mrb[0].mxu0
  %v1834 = vpop.f32.mrb[0].mxu0
  %v1835 = vadd.f32 %v1428, %v1834
  %v1836 = vpop.f32.mrb[0].mxu0
  %1837 = vmatprep.mubr.bf16.mxu0 0
  %1838 = vmatmul.mubr.bf16.gmra.mrb[0].mxu0 %v1403
  %v1839 = vpop.f32.mrb[0].mxu0
  %v1840 = vadd.f32 %v1428, %v1839
  %v1841 = vpop.f32.mrb[0].mxu0
  %v1842 = vpop.f32.mrb[0].mxu0
  %v1843 = vadd.f32 %v1428, %v1842
  %v1844 = vpop.f32.mrb[0].mxu0
  %1845 = vmatprep.mubr.bf16.mxu0 0
  %1846 = vmatmul.mubr.bf16.gmra.mrb[0].mxu0 %v1404
  %v1847 = vpop.f32.mrb[0].mxu0
  %v1848 = vadd.f32 %v1428, %v1847
  %v1849 = vpop.f32.mrb[0].mxu0
  %v1850 = vpop.f32.mrb[0].mxu0
  %v1851 = vadd.f32 %v1428, %v1850
  %v1852 = vpop.f32.mrb[0].mxu0
  %1853 = vmatprep.mubr.bf16.mxu0 0
  %1854 = vmatmul.mubr.bf16.gmra.mrb[0].mxu0 %v1405
  %v1855 = vpop.f32.mrb[0].mxu0
  %v1856 = vadd.f32 %v1428, %v1855
  %v1857 = vpop.f32.mrb[0].mxu0
  %v1858 = vpop.f32.mrb[0].mxu0
  %v1859 = vadd.f32 %v1428, %v1858
  %v1860 = vpop.f32.mrb[0].mxu0
  %1861 = vmatprep.mubr.bf16.mxu0 0
  %1862 = vmatmul.mubr.bf16.gmra.mrb[0].mxu0 %v1406
  %v1863 = vpop.f32.mrb[0].mxu0
  %v1864 = vadd.f32 %v1428, %v1863
  %v1865 = vpop.f32.mrb[0].mxu0
  %v1866 = vpop.f32.mrb[0].mxu0
  %v1867 = vadd.f32 %v1428, %v1866
  %v1868 = vpop.f32.mrb[0].mxu0
  %1869 = vmatprep.mubr.bf16.mxu0 0
  %1870 = vmatmul.mubr.bf16.gmra.mrb[0].mxu0 %v1407
  %v1871 = vpop.f32.mrb[0].mxu0
  %v1872 = vadd.f32 %v1428, %v1871
  %v1873 = vpop.f32.mrb[0].mxu0
  %v1874 = vpop.f32.mrb[0].mxu0
  %v1875 = vadd.f32 %v1428, %v1874
  %v1876 = vpop.f32.mrb[0].mxu0
  %1877 = vmatprep.mubr.bf16.mxu0 0
  %1878 = vmatmul.mubr.bf16.gmra.mrb[0].mxu0 %v1408
  %v1879 = vpop.f32.mrb[0].mxu0
  %v1880 = vadd.f32 %v1428, %v1879
  %v1881 = vpop.f32.mrb[0].mxu0
  %v1882 = vpop.f32.mrb[0].mxu0
  %v1883 = vadd.f32 %v1428, %v1882
  %v1884 = vpop.f32.mrb[0].mxu0
  %1885 = vmatprep.mubr.bf16.mxu0 0
  %1886 = vmatmul.mubr.bf16.gmra.mrb[0].mxu0 %v1409
  %v1887 = vpop.f32.mrb[0].mxu0
  %v1888 = vadd.f32 %v1428, %v1887
  %v1889 = vpop.f32.mrb[0].mxu0
  %v1890 = vpop.f32.mrb[0].mxu0
  %v1891 = vadd.f32 %v1428, %v1890
  %v1892 = vpop.f32.mrb[0].mxu0
  %1893 = vmatprep.mubr.bf16.mxu0 0
  %1894 = vmatmul.mubr.bf16.gmra.mrb[0].mxu0 %v1410
  %v1895 = vpop.f32.mrb[0].mxu0
  %v1896 = vadd.f32 %v1428, %v1895
  %v1897 = vpop.f32.mrb[0].mxu0
  %v1898 = vpop.f32.mrb[0].mxu0
  %v1899 = vadd.f32 %v1428, %v1898
  %v1900 = vpop.f32.mrb[0].mxu0
  %1901 = vmatprep.mubr.bf16.mxu0 0
  %1902 = vmatmul.mubr.bf16.gmra.mrb[0].mxu0 %v1411
  %v1903 = vpop.f32.mrb[0].mxu0
  %v1904 = vadd.f32 %v1428, %v1903
  %v1905 = vpop.f32.mrb[0].mxu0
  %v1906 = vpop.f32.mrb[0].mxu0
  %v1907 = vadd.f32 %v1428, %v1906
  %v1908 = vpop.f32.mrb[0].mxu0
  %1909 = vdwg.mxu0
  %v1910 = vmax.f32 %v1512, 0.0
  %v1911 = vmax.f32 %v1515, 0.0
  %v1912 = vmax.f32 %v1520, 0.0
  %v1913 = vmax.f32 %v1523, 0.0
  %v1914 = vmax.f32 %v1528, 0.0
  %v1915 = vmax.f32 %v1531, 0.0
  %v1916 = vmax.f32 %v1536, 0.0
  %v1917 = vmax.f32 %v1539, 0.0
  %v1918 = vmax.f32 %v1544, 0.0
  %v1919 = vmax.f32 %v1547, 0.0
  %v1920 = vmax.f32 %v1552, 0.0
  %v1921 = vmax.f32 %v1555, 0.0
  %v1922 = vmax.f32 %v1560, 0.0
  %v1923 = vmax.f32 %v1563, 0.0
  %v1924 = vmax.f32 %v1568, 0.0
  %v1925 = vmax.f32 %v1571, 0.0
  %v1926 = vmax.f32 %v1576, 0.0
  %v1927 = vmax.f32 %v1579, 0.0
  %v1928 = vmax.f32 %v1584, 0.0
  %v1929 = vmax.f32 %v1587, 0.0
  %v1930 = vmax.f32 %v1592, 0.0
  %v1931 = vmax.f32 %v1595, 0.0
  %v1932 = vmax.f32 %v1600, 0.0
  %v1933 = vmax.f32 %v1603, 0.0
  %v1934 = vmax.f32 %v1608, 0.0
  %v1935 = vmax.f32 %v1611, 0.0
  %v1936 = vmax.f32 %v1616, 0.0
  %v1937 = vmax.f32 %v1619, 0.0
  %v1938 = vmax.f32 %v1624, 0.0
  %v1939 = vmax.f32 %v1627, 0.0
  %v1940 = vmax.f32 %v1632, 0.0
  %v1941 = vmax.f32 %v1635, 0.0
  %v1942 = vmax.f32 %v1640, 0.0
  %v1943 = vmax.f32 %v1643, 0.0
  %v1944 = vmax.f32 %v1648, 0.0
  %v1945 = vmax.f32 %v1651, 0.0
  %v1946 = vmax.f32 %v1656, 0.0
  %v1947 = vmax.f32 %v1659, 0.0
  %v1948 = vmax.f32 %v1664, 0.0
  %v1949 = vmax.f32 %v1667, 0.0
  %v1950 = vmax.f32 %v1672, 0.0
  %v1951 = vmax.f32 %v1675, 0.0
  %v1952 = vmax.f32 %v1680, 0.0
  %v1953 = vmax.f32 %v1683, 0.0
  %v1954 = vmax.f32 %v1688, 0.0
  %v1955 = vmax.f32 %v1691, 0.0
  %v1956 = vmax.f32 %v1696, 0.0
  %v1957 = vmax.f32 %v1699, 0.0
  %v1958 = vmax.f32 %v1704, 0.0
  %v1959 = vmax.f32 %v1707, 0.0
  %v1960 = vmax.f32 %v1712, 0.0
  %v1961 = vmax.f32 %v1715, 0.0
  %v1962 = vmax.f32 %v1720, 0.0
  %v1963 = vmax.f32 %v1723, 0.0
  %v1964 = vmax.f32 %v1728, 0.0
  %v1965 = vmax.f32 %v1731, 0.0
  %v1966 = vmax.f32 %v1736, 0.0
  %v1967 = vmax.f32 %v1739, 0.0
  %v1968 = vmax.f32 %v1744, 0.0
  %v1969 = vmax.f32 %v1747, 0.0
  %v1970 = vmax.f32 %v1752, 0.0
  %v1971 = vmax.f32 %v1755, 0.0
  %v1972 = vmax.f32 %v1760, 0.0
  %v1973 = vmax.f32 %v1763, 0.0
  %v1974 = vmax.f32 %v1768, 0.0
  %v1975 = vmax.f32 %v1771, 0.0
  %v1976 = vmax.f32 %v1776, 0.0
  %v1977 = vmax.f32 %v1779, 0.0
  %v1978 = vmax.f32 %v1784, 0.0
  %v1979 = vmax.f32 %v1787, 0.0
  %v1980 = vmax.f32 %v1792, 0.0
  %v1981 = vmax.f32 %v1795, 0.0
  %v1982 = vmax.f32 %v1800, 0.0
  %v1983 = vmax.f32 %v1803, 0.0
  %v1984 = vmax.f32 %v1808, 0.0
  %v1985 = vmax.f32 %v1811, 0.0
  %v1986 = vmax.f32 %v1816, 0.0
  %v1987 = vmax.f32 %v1819, 0.0
  %v1988 = vmax.f32 %v1824, 0.0
  %v1989 = vmax.f32 %v1827, 0.0
  %v1990 = vmax.f32 %v1832, 0.0
  %v1991 = vmax.f32 %v1835, 0.0
  %v1992 = vmax.f32 %v1840, 0.0
  %v1993 = vmax.f32 %v1843, 0.0
  %v1994 = vmax.f32 %v1848, 0.0
  %v1995 = vmax.f32 %v1851, 0.0
  %v1996 = vmax.f32 %v1856, 0.0
  %v1997 = vmax.f32 %v1859, 0.0
  %v1998 = vmax.f32 %v1864, 0.0
  %v1999 = vmax.f32 %v1867, 0.0
  %v2000 = vmax.f32 %v1872, 0.0
  %v2001 = vmax.f32 %v1875, 0.0
  %v2002 = vmax.f32 %v1880, 0.0
  %v2003 = vmax.f32 %v1883, 0.0
  %v2004 = vmax.f32 %v1888, 0.0
  %v2005 = vmax.f32 %v1891, 0.0
  %v2006 = vmax.f32 %v1896, 0.0
  %v2007 = vmax.f32 %v1899, 0.0
  %v2008 = vmax.f32 %v1904, 0.0
  %v2009 = vmax.f32 %v1907, 0.0
  %v2010 = vld [vmem:[%s4 + $0x2] ss:$0 sm:$0xff]
  %v2011 = vmul.f32 %v1910, %v2010
  %v2012 = vmul.f32 %v1911, %v2010
  %v2013 = vmul.f32 %v1912, %v2010
  %v2014 = vmul.f32 %v1913, %v2010
  %v2015 = vmul.f32 %v1914, %v2010
  %v2016 = vmul.f32 %v1915, %v2010
  %v2017 = vmul.f32 %v1916, %v2010
  %v2018 = vmul.f32 %v1917, %v2010
  %v2019 = vmul.f32 %v1918, %v2010
  %v2020 = vmul.f32 %v1919, %v2010
  %v2021 = vmul.f32 %v1920, %v2010
  %v2022 = vmul.f32 %v1921, %v2010
  %v2023 = vmul.f32 %v1922, %v2010
  %v2024 = vmul.f32 %v1923, %v2010
  %v2025 = vmul.f32 %v1924, %v2010
  %v2026 = vmul.f32 %v1925, %v2010
  %v2027 = vmul.f32 %v1926, %v2010
  %v2028 = vmul.f32 %v1927, %v2010
  %v2029 = vmul.f32 %v1928, %v2010
  %v2030 = vmul.f32 %v1929, %v2010
  %v2031 = vmul.f32 %v1930, %v2010
  %v2032 = vmul.f32 %v1931, %v2010
  %v2033 = vmul.f32 %v1932, %v2010
  %v2034 = vmul.f32 %v1933, %v2010
  %v2035 = vmul.f32 %v1934, %v2010
  %v2036 = vmul.f32 %v1935, %v2010
  %v2037 = vmul.f32 %v1936, %v2010
  %v2038 = vmul.f32 %v1937, %v2010
  %v2039 = vmul.f32 %v1938, %v2010
  %v2040 = vmul.f32 %v1939, %v2010
  %v2041 = vmul.f32 %v1940, %v2010
  %v2042 = vmul.f32 %v1941, %v2010
  %v2043 = vmul.f32 %v1942, %v2010
  %v2044 = vmul.f32 %v1943, %v2010
  %v2045 = vmul.f32 %v1944, %v2010
  %v2046 = vmul.f32 %v1945, %v2010
  %v2047 = vmul.f32 %v1946, %v2010
  %v2048 = vmul.f32 %v1947, %v2010
  %v2049 = vmul.f32 %v1948, %v2010
  %v2050 = vmul.f32 %v1949, %v2010
  %v2051 = vmul.f32 %v1950, %v2010
  %v2052 = vmul.f32 %v1951, %v2010
  %v2053 = vmul.f32 %v1952, %v2010
  %v2054 = vmul.f32 %v1953, %v2010
  %v2055 = vmul.f32 %v1954, %v2010
  %v2056 = vmul.f32 %v1955, %v2010
  %v2057 = vmul.f32 %v1956, %v2010
  %v2058 = vmul.f32 %v1957, %v2010
  %v2059 = vmul.f32 %v1958, %v2010
  %v2060 = vmul.f32 %v1959, %v2010
  %v2061 = vmul.f32 %v1960, %v2010
  %v2062 = vmul.f32 %v1961, %v2010
  %v2063 = vmul.f32 %v1962, %v2010
  %v2064 = vmul.f32 %v1963, %v2010
  %v2065 = vmul.f32 %v1964, %v2010
  %v2066 = vmul.f32 %v1965, %v2010
  %v2067 = vmul.f32 %v1966, %v2010
  %v2068 = vmul.f32 %v1967, %v2010
  %v2069 = vmul.f32 %v1968, %v2010
  %v2070 = vmul.f32 %v1969, %v2010
  %v2071 = vmul.f32 %v1970, %v2010
  %v2072 = vmul.f32 %v1971, %v2010
  %v2073 = vmul.f32 %v1972, %v2010
  %v2074 = vmul.f32 %v1973, %v2010
  %v2075 = vmul.f32 %v1974, %v2010
  %v2076 = vmul.f32 %v1975, %v2010
  %v2077 = vmul.f32 %v1976, %v2010
  %v2078 = vmul.f32 %v1977, %v2010
  %v2079 = vmul.f32 %v1978, %v2010
  %v2080 = vmul.f32 %v1979, %v2010
  %v2081 = vmul.f32 %v1980, %v2010
  %v2082 = vmul.f32 %v1981, %v2010
  %v2083 = vmul.f32 %v1982, %v2010
  %v2084 = vmul.f32 %v1983, %v2010
  %v2085 = vmul.f32 %v1984, %v2010
  %v2086 = vmul.f32 %v1985, %v2010
  %v2087 = vmul.f32 %v1986, %v2010
  %v2088 = vmul.f32 %v1987, %v2010
  %v2089 = vmul.f32 %v1988, %v2010
  %v2090 = vmul.f32 %v1989, %v2010
  %v2091 = vmul.f32 %v1990, %v2010
  %v2092 = vmul.f32 %v1991, %v2010
  %v2093 = vmul.f32 %v1992, %v2010
  %v2094 = vmul.f32 %v1993, %v2010
  %v2095 = vmul.f32 %v1994, %v2010
  %v2096 = vmul.f32 %v1995, %v2010
  %v2097 = vmul.f32 %v1996, %v2010
  %v2098 = vmul.f32 %v1997, %v2010
  %v2099 = vmul.f32 %v1998, %v2010
  %v2100 = vmul.f32 %v1999, %v2010
  %v2101 = vmul.f32 %v2000, %v2010
  %v2102 = vmul.f32 %v2001, %v2010
  %v2103 = vmul.f32 %v2002, %v2010
  %v2104 = vmul.f32 %v2003, %v2010
  %v2105 = vmul.f32 %v2004, %v2010
  %v2106 = vmul.f32 %v2005, %v2010
  %v2107 = vmul.f32 %v2006, %v2010
  %v2108 = vmul.f32 %v2007, %v2010
  %v2109 = vmul.f32 %v2008, %v2010
  %v2110 = vmul.f32 %v2009, %v2010
  %v2111 = vld [vmem:[%s4 + $0x3] ss:$0 sm:$0xff]
  %v2112 = vadd.f32 %v2011, %v2111
  %v2113 = vadd.f32 %v2012, %v2111
  %v2114 = vadd.f32 %v2013, %v2111
  %v2115 = vadd.f32 %v2014, %v2111
  %v2116 = vadd.f32 %v2015, %v2111
  %v2117 = vadd.f32 %v2016, %v2111
  %v2118 = vadd.f32 %v2017, %v2111
  %v2119 = vadd.f32 %v2018, %v2111
  %v2120 = vadd.f32 %v2019, %v2111
  %v2121 = vadd.f32 %v2020, %v2111
  %v2122 = vadd.f32 %v2021, %v2111
  %v2123 = vadd.f32 %v2022, %v2111
  %v2124 = vadd.f32 %v2023, %v2111
  %v2125 = vadd.f32 %v2024, %v2111
  %v2126 = vadd.f32 %v2025, %v2111
  %v2127 = vadd.f32 %v2026, %v2111
  %v2128 = vadd.f32 %v2027, %v2111
  %v2129 = vadd.f32 %v2028, %v2111
  %v2130 = vadd.f32 %v2029, %v2111
  %v2131 = vadd.f32 %v2030, %v2111
  %v2132 = vadd.f32 %v2031, %v2111
  %v2133 = vadd.f32 %v2032, %v2111
  %v2134 = vadd.f32 %v2033, %v2111
  %v2135 = vadd.f32 %v2034, %v2111
  %v2136 = vadd.f32 %v2035, %v2111
  %v2137 = vadd.f32 %v2036, %v2111
  %v2138 = vadd.f32 %v2037, %v2111
  %v2139 = vadd.f32 %v2038, %v2111
  %v2140 = vadd.f32 %v2039, %v2111
  %v2141 = vadd.f32 %v2040, %v2111
  %v2142 = vadd.f32 %v2041, %v2111
  %v2143 = vadd.f32 %v2042, %v2111
  %v2144 = vadd.f32 %v2043, %v2111
  %v2145 = vadd.f32 %v2044, %v2111
  %v2146 = vadd.f32 %v2045, %v2111
  %v2147 = vadd.f32 %v2046, %v2111
  %v2148 = vadd.f32 %v2047, %v2111
  %v2149 = vadd.f32 %v2048, %v2111
  %v2150 = vadd.f32 %v2049, %v2111
  %v2151 = vadd.f32 %v2050, %v2111
  %v2152 = vadd.f32 %v2051, %v2111
  %v2153 = vadd.f32 %v2052, %v2111
  %v2154 = vadd.f32 %v2053, %v2111
  %v2155 = vadd.f32 %v2054, %v2111
  %v2156 = vadd.f32 %v2055, %v2111
  %v2157 = vadd.f32 %v2056, %v2111
  %v2158 = vadd.f32 %v2057, %v2111
  %v2159 = vadd.f32 %v2058, %v2111
  %v2160 = vadd.f32 %v2059, %v2111
  %v2161 = vadd.f32 %v2060, %v2111
  %v2162 = vadd.f32 %v2061, %v2111
  %v2163 = vadd.f32 %v2062, %v2111
  %v2164 = vadd.f32 %v2063, %v2111
  %v2165 = vadd.f32 %v2064, %v2111
  %v2166 = vadd.f32 %v2065, %v2111
  %v2167 = vadd.f32 %v2066, %v2111
  %v2168 = vadd.f32 %v2067, %v2111
  %v2169 = vadd.f32 %v2068, %v2111
  %v2170 = vadd.f32 %v2069, %v2111
  %v2171 = vadd.f32 %v2070, %v2111
  %v2172 = vadd.f32 %v2071, %v2111
  %v2173 = vadd.f32 %v2072, %v2111
  %v2174 = vadd.f32 %v2073, %v2111
  %v2175 = vadd.f32 %v2074, %v2111
  %v2176 = vadd.f32 %v2075, %v2111
  %v2177 = vadd.f32 %v2076, %v2111
  %v2178 = vadd.f32 %v2077, %v2111
  %v2179 = vadd.f32 %v2078, %v2111
  %v2180 = vadd.f32 %v2079, %v2111
  %v2181 = vadd.f32 %v2080, %v2111
  %v2182 = vadd.f32 %v2081, %v2111
  %v2183 = vadd.f32 %v2082, %v2111
  %v2184 = vadd.f32 %v2083, %v2111
  %v2185 = vadd.f32 %v2084, %v2111
  %v2186 = vadd.f32 %v2085, %v2111
  %v2187 = vadd.f32 %v2086, %v2111
  %v2188 = vadd.f32 %v2087, %v2111
  %v2189 = vadd.f32 %v2088, %v2111
  %v2190 = vadd.f32 %v2089, %v2111
  %v2191 = vadd.f32 %v2090, %v2111
  %v2192 = vadd.f32 %v2091, %v2111
  %v2193 = vadd.f32 %v2092, %v2111
  %v2194 = vadd.f32 %v2093, %v2111
  %v2195 = vadd.f32 %v2094, %v2111
  %v2196 = vadd.f32 %v2095, %v2111
  %v2197 = vadd.f32 %v2096, %v2111
  %v2198 = vadd.f32 %v2097, %v2111
  %v2199 = vadd.f32 %v2098, %v2111
  %v2200 = vadd.f32 %v2099, %v2111
  %v2201 = vadd.f32 %v2100, %v2111
  %v2202 = vadd.f32 %v2101, %v2111
  %v2203 = vadd.f32 %v2102, %v2111
  %v2204 = vadd.f32 %v2103, %v2111
  %v2205 = vadd.f32 %v2104, %v2111
  %v2206 = vadd.f32 %v2105, %v2111
  %v2207 = vadd.f32 %v2106, %v2111
  %v2208 = vadd.f32 %v2107, %v2111
  %v2209 = vadd.f32 %v2108, %v2111
  %v2210 = vadd.f32 %v2109, %v2111
  %v2211 = vadd.f32 %v2110, %v2111
  %v2212 = vadd.f32 %v2112, %v566
  %v2213 = vadd.f32 %v2113, %v570
  %v2214 = vadd.f32 %v2114, %v576
  %v2215 = vadd.f32 %v2115, %v580
  %v2216 = vadd.f32 %v2116, %v586
  %v2217 = vadd.f32 %v2117, %v590
  %v2218 = vadd.f32 %v2118, %v596
  %v2219 = vadd.f32 %v2119, %v600
  %v2220 = vadd.f32 %v2120, %v606
  %v2221 = vadd.f32 %v2121, %v610
  %v2222 = vadd.f32 %v2122, %v616
  %v2223 = vadd.f32 %v2123, %v620
  %v2224 = vadd.f32 %v2124, %v626
  %v2225 = vadd.f32 %v2125, %v630
  %v2226 = vadd.f32 %v2126, %v636
  %v2227 = vadd.f32 %v2127, %v640
  %v2228 = vadd.f32 %v2128, %v646
  %v2229 = vadd.f32 %v2129, %v650
  %v2230 = vadd.f32 %v2130, %v656
  %v2231 = vadd.f32 %v2131, %v660
  %v2232 = vadd.f32 %v2132, %v666
  %v2233 = vadd.f32 %v2133, %v670
  %v2234 = vadd.f32 %v2134, %v676
  %v2235 = vadd.f32 %v2135, %v680
  %v2236 = vadd.f32 %v2136, %v686
  %v2237 = vadd.f32 %v2137, %v690
  %v2238 = vadd.f32 %v2138, %v696
  %v2239 = vadd.f32 %v2139, %v700
  %v2240 = vadd.f32 %v2140, %v706
  %v2241 = vadd.f32 %v2141, %v710
  %v2242 = vadd.f32 %v2142, %v716
  %v2243 = vadd.f32 %v2143, %v720
  %v2244 = vadd.f32 %v2144, %v726
  %v2245 = vadd.f32 %v2145, %v730
  %v2246 = vadd.f32 %v2146, %v736
  %v2247 = vadd.f32 %v2147, %v740
  %v2248 = vadd.f32 %v2148, %v746
  %v2249 = vadd.f32 %v2149, %v750
  %v2250 = vadd.f32 %v2150, %v756
  %v2251 = vadd.f32 %v2151, %v760
  %v2252 = vadd.f32 %v2152, %v766
  %v2253 = vadd.f32 %v2153, %v770
  %v2254 = vadd.f32 %v2154, %v776
  %v2255 = vadd.f32 %v2155, %v780
  %v2256 = vadd.f32 %v2156, %v786
  %v2257 = vadd.f32 %v2157, %v790
  %v2258 = vadd.f32 %v2158, %v796
  %v2259 = vadd.f32 %v2159, %v800
  %v2260 = vadd.f32 %v2160, %v806
  %v2261 = vadd.f32 %v2161, %v810
  %v2262 = vadd.f32 %v2162, %v816
  %v2263 = vadd.f32 %v2163, %v820
  %v2264 = vadd.f32 %v2164, %v826
  %v2265 = vadd.f32 %v2165, %v830
  %v2266 = vadd.f32 %v2166, %v836
  %v2267 = vadd.f32 %v2167, %v840
  %v2268 = vadd.f32 %v2168, %v846
  %v2269 = vadd.f32 %v2169, %v850
  %v2270 = vadd.f32 %v2170, %v856
  %v2271 = vadd.f32 %v2171, %v860
  %v2272 = vadd.f32 %v2172, %v866
  %v2273 = vadd.f32 %v2173, %v870
  %v2274 = vadd.f32 %v2174, %v876
  %v2275 = vadd.f32 %v2175, %v880
  %v2276 = vadd.f32 %v2176, %v886
  %v2277 = vadd.f32 %v2177, %v890
  %v2278 = vadd.f32 %v2178, %v896
  %v2279 = vadd.f32 %v2179, %v900
  %v2280 = vadd.f32 %v2180, %v906
  %v2281 = vadd.f32 %v2181, %v910
  %v2282 = vadd.f32 %v2182, %v916
  %v2283 = vadd.f32 %v2183, %v920
  %v2284 = vadd.f32 %v2184, %v926
  %v2285 = vadd.f32 %v2185, %v930
  %v2286 = vadd.f32 %v2186, %v936
  %v2287 = vadd.f32 %v2187, %v940
  %v2288 = vadd.f32 %v2188, %v946
  %v2289 = vadd.f32 %v2189, %v950
  %v2290 = vadd.f32 %v2190, %v956
  %v2291 = vadd.f32 %v2191, %v960
  %v2292 = vadd.f32 %v2192, %v966
  %v2293 = vadd.f32 %v2193, %v970
  %v2294 = vadd.f32 %v2194, %v976
  %v2295 = vadd.f32 %v2195, %v980
  %v2296 = vadd.f32 %v2196, %v986
  %v2297 = vadd.f32 %v2197, %v990
  %v2298 = vadd.f32 %v2198, %v996
  %v2299 = vadd.f32 %v2199, %v1000
  %v2300 = vadd.f32 %v2200, %v1006
  %v2301 = vadd.f32 %v2201, %v1010
  %v2302 = vadd.f32 %v2202, %v1016
  %v2303 = vadd.f32 %v2203, %v1020
  %v2304 = vadd.f32 %v2204, %v1026
  %v2305 = vadd.f32 %v2205, %v1030
  %v2306 = vadd.f32 %v2206, %v1036
  %v2307 = vadd.f32 %v2207, %v1040
  %v2308 = vadd.f32 %v2208, %v1046
  %v2309 = vadd.f32 %v2209, %v1050
  %v2310 = vadd.f32 %v2210, %v1056
  %v2311 = vadd.f32 %v2211, %v1060
  %v2312 = vmax.f32 %v2212, 0.0
  %v2313 = vmax.f32 %v2213, 0.0
  %v2314 = vmax.f32 %v2214, 0.0
  %v2315 = vmax.f32 %v2215, 0.0
  %v2316 = vmax.f32 %v2216, 0.0
  %v2317 = vmax.f32 %v2217, 0.0
  %v2318 = vmax.f32 %v2218, 0.0
  %v2319 = vmax.f32 %v2219, 0.0
  %v2320 = vmax.f32 %v2220, 0.0
  %v2321 = vmax.f32 %v2221, 0.0
  %v2322 = vmax.f32 %v2222, 0.0
  %v2323 = vmax.f32 %v2223, 0.0
  %v2324 = vmax.f32 %v2224, 0.0
  %v2325 = vmax.f32 %v2225, 0.0
  %v2326 = vmax.f32 %v2226, 0.0
  %v2327 = vmax.f32 %v2227, 0.0
  %v2328 = vmax.f32 %v2228, 0.0
  %v2329 = vmax.f32 %v2229, 0.0
  %v2330 = vmax.f32 %v2230, 0.0
  %v2331 = vmax.f32 %v2231, 0.0
  %v2332 = vmax.f32 %v2232, 0.0
  %v2333 = vmax.f32 %v2233, 0.0
  %v2334 = vmax.f32 %v2234, 0.0
  %v2335 = vmax.f32 %v2235, 0.0
  %v2336 = vmax.f32 %v2236, 0.0
  %v2337 = vmax.f32 %v2237, 0.0
  %v2338 = vmax.f32 %v2238, 0.0
  %v2339 = vmax.f32 %v2239, 0.0
  %v2340 = vmax.f32 %v2240, 0.0
  %v2341 = vmax.f32 %v2241, 0.0
  %v2342 = vmax.f32 %v2242, 0.0
  %v2343 = vmax.f32 %v2243, 0.0
  %v2344 = vmax.f32 %v2244, 0.0
  %v2345 = vmax.f32 %v2245, 0.0
  %v2346 = vmax.f32 %v2246, 0.0
  %v2347 = vmax.f32 %v2247, 0.0
  %v2348 = vmax.f32 %v2248, 0.0
  %v2349 = vmax.f32 %v2249, 0.0
  %v2350 = vmax.f32 %v2250, 0.0
  %v2351 = vmax.f32 %v2251, 0.0
  %v2352 = vmax.f32 %v2252, 0.0
  %v2353 = vmax.f32 %v2253, 0.0
  %v2354 = vmax.f32 %v2254, 0.0
  %v2355 = vmax.f32 %v2255, 0.0
  %v2356 = vmax.f32 %v2256, 0.0
  %v2357 = vmax.f32 %v2257, 0.0
  %v2358 = vmax.f32 %v2258, 0.0
  %v2359 = vmax.f32 %v2259, 0.0
  %v2360 = vmax.f32 %v2260, 0.0
  %v2361 = vmax.f32 %v2261, 0.0
  %v2362 = vmax.f32 %v2262, 0.0
  %v2363 = vmax.f32 %v2263, 0.0
  %v2364 = vmax.f32 %v2264, 0.0
  %v2365 = vmax.f32 %v2265, 0.0
  %v2366 = vmax.f32 %v2266, 0.0
  %v2367 = vmax.f32 %v2267, 0.0
  %v2368 = vmax.f32 %v2268, 0.0
  %v2369 = vmax.f32 %v2269, 0.0
  %v2370 = vmax.f32 %v2270, 0.0
  %v2371 = vmax.f32 %v2271, 0.0
  %v2372 = vmax.f32 %v2272, 0.0
  %v2373 = vmax.f32 %v2273, 0.0
  %v2374 = vmax.f32 %v2274, 0.0
  %v2375 = vmax.f32 %v2275, 0.0
  %v2376 = vmax.f32 %v2276, 0.0
  %v2377 = vmax.f32 %v2277, 0.0
  %v2378 = vmax.f32 %v2278, 0.0
  %v2379 = vmax.f32 %v2279, 0.0
  %v2380 = vmax.f32 %v2280, 0.0
  %v2381 = vmax.f32 %v2281, 0.0
  %v2382 = vmax.f32 %v2282, 0.0
  %v2383 = vmax.f32 %v2283, 0.0
  %v2384 = vmax.f32 %v2284, 0.0
  %v2385 = vmax.f32 %v2285, 0.0
  %v2386 = vmax.f32 %v2286, 0.0
  %v2387 = vmax.f32 %v2287, 0.0
  %v2388 = vmax.f32 %v2288, 0.0
  %v2389 = vmax.f32 %v2289, 0.0
  %v2390 = vmax.f32 %v2290, 0.0
  %v2391 = vmax.f32 %v2291, 0.0
  %v2392 = vmax.f32 %v2292, 0.0
  %v2393 = vmax.f32 %v2293, 0.0
  %v2394 = vmax.f32 %v2294, 0.0
  %v2395 = vmax.f32 %v2295, 0.0
  %v2396 = vmax.f32 %v2296, 0.0
  %v2397 = vmax.f32 %v2297, 0.0
  %v2398 = vmax.f32 %v2298, 0.0
  %v2399 = vmax.f32 %v2299, 0.0
  %v2400 = vmax.f32 %v2300, 0.0
  %v2401 = vmax.f32 %v2301, 0.0
  %v2402 = vmax.f32 %v2302, 0.0
  %v2403 = vmax.f32 %v2303, 0.0
  %v2404 = vmax.f32 %v2304, 0.0
  %v2405 = vmax.f32 %v2305, 0.0
  %v2406 = vmax.f32 %v2306, 0.0
  %v2407 = vmax.f32 %v2307, 0.0
  %v2408 = vmax.f32 %v2308, 0.0
  %v2409 = vmax.f32 %v2309, 0.0
  %v2410 = vmax.f32 %v2310, 0.0
  %v2411 = vmax.f32 %v2311, 0.0
  %2412 = vst [vmem:[%s5] sm:$0xff] %v2312
  %2413 = vst [vmem:[%s5 + $0x8] sm:$0xff] %v2313
  %2414 = vst [vmem:[%s5 + $0x10] sm:$0xff] %v2314
  %2415 = vst [vmem:[%s5 + $0x18] sm:$0xff] %v2315
  %2416 = vst [vmem:[%s5 + $0x20] sm:$0xff] %v2316
  %2417 = vst [vmem:[%s5 + $0x28] sm:$0xff] %v2317
  %2418 = vst [vmem:[%s5 + $0x30] sm:$0xff] %v2318
  %2419 = vst [vmem:[%s5 + $0x38] sm:$0xff] %v2319
  %2420 = vst [vmem:[%s5 + $0x40] sm:$0xff] %v2320
  %2421 = vst [vmem:[%s5 + $0x48] sm:$0xff] %v2321
  %2422 = vst [vmem:[%s5 + $0x50] sm:$0xff] %v2322
  %2423 = vst [vmem:[%s5 + $0x58] sm:$0xff] %v2323
  %2424 = vst [vmem:[%s5 + $0x60] sm:$0xff] %v2324
  %2425 = vst [vmem:[%s5 + $0x68] sm:$0xff] %v2325
  %2426 = vst [vmem:[%s5 + $0x70] sm:$0xff] %v2326
  %2427 = vst [vmem:[%s5 + $0x78] sm:$0xff] %v2327
  %2428 = vst [vmem:[%s5 + $0x80] sm:$0xff] %v2328
  %2429 = vst [vmem:[%s5 + $0x88] sm:$0xff] %v2329
  %2430 = vst [vmem:[%s5 + $0x90] sm:$0xff] %v2330
  %2431 = vst [vmem:[%s5 + $0x98] sm:$0xff] %v2331
  %2432 = vst [vmem:[%s5 + $0xa0] sm:$0xff] %v2332
  %2433 = vst [vmem:[%s5 + $0xa8] sm:$0xff] %v2333
  %2434 = vst [vmem:[%s5 + $0xb0] sm:$0xff] %v2334
  %2435 = vst [vmem:[%s5 + $0xb8] sm:$0xff] %v2335
  %2436 = vst [vmem:[%s5 + $0xc0] sm:$0xff] %v2336
  %2437 = vst [vmem:[%s5 + $0xc8] sm:$0xff] %v2337
  %2438 = vst [vmem:[%s5 + $0xd0] sm:$0xff] %v2338
  %2439 = vst [vmem:[%s5 + $0xd8] sm:$0xff] %v2339
  %2440 = vst [vmem:[%s5 + $0xe0] sm:$0xff] %v2340
  %2441 = vst [vmem:[%s5 + $0xe8] sm:$0xff] %v2341
  %2442 = vst [vmem:[%s5 + $0xf0] sm:$0xff] %v2342
  %2443 = vst [vmem:[%s5 + $0xf8] sm:$0xff] %v2343
  %2444 = vst [vmem:[%s5 + $0x100] sm:$0xff] %v2344
  %2445 = vst [vmem:[%s5 + $0x108] sm:$0xff] %v2345
  %2446 = vst [vmem:[%s5 + $0x110] sm:$0xff] %v2346
  %2447 = vst [vmem:[%s5 + $0x118] sm:$0xff] %v2347
  %2448 = vst [vmem:[%s5 + $0x120] sm:$0xff] %v2348
  %2449 = vst [vmem:[%s5 + $0x128] sm:$0xff] %v2349
  %2450 = vst [vmem:[%s5 + $0x130] sm:$0xff] %v2350
  %2451 = vst [vmem:[%s5 + $0x138] sm:$0xff] %v2351
  %2452 = vst [vmem:[%s5 + $0x140] sm:$0xff] %v2352
  %2453 = vst [vmem:[%s5 + $0x148] sm:$0xff] %v2353
  %2454 = vst [vmem:[%s5 + $0x150] sm:$0xff] %v2354
  %2455 = vst [vmem:[%s5 + $0x158] sm:$0xff] %v2355
  %2456 = vst [vmem:[%s5 + $0x160] sm:$0xff] %v2356
  %2457 = vst [vmem:[%s5 + $0x168] sm:$0xff] %v2357
  %2458 = vst [vmem:[%s5 + $0x170] sm:$0xff] %v2358
  %2459 = vst [vmem:[%s5 + $0x178] sm:$0xff] %v2359
  %2460 = vst [vmem:[%s5 + $0x180] sm:$0xff] %v2360
  %2461 = vst [vmem:[%s5 + $0x188] sm:$0xff] %v2361
  %2462 = vst [vmem:[%s5 + $0x190] sm:$0xff] %v2362
  %2463 = vst [vmem:[%s5 + $0x198] sm:$0xff] %v2363
  %2464 = vst [vmem:[%s5 + $0x1a0] sm:$0xff] %v2364
  %2465 = vst [vmem:[%s5 + $0x1a8] sm:$0xff] %v2365
  %2466 = vst [vmem:[%s5 + $0x1b0] sm:$0xff] %v2366
  %2467 = vst [vmem:[%s5 + $0x1b8] sm:$0xff] %v2367
  %2468 = vst [vmem:[%s5 + $0x1c0] sm:$0xff] %v2368
  %2469 = vst [vmem:[%s5 + $0x1c8] sm:$0xff] %v2369
  %2470 = vst [vmem:[%s5 + $0x1d0] sm:$0xff] %v2370
  %2471 = vst [vmem:[%s5 + $0x1d8] sm:$0xff] %v2371
  %2472 = vst [vmem:[%s5 + $0x1e0] sm:$0xff] %v2372
  %2473 = vst [vmem:[%s5 + $0x1e8] sm:$0xff] %v2373
  %2474 = vst [vmem:[%s5 + $0x1f0] sm:$0xff] %v2374
  %2475 = vst [vmem:[%s5 + $0x1f8] sm:$0xff] %v2375
  %2476 = vst [vmem:[%s5 + $0x200] sm:$0xff] %v2376
  %2477 = vst [vmem:[%s5 + $0x208] sm:$0xff] %v2377
  %2478 = vst [vmem:[%s5 + $0x210] sm:$0xff] %v2378
  %2479 = vst [vmem:[%s5 + $0x218] sm:$0xff] %v2379
  %2480 = vst [vmem:[%s5 + $0x220] sm:$0xff] %v2380
  %2481 = vst [vmem:[%s5 + $0x228] sm:$0xff] %v2381
  %2482 = vst [vmem:[%s5 + $0x230] sm:$0xff] %v2382
  %2483 = vst [vmem:[%s5 + $0x238] sm:$0xff] %v2383
  %2484 = vst [vmem:[%s5 + $0x240] sm:$0xff] %v2384
  %2485 = vst [vmem:[%s5 + $0x248] sm:$0xff] %v2385
  %2486 = vst [vmem:[%s5 + $0x250] sm:$0xff] %v2386
  %2487 = vst [vmem:[%s5 + $0x258] sm:$0xff] %v2387
  %2488 = vst [vmem:[%s5 + $0x260] sm:$0xff] %v2388
  %2489 = vst [vmem:[%s5 + $0x268] sm:$0xff] %v2389
  %2490 = vst [vmem:[%s5 + $0x270] sm:$0xff] %v2390
  %2491 = vst [vmem:[%s5 + $0x278] sm:$0xff] %v2391
  %2492 = vst [vmem:[%s5 + $0x280] sm:$0xff] %v2392
  %2493 = vst [vmem:[%s5 + $0x288] sm:$0xff] %v2393
  %2494 = vst [vmem:[%s5 + $0x290] sm:$0xff] %v2394
  %2495 = vst [vmem:[%s5 + $0x298] sm:$0xff] %v2395
  %2496 = vst [vmem:[%s5 + $0x2a0] sm:$0xff] %v2396
  %2497 = vst [vmem:[%s5 + $0x2a8] sm:$0xff] %v2397
  %2498 = vst [vmem:[%s5 + $0x2b0] sm:$0xff] %v2398
  %2499 = vst [vmem:[%s5 + $0x2b8] sm:$0xff] %v2399
  %2500 = vst [vmem:[%s5 + $0x2c0] sm:$0xff] %v2400
  %2501 = vst [vmem:[%s5 + $0x2c8] sm:$0xff] %v2401
  %2502 = vst [vmem:[%s5 + $0x2d0] sm:$0xff] %v2402
  %2503 = vst [vmem:[%s5 + $0x2d8] sm:$0xff] %v2403
  %2504 = vst [vmem:[%s5 + $0x2e0] sm:$0xff] %v2404
  %2505 = vst [vmem:[%s5 + $0x2e8] sm:$0xff] %v2405
  %2506 = vst [vmem:[%s5 + $0x2f0] sm:$0xff] %v2406
  %2507 = vst [vmem:[%s5 + $0x2f8] sm:$0xff] %v2407
  %2508 = vst [vmem:[%s5 + $0x300] sm:$0xff] %v2408
  %2509 = vst [vmem:[%s5 + $0x308] sm:$0xff] %v2409
  %2510 = vst [vmem:[%s5 + $0x310] sm:$0xff] %v2410
  %2511 = vst [vmem:[%s5 + $0x318] sm:$0xff] %v2411
  // Predicated region
  $region22: #{tcn_gcn_unit_forward.3} parent=0 // pred_check
    _
  $region23: #{tcn_gcn_unit_forward.3} parent=0 // pred_check_branch
    %2513 = sbr.rel (0) target = $region25
  $region24: #{tcn_gcn_unit_forward.3} parent=0 // pred_region
    _
  $region25: #{tcn_gcn_unit_forward.3} parent=0 // pred_fallthru
    _
  // Predicated region
  $region26: #{tcn_gcn_unit_forward.3} parent=0 // pred_check
    _
  $region27: #{tcn_gcn_unit_forward.3} parent=0 // pred_check_branch
    %2515 = sbr.rel (0) target = $region29
  $region28: #{tcn_gcn_unit_forward.3} parent=0 // pred_region
    _
  $region29: #{tcn_gcn_unit_forward.3} parent=0 // pred_fallthru
    _

</llo_original>
